<compile_context>
chip_gen: v5e
topology: v5e:2x2
jax: 0.10.0
libtpu: 0.0.40
codegen_flags: <defaults>
</compile_context>

<pallas_src>
import jax
import jax.numpy as jnp
from jax.experimental import pallas as pl
from jax.experimental.pallas import tpu as pltpu

BN_EPS = 1e-5
L2_EPS = 1e-12

# Static config implied by the module (flatten must equal 512 = 64 * (H/4) * (W/4)).
H0, W0 = 16, 8        # input spatial dims; two 2x2 maxpools -> 4x2
C1 = 64               # hid_dim == z_dim
K1_PAD = 16           # layer-1 contraction (W0*Cin = 8) zero-padded to 16 for bf16 tiling


# ------------------------------ kernel helpers ------------------------------

def _conv3x3(pad_ref, m_ref, brow_ref, h):
    """3x3 conv + folded-BN bias + ReLU on an (h, W*Cin) activation stored in a
    zero-padded (h+2, K) VMEM scratch.  m_ref: (3, K, W*Cout) banded weights (bf16)."""
    acc = None
    for t in range(3):                                       # dy taps: static row shifts
        tap = pad_ref[t:t + h, :].astype(jnp.bfloat16)
        part = jnp.dot(tap, m_ref[t], preferred_element_type=jnp.float32)
        acc = part if acc is None else acc + part
    return jnp.maximum(acc + brow_ref[...], 0.0)


def _maxpool_into(y, dst_ref, h, w, c):
    """2x2 max-pool of y (h, w*c) -> rows 1..h/2 of dst_ref (next layer's padded scratch)."""
    for i in range(h // 2):
        row = jnp.maximum(y[2 * i:2 * i + 1, :], y[2 * i + 1:2 * i + 2, :])     # (1, w*c)
        for j in range(w // 2):
            blk = jnp.maximum(row[:, (2 * j) * c:(2 * j + 1) * c],
                              row[:, (2 * j + 1) * c:(2 * j + 2) * c])          # (1, c)
            dst_ref[1 + i:2 + i, j * c:(j + 1) * c] = blk


# --------------------------------- kernel -----------------------------------

def convnet_kernel(x_ref, m1, br1, m2, br2, m3, br3, m4, br4,
                   w1, b1, s1, t1, w2, b2, o_ref,
                   pad1, pad2, pad3, pad4):
    # Zero the padded activation scratch buffers (border rows / spare lanes read 0).
    pad1[...] = jnp.zeros_like(pad1)
    pad2[...] = jnp.zeros_like(pad2)
    pad3[...] = jnp.zeros_like(pad3)
    pad4[...] = jnp.zeros_like(pad4)

    # block 1: conv(1->64)+BN+ReLU+pool : (16,8,1) -> (8,4,64)
    pad1[1:1 + H0, 0:W0] = x_ref[0]                  # image rows; lanes 8..15 stay zero
    y = _conv3x3(pad1, m1, br1, H0)                  # (16, 8*64) = (16, 512)
    _maxpool_into(y, pad2, H0, W0, C1)               # pad2 rows 1..8: (8, 4*64)

    # block 2: conv(64->64)+BN+ReLU+pool : (8,4,64) -> (4,2,64)
    y = _conv3x3(pad2, m2, br2, H0 // 2)             # (8, 256)
    _maxpool_into(y, pad3, H0 // 2, W0 // 2, C1)     # pad3 rows 1..4: (4, 2*64)

    # block 3: conv(64->64)+BN+ReLU (no pool)
    y = _conv3x3(pad3, m3, br3, H0 // 4)             # (4, 128)
    pad4[1:1 + H0 // 4, :] = y

    # block 4: conv(64->64)+BN+ReLU (no pool)
    y = _conv3x3(pad4, m4, br4, H0 // 4)             # (4, 128)

    # emb head: Linear(512,128)+ReLU+Dropout(eval=id)+BatchNorm1d(folded)+Linear(128,64)
    # + L2 normalize.  The NCHW flatten is absorbed into w1's pre-permuted rows:
    # row-block h of w1 corresponds to row h of the final (4, 128) activation.
    acc = b1[...]                                    # (1, 128)
    for h in range(H0 // 4):
        acc = acc + jnp.dot(y[h:h + 1, :].astype(jnp.bfloat16),
                            w1[h * 128:(h + 1) * 128, :],
                            preferred_element_type=jnp.float32)
    hd = jnp.maximum(acc, 0.0)
    # TODO(synk): Dropout(0.4) is the identity in eval mode; training-mode dropout not implemented.
    hd = hd * s1[...] + t1[...]
    z = jnp.dot(hd.astype(jnp.bfloat16), w2[...],
                preferred_element_type=jnp.float32) + b2[...]
    nrm = jnp.sqrt(jnp.sum(z * z, axis=-1, keepdims=True))
    o_ref[0] = z / jnp.maximum(nrm, L2_EPS)


# ------------------------------ host-side setup ------------------------------

def fold_conv_bn(w, b, gamma, beta, mean, var):
    """Fold BatchNorm2d (inference running stats) into conv weight/bias."""
    scale = gamma / jnp.sqrt(var + BN_EPS)
    return w * scale[:, None, None, None], (b - mean) * scale + beta


def band_conv_weights(w_f, W, k_pad=None):
    """Lower a 3x3 'same' conv (folded weight, torch (Cout,Cin,3,3) layout) to three
    banded matrices M_t of shape (W*Cin, W*Cout):  out_rows = sum_t tap_t @ M_t,
    where tap_t are input rows shifted by dy = t-1 in the (H, W*Cin) layout.
    Zero padding along W is encoded in the band; along H by zero scratch rows."""
    Cout, Cin = w_f.shape[0], w_f.shape[1]
    K = W * Cin
    M = jnp.zeros((3, K, W * Cout), jnp.float32)
    for t in range(3):                    # dy
        for dx in range(3):
            blk = w_f[:, :, t, dx].T      # (Cin, Cout)
            for wo in range(W):
                wi = wo + dx - 1
                if 0 <= wi < W:
                    M = M.at[t, wi * Cin:(wi + 1) * Cin,
                             wo * Cout:(wo + 1) * Cout].set(blk)
    if k_pad is not None and k_pad > K:
        M = jnp.pad(M, ((0, 0), (0, k_pad - K), (0, 0)))
    return M.astype(jnp.bfloat16)


def init_params(key, x_dim=1, hid_dim=64, z_dim=64):
    """Random parameters mirroring the torch module (eval mode), pre-folded and
    pre-laid-out (banded conv weights, tiled bias rows, permuted emb weight)."""
    keys = iter(jax.random.split(key, 64))

    def nrm(shape, s=0.1):
        return (s * jax.random.normal(next(keys), shape)).astype(jnp.float32)

    def pos(shape):
        return jax.random.uniform(next(keys), shape, minval=0.5, maxval=1.5).astype(jnp.float32)

    layer_cfg = [(x_dim, hid_dim, W0, K1_PAD),        # conv block 1 (+pool)
                 (hid_dim, hid_dim, W0 // 2, None),   # conv block 2 (+pool)
                 (hid_dim, hid_dim, W0 // 4, None),   # conv block 3
                 (hid_dim, z_dim, W0 // 4, None)]     # conv block 4
    blocks = []
    for cin, cout, W, k_pad in layer_cfg:
        w = nrm((cout, cin, 3, 3))                    # torch Conv2d weight layout
        b = nrm((cout,))
        gamma, beta = pos((cout,)), nrm((cout,))
        mean, var = nrm((cout,)), pos((cout,))
        w_f, b_f = fold_conv_bn(w, b, gamma, beta, mean, var)
        M = band_conv_weights(w_f, W, k_pad)                     # (3, K, W*cout) bf16
        brow = jnp.tile(b_f, W)[None, :].astype(jnp.float32)     # (1, W*cout)
        blocks.append((M, brow))

    # emb head: Linear(512,128) + BatchNorm1d(128) folded affine + Linear(128,64)
    w1 = nrm((512, 128))                 # torch Linear(512,128).weight transposed to (in,out)
    b1 = nrm((128,))
    g1, be1 = pos((128,)), nrm((128,))
    mu1, v1 = nrm((128,)), pos((128,))
    s1 = g1 / jnp.sqrt(v1 + BN_EPS)
    t1 = be1 - mu1 * s1
    w2 = nrm((128, 64))
    b2 = nrm((64,))

    # Absorb torch's NCHW flatten (x.view(B,-1)) into w1: the kernel's feature order
    # over the final (4, 2, 64) activation is (h, w, c); torch's is (c, h, w).
    Hf, Wf, Cf = H0 // 4, W0 // 4, z_dim
    hh = jnp.arange(Hf)[:, None, None]
    ww = jnp.arange(Wf)[None, :, None]
    cc = jnp.arange(Cf)[None, None, :]
    torch_idx = (cc * (Hf * Wf) + hh * Wf + ww).reshape(-1)      # kernel order -> torch row
    w1p = w1[torch_idx, :].astype(jnp.bfloat16)

    emb = (w1p, b1[None, :], s1[None, :], t1[None, :],
           w2.astype(jnp.bfloat16), b2[None, :])
    return blocks, emb


def convnet_forward(x, params):
    """x: (B, 16, 8) float32 -> (B, 64) L2-normalized embeddings."""
    blocks, emb = params
    (m1, br1), (m2, br2), (m3, br3), (m4, br4) = blocks
    w1p, b1, s1, t1, w2, b2 = emb
    B = x.shape[0]
    assert x.shape[1:] == (H0, W0), "kernel is specialized for (B, 16, 8) inputs"

    def const_spec(arr):
        zeros = (0,) * arr.ndim
        return pl.BlockSpec(arr.shape, lambda b, _z=zeros: _z)

    weights = (m1, br1, m2, br2, m3, br3, m4, br4, w1p, b1, s1, t1, w2, b2)
    in_specs = [pl.BlockSpec((1, H0, W0), lambda b: (b, 0, 0))]
    in_specs += [const_spec(a) for a in weights]

    out = pl.pallas_call(
        convnet_kernel,
        out_shape=jax.ShapeDtypeStruct((B, 1, 64), jnp.float32),
        grid_spec=pltpu.PrefetchScalarGridSpec(
            num_scalar_prefetch=0,
            grid=(B,),
            in_specs=in_specs,
            out_specs=pl.BlockSpec((1, 1, 64), lambda b: (b, 0, 0)),
            scratch_shapes=[
                pltpu.VMEM((H0 + 2, K1_PAD), jnp.float32),                  # pad1 (18, 16)
                pltpu.VMEM((H0 // 2 + 2, (W0 // 2) * C1), jnp.float32),     # pad2 (10, 256)
                pltpu.VMEM((H0 // 4 + 2, (W0 // 4) * C1), jnp.float32),     # pad3 (6, 128)
                pltpu.VMEM((H0 // 4 + 2, (W0 // 4) * C1), jnp.float32),     # pad4 (6, 128)
            ],
        ),
        compiler_params=pltpu.CompilerParams(
            dimension_semantics=("parallel",)),
    )(x, *weights)
    return out.reshape(B, 64)


if __name__ == "__main__":
    key = jax.random.PRNGKey(0)
    pkey, xkey = jax.random.split(key)
    params = init_params(pkey)
    # (B, H, W) = (2, 16, 8): two 2x2 max-pools -> 4x2 spatial, 64*4*2 = 512 flat features.
    x = jax.random.normal(xkey, (2, H0, W0), dtype=jnp.float32)
    out = jax.block_until_ready(jax.jit(convnet_forward)(x, params))
    assert out.shape == (2, 64), out.shape
    norms = jnp.linalg.norm(out, axis=-1)
    assert bool(jnp.all(jnp.abs(norms - 1.0) < 1e-3)), norms
    print("KERNEL_OK")
</pallas_src>

<mosaic_0001>
module attributes {stable_mosaic.version = 11 : i64} {
  func.func @convnet_kernel(%arg0: i32, %arg1: memref<1x16x8xf32, #tpu.memory_space<vmem>>, %arg2: memref<3x16x512xbf16, #tpu.memory_space<vmem>>, %arg3: memref<1x512xf32, #tpu.memory_space<vmem>>, %arg4: memref<3x256x256xbf16, #tpu.memory_space<vmem>>, %arg5: memref<1x256xf32, #tpu.memory_space<vmem>>, %arg6: memref<3x128x128xbf16, #tpu.memory_space<vmem>>, %arg7: memref<1x128xf32, #tpu.memory_space<vmem>>, %arg8: memref<3x128x128xbf16, #tpu.memory_space<vmem>>, %arg9: memref<1x128xf32, #tpu.memory_space<vmem>>, %arg10: memref<512x128xbf16, #tpu.memory_space<vmem>>, %arg11: memref<1x128xf32, #tpu.memory_space<vmem>>, %arg12: memref<1x128xf32, #tpu.memory_space<vmem>>, %arg13: memref<1x128xf32, #tpu.memory_space<vmem>>, %arg14: memref<128x64xbf16, #tpu.memory_space<vmem>>, %arg15: memref<1x64xf32, #tpu.memory_space<vmem>>, %arg16: memref<1x1x64xf32, #tpu.memory_space<vmem>>, %arg17: memref<18x16xf32, #tpu.memory_space<vmem>>, %arg18: memref<10x256xf32, #tpu.memory_space<vmem>>, %arg19: memref<6x128xf32, #tpu.memory_space<vmem>>, %arg20: memref<6x128xf32, #tpu.memory_space<vmem>>) attributes {dimension_semantics = [#tpu.dimension_semantics<parallel>], iteration_bounds = array<i64: 2>, scalar_prefetch = 0 : i64, scratch_operands = 4 : i64, tpu.core_type = #tpu.core_type<tc>, window_params = [{transform_indices = @transform_0, window_bounds = array<i64: 1, 16, 8>}, {pipeline_mode = #tpu.pipeline_mode<synchronous>, transform_indices = @transform_1, window_bounds = array<i64: 3, 16, 512>}, {pipeline_mode = #tpu.pipeline_mode<synchronous>, transform_indices = @transform_2, window_bounds = array<i64: 1, 512>}, {pipeline_mode = #tpu.pipeline_mode<synchronous>, transform_indices = @transform_3, window_bounds = array<i64: 3, 256, 256>}, {pipeline_mode = #tpu.pipeline_mode<synchronous>, transform_indices = @transform_4, window_bounds = array<i64: 1, 256>}, {pipeline_mode = #tpu.pipeline_mode<synchronous>, transform_indices = @transform_5, window_bounds = array<i64: 3, 128, 128>}, {pipeline_mode = #tpu.pipeline_mode<synchronous>, transform_indices = @transform_6, window_bounds = array<i64: 1, 128>}, {pipeline_mode = #tpu.pipeline_mode<synchronous>, transform_indices = @transform_7, window_bounds = array<i64: 3, 128, 128>}, {pipeline_mode = #tpu.pipeline_mode<synchronous>, transform_indices = @transform_8, window_bounds = array<i64: 1, 128>}, {pipeline_mode = #tpu.pipeline_mode<synchronous>, transform_indices = @transform_9, window_bounds = array<i64: 512, 128>}, {pipeline_mode = #tpu.pipeline_mode<synchronous>, transform_indices = @transform_10, window_bounds = array<i64: 1, 128>}, {pipeline_mode = #tpu.pipeline_mode<synchronous>, transform_indices = @transform_11, window_bounds = array<i64: 1, 128>}, {pipeline_mode = #tpu.pipeline_mode<synchronous>, transform_indices = @transform_12, window_bounds = array<i64: 1, 128>}, {pipeline_mode = #tpu.pipeline_mode<synchronous>, transform_indices = @transform_13, window_bounds = array<i64: 128, 64>}, {pipeline_mode = #tpu.pipeline_mode<synchronous>, transform_indices = @transform_14, window_bounds = array<i64: 1, 64>}, {transform_indices = @transform_15, window_bounds = array<i64: 1, 1, 64>}]} {
    %cst = arith.constant 0.000000e+00 : f32
    %0 = vector.broadcast %cst : f32 to vector<18x16xf32>
    %c0 = arith.constant 0 : index
    %c0_0 = arith.constant 0 : index
    %1 = vector.load %arg17[%c0, %c0_0] : memref<18x16xf32, #tpu.memory_space<vmem>>, vector<18x16xf32>
    tpu.vector_store %arg17[%c0, %c0_0], %0 {strides = array<i32>} : memref<18x16xf32, #tpu.memory_space<vmem>>, vector<18x16xf32>,
    %cst_1 = arith.constant 0.000000e+00 : f32
    %2 = vector.broadcast %cst_1 : f32 to vector<10x256xf32>
    %c0_2 = arith.constant 0 : index
    %c0_3 = arith.constant 0 : index
    %3 = vector.load %arg18[%c0_2, %c0_3] : memref<10x256xf32, #tpu.memory_space<vmem>>, vector<10x256xf32>
    tpu.vector_store %arg18[%c0_2, %c0_3], %2 {strides = array<i32>} : memref<10x256xf32, #tpu.memory_space<vmem>>, vector<10x256xf32>,
    %cst_4 = arith.constant 0.000000e+00 : f32
    %4 = vector.broadcast %cst_4 : f32 to vector<6x128xf32>
    %c0_5 = arith.constant 0 : index
    %c0_6 = arith.constant 0 : index
    %5 = vector.load %arg19[%c0_5, %c0_6] : memref<6x128xf32, #tpu.memory_space<vmem>>, vector<6x128xf32>
    tpu.vector_store %arg19[%c0_5, %c0_6], %4 {strides = array<i32>} : memref<6x128xf32, #tpu.memory_space<vmem>>, vector<6x128xf32>,
    %cst_7 = arith.constant 0.000000e+00 : f32
    %6 = vector.broadcast %cst_7 : f32 to vector<6x128xf32>
    %c0_8 = arith.constant 0 : index
    %c0_9 = arith.constant 0 : index
    %7 = vector.load %arg20[%c0_8, %c0_9] : memref<6x128xf32, #tpu.memory_space<vmem>>, vector<6x128xf32>
    tpu.vector_store %arg20[%c0_8, %c0_9], %6 {strides = array<i32>} : memref<6x128xf32, #tpu.memory_space<vmem>>, vector<6x128xf32>,
    %c0_10 = arith.constant 0 : index
    %c0_11 = arith.constant 0 : index
    %c0_12 = arith.constant 0 : index
    %8 = vector.load %arg1[%c0_10, %c0_11, %c0_12] : memref<1x16x8xf32, #tpu.memory_space<vmem>>, vector<1x16x8xf32>
    %9 = vector.shape_cast %8 : vector<1x16x8xf32> to vector<16x8xf32>
    %c1 = arith.constant 1 : index
    %c0_13 = arith.constant 0 : index
    %10 = vector.load %arg17[%c1, %c0_13] : memref<18x16xf32, #tpu.memory_space<vmem>>, vector<16x8xf32>
    tpu.vector_store %arg17[%c1, %c0_13], %9 {strides = array<i32>} : memref<18x16xf32, #tpu.memory_space<vmem>>, vector<16x8xf32>,
    %c0_14 = arith.constant 0 : index
    %c0_15 = arith.constant 0 : index
    %11 = vector.load %arg17[%c0_14, %c0_15] : memref<18x16xf32, #tpu.memory_space<vmem>>, vector<16x16xf32>
    %12 = arith.truncf %11 : vector<16x16xf32> to vector<16x16xbf16>
    %c0_16 = arith.constant 0 : index
    %c0_17 = arith.constant 0 : index
    %c0_18 = arith.constant 0 : index
    %13 = vector.load %arg2[%c0_16, %c0_17, %c0_18] : memref<3x16x512xbf16, #tpu.memory_space<vmem>>, vector<1x16x512xbf16>
    %14 = vector.shape_cast %13 : vector<1x16x512xbf16> to vector<16x512xbf16>
    %cst_19 = arith.constant dense<0.000000e+00> : vector<16x512xf32>
    %15 = tpu.matmul %12, %14, %cst_19 {dimension_numbers = #tpu.dot_dimension_numbers<[1], [0], [0], [1], [0, 0, 1, 1], [], []>} : vector<16x16xbf16>, vector<16x512xbf16>, vector<16x512xf32> -> vector<16x512xf32>
    %c1_20 = arith.constant 1 : index
    %c0_21 = arith.constant 0 : index
    %16 = vector.load %arg17[%c1_20, %c0_21] : memref<18x16xf32, #tpu.memory_space<vmem>>, vector<16x16xf32>
    %17 = arith.truncf %16 : vector<16x16xf32> to vector<16x16xbf16>
    %c1_22 = arith.constant 1 : index
    %c0_23 = arith.constant 0 : index
    %c0_24 = arith.constant 0 : index
    %18 = vector.load %arg2[%c1_22, %c0_23, %c0_24] : memref<3x16x512xbf16, #tpu.memory_space<vmem>>, vector<1x16x512xbf16>
    %19 = vector.shape_cast %18 : vector<1x16x512xbf16> to vector<16x512xbf16>
    %cst_25 = arith.constant dense<0.000000e+00> : vector<16x512xf32>
    %20 = tpu.matmul %17, %19, %cst_25 {dimension_numbers = #tpu.dot_dimension_numbers<[1], [0], [0], [1], [0, 0, 1, 1], [], []>} : vector<16x16xbf16>, vector<16x512xbf16>, vector<16x512xf32> -> vector<16x512xf32>
    %21 = arith.addf %15, %20 : vector<16x512xf32>
    %c2 = arith.constant 2 : index
    %c0_26 = arith.constant 0 : index
    %22 = vector.load %arg17[%c2, %c0_26] : memref<18x16xf32, #tpu.memory_space<vmem>>, vector<16x16xf32>
    %23 = arith.truncf %22 : vector<16x16xf32> to vector<16x16xbf16>
    %c2_27 = arith.constant 2 : index
    %c0_28 = arith.constant 0 : index
    %c0_29 = arith.constant 0 : index
    %24 = vector.load %arg2[%c2_27, %c0_28, %c0_29] : memref<3x16x512xbf16, #tpu.memory_space<vmem>>, vector<1x16x512xbf16>
    %25 = vector.shape_cast %24 : vector<1x16x512xbf16> to vector<16x512xbf16>
    %cst_30 = arith.constant dense<0.000000e+00> : vector<16x512xf32>
    %26 = tpu.matmul %23, %25, %cst_30 {dimension_numbers = #tpu.dot_dimension_numbers<[1], [0], [0], [1], [0, 0, 1, 1], [], []>} : vector<16x16xbf16>, vector<16x512xbf16>, vector<16x512xf32> -> vector<16x512xf32>
    %27 = arith.addf %21, %26 : vector<16x512xf32>
    %c0_31 = arith.constant 0 : index
    %c0_32 = arith.constant 0 : index
    %28 = vector.load %arg3[%c0_31, %c0_32] : memref<1x512xf32, #tpu.memory_space<vmem>>, vector<1x512xf32>
    %29 = vector.broadcast %28 : vector<1x512xf32> to vector<16x512xf32>
    %30 = arith.addf %27, %29 : vector<16x512xf32>
    %cst_33 = arith.constant 0.000000e+00 : f32
    %31 = vector.broadcast %cst_33 : f32 to vector<16x512xf32>
    %32 = arith.maximumf %30, %31 : vector<16x512xf32>
    %33 = vector.extract_strided_slice %32 {offsets = [0, 0], sizes = [1, 512], strides = [1, 1]} : vector<16x512xf32> to vector<1x512xf32>
    %34 = vector.extract_strided_slice %32 {offsets = [1, 0], sizes = [1, 512], strides = [1, 1]} : vector<16x512xf32> to vector<1x512xf32>
    %35 = arith.maximumf %33, %34 : vector<1x512xf32>
    %36 = vector.extract_strided_slice %35 {offsets = [0, 0], sizes = [1, 64], strides = [1, 1]} : vector<1x512xf32> to vector<1x64xf32>
    %37 = vector.extract_strided_slice %35 {offsets = [0, 64], sizes = [1, 64], strides = [1, 1]} : vector<1x512xf32> to vector<1x64xf32>
    %38 = arith.maximumf %36, %37 : vector<1x64xf32>
    %c1_34 = arith.constant 1 : index
    %c0_35 = arith.constant 0 : index
    %39 = vector.load %arg18[%c1_34, %c0_35] : memref<10x256xf32, #tpu.memory_space<vmem>>, vector<1x64xf32>
    tpu.vector_store %arg18[%c1_34, %c0_35], %38 {strides = array<i32>} : memref<10x256xf32, #tpu.memory_space<vmem>>, vector<1x64xf32>,
    %40 = vector.extract_strided_slice %35 {offsets = [0, 128], sizes = [1, 64], strides = [1, 1]} : vector<1x512xf32> to vector<1x64xf32>
    %41 = vector.extract_strided_slice %35 {offsets = [0, 192], sizes = [1, 64], strides = [1, 1]} : vector<1x512xf32> to vector<1x64xf32>
    %42 = arith.maximumf %40, %41 : vector<1x64xf32>
    %c1_36 = arith.constant 1 : index
    %c64 = arith.constant 64 : index
    %43 = vector.load %arg18[%c1_36, %c64] : memref<10x256xf32, #tpu.memory_space<vmem>>, vector<1x64xf32>
    tpu.vector_store %arg18[%c1_36, %c64], %42 {strides = array<i32>} : memref<10x256xf32, #tpu.memory_space<vmem>>, vector<1x64xf32>,
    %44 = vector.extract_strided_slice %35 {offsets = [0, 256], sizes = [1, 64], strides = [1, 1]} : vector<1x512xf32> to vector<1x64xf32>
    %45 = vector.extract_strided_slice %35 {offsets = [0, 320], sizes = [1, 64], strides = [1, 1]} : vector<1x512xf32> to vector<1x64xf32>
    %46 = arith.maximumf %44, %45 : vector<1x64xf32>
    %c1_37 = arith.constant 1 : index
    %c128 = arith.constant 128 : index
    %47 = vector.load %arg18[%c1_37, %c128] : memref<10x256xf32, #tpu.memory_space<vmem>>, vector<1x64xf32>
    tpu.vector_store %arg18[%c1_37, %c128], %46 {strides = array<i32>} : memref<10x256xf32, #tpu.memory_space<vmem>>, vector<1x64xf32>,
    %48 = vector.extract_strided_slice %35 {offsets = [0, 384], sizes = [1, 64], strides = [1, 1]} : vector<1x512xf32> to vector<1x64xf32>
    %49 = vector.extract_strided_slice %35 {offsets = [0, 448], sizes = [1, 64], strides = [1, 1]} : vector<1x512xf32> to vector<1x64xf32>
    %50 = arith.maximumf %48, %49 : vector<1x64xf32>
    %c1_38 = arith.constant 1 : index
    %c192 = arith.constant 192 : index
    %51 = vector.load %arg18[%c1_38, %c192] : memref<10x256xf32, #tpu.memory_space<vmem>>, vector<1x64xf32>
    tpu.vector_store %arg18[%c1_38, %c192], %50 {strides = array<i32>} : memref<10x256xf32, #tpu.memory_space<vmem>>, vector<1x64xf32>,
    %52 = vector.extract_strided_slice %32 {offsets = [2, 0], sizes = [1, 512], strides = [1, 1]} : vector<16x512xf32> to vector<1x512xf32>
    %53 = vector.extract_strided_slice %32 {offsets = [3, 0], sizes = [1, 512], strides = [1, 1]} : vector<16x512xf32> to vector<1x512xf32>
    %54 = arith.maximumf %52, %53 : vector<1x512xf32>
    %55 = vector.extract_strided_slice %54 {offsets = [0, 0], sizes = [1, 64], strides = [1, 1]} : vector<1x512xf32> to vector<1x64xf32>
    %56 = vector.extract_strided_slice %54 {offsets = [0, 64], sizes = [1, 64], strides = [1, 1]} : vector<1x512xf32> to vector<1x64xf32>
    %57 = arith.maximumf %55, %56 : vector<1x64xf32>
    %c2_39 = arith.constant 2 : index
    %c0_40 = arith.constant 0 : index
    %58 = vector.load %arg18[%c2_39, %c0_40] : memref<10x256xf32, #tpu.memory_space<vmem>>, vector<1x64xf32>
    tpu.vector_store %arg18[%c2_39, %c0_40], %57 {strides = array<i32>} : memref<10x256xf32, #tpu.memory_space<vmem>>, vector<1x64xf32>,
    %59 = vector.extract_strided_slice %54 {offsets = [0, 128], sizes = [1, 64], strides = [1, 1]} : vector<1x512xf32> to vector<1x64xf32>
    %60 = vector.extract_strided_slice %54 {offsets = [0, 192], sizes = [1, 64], strides = [1, 1]} : vector<1x512xf32> to vector<1x64xf32>
    %61 = arith.maximumf %59, %60 : vector<1x64xf32>
    %c2_41 = arith.constant 2 : index
    %c64_42 = arith.constant 64 : index
    %62 = vector.load %arg18[%c2_41, %c64_42] : memref<10x256xf32, #tpu.memory_space<vmem>>, vector<1x64xf32>
    tpu.vector_store %arg18[%c2_41, %c64_42], %61 {strides = array<i32>} : memref<10x256xf32, #tpu.memory_space<vmem>>, vector<1x64xf32>,
    %63 = vector.extract_strided_slice %54 {offsets = [0, 256], sizes = [1, 64], strides = [1, 1]} : vector<1x512xf32> to vector<1x64xf32>
    %64 = vector.extract_strided_slice %54 {offsets = [0, 320], sizes = [1, 64], strides = [1, 1]} : vector<1x512xf32> to vector<1x64xf32>
    %65 = arith.maximumf %63, %64 : vector<1x64xf32>
    %c2_43 = arith.constant 2 : index
    %c128_44 = arith.constant 128 : index
    %66 = vector.load %arg18[%c2_43, %c128_44] : memref<10x256xf32, #tpu.memory_space<vmem>>, vector<1x64xf32>
    tpu.vector_store %arg18[%c2_43, %c128_44], %65 {strides = array<i32>} : memref<10x256xf32, #tpu.memory_space<vmem>>, vector<1x64xf32>,
    %67 = vector.extract_strided_slice %54 {offsets = [0, 384], sizes = [1, 64], strides = [1, 1]} : vector<1x512xf32> to vector<1x64xf32>
    %68 = vector.extract_strided_slice %54 {offsets = [0, 448], sizes = [1, 64], strides = [1, 1]} : vector<1x512xf32> to vector<1x64xf32>
    %69 = arith.maximumf %67, %68 : vector<1x64xf32>
    %c2_45 = arith.constant 2 : index
    %c192_46 = arith.constant 192 : index
    %70 = vector.load %arg18[%c2_45, %c192_46] : memref<10x256xf32, #tpu.memory_space<vmem>>, vector<1x64xf32>
    tpu.vector_store %arg18[%c2_45, %c192_46], %69 {strides = array<i32>} : memref<10x256xf32, #tpu.memory_space<vmem>>, vector<1x64xf32>,
    %71 = vector.extract_strided_slice %32 {offsets = [4, 0], sizes = [1, 512], strides = [1, 1]} : vector<16x512xf32> to vector<1x512xf32>
    %72 = vector.extract_strided_slice %32 {offsets = [5, 0], sizes = [1, 512], strides = [1, 1]} : vector<16x512xf32> to vector<1x512xf32>
    %73 = arith.maximumf %71, %72 : vector<1x512xf32>
    %74 = vector.extract_strided_slice %73 {offsets = [0, 0], sizes = [1, 64], strides = [1, 1]} : vector<1x512xf32> to vector<1x64xf32>
    %75 = vector.extract_strided_slice %73 {offsets = [0, 64], sizes = [1, 64], strides = [1, 1]} : vector<1x512xf32> to vector<1x64xf32>
    %76 = arith.maximumf %74, %75 : vector<1x64xf32>
    %c3 = arith.constant 3 : index
    %c0_47 = arith.constant 0 : index
    %77 = vector.load %arg18[%c3, %c0_47] : memref<10x256xf32, #tpu.memory_space<vmem>>, vector<1x64xf32>
    tpu.vector_store %arg18[%c3, %c0_47], %76 {strides = array<i32>} : memref<10x256xf32, #tpu.memory_space<vmem>>, vector<1x64xf32>,
    %78 = vector.extract_strided_slice %73 {offsets = [0, 128], sizes = [1, 64], strides = [1, 1]} : vector<1x512xf32> to vector<1x64xf32>
    %79 = vector.extract_strided_slice %73 {offsets = [0, 192], sizes = [1, 64], strides = [1, 1]} : vector<1x512xf32> to vector<1x64xf32>
    %80 = arith.maximumf %78, %79 : vector<1x64xf32>
    %c3_48 = arith.constant 3 : index
    %c64_49 = arith.constant 64 : index
    %81 = vector.load %arg18[%c3_48, %c64_49] : memref<10x256xf32, #tpu.memory_space<vmem>>, vector<1x64xf32>
    tpu.vector_store %arg18[%c3_48, %c64_49], %80 {strides = array<i32>} : memref<10x256xf32, #tpu.memory_space<vmem>>, vector<1x64xf32>,
    %82 = vector.extract_strided_slice %73 {offsets = [0, 256], sizes = [1, 64], strides = [1, 1]} : vector<1x512xf32> to vector<1x64xf32>
    %83 = vector.extract_strided_slice %73 {offsets = [0, 320], sizes = [1, 64], strides = [1, 1]} : vector<1x512xf32> to vector<1x64xf32>
    %84 = arith.maximumf %82, %83 : vector<1x64xf32>
    %c3_50 = arith.constant 3 : index
    %c128_51 = arith.constant 128 : index
    %85 = vector.load %arg18[%c3_50, %c128_51] : memref<10x256xf32, #tpu.memory_space<vmem>>, vector<1x64xf32>
    tpu.vector_store %arg18[%c3_50, %c128_51], %84 {strides = array<i32>} : memref<10x256xf32, #tpu.memory_space<vmem>>, vector<1x64xf32>,
    %86 = vector.extract_strided_slice %73 {offsets = [0, 384], sizes = [1, 64], strides = [1, 1]} : vector<1x512xf32> to vector<1x64xf32>
    %87 = vector.extract_strided_slice %73 {offsets = [0, 448], sizes = [1, 64], strides = [1, 1]} : vector<1x512xf32> to vector<1x64xf32>
    %88 = arith.maximumf %86, %87 : vector<1x64xf32>
    %c3_52 = arith.constant 3 : index
    %c192_53 = arith.constant 192 : index
    %89 = vector.load %arg18[%c3_52, %c192_53] : memref<10x256xf32, #tpu.memory_space<vmem>>, vector<1x64xf32>
    tpu.vector_store %arg18[%c3_52, %c192_53], %88 {strides = array<i32>} : memref<10x256xf32, #tpu.memory_space<vmem>>, vector<1x64xf32>,
    %90 = vector.extract_strided_slice %32 {offsets = [6, 0], sizes = [1, 512], strides = [1, 1]} : vector<16x512xf32> to vector<1x512xf32>
    %91 = vector.extract_strided_slice %32 {offsets = [7, 0], sizes = [1, 512], strides = [1, 1]} : vector<16x512xf32> to vector<1x512xf32>
    %92 = arith.maximumf %90, %91 : vector<1x512xf32>
    %93 = vector.extract_strided_slice %92 {offsets = [0, 0], sizes = [1, 64], strides = [1, 1]} : vector<1x512xf32> to vector<1x64xf32>
    %94 = vector.extract_strided_slice %92 {offsets = [0, 64], sizes = [1, 64], strides = [1, 1]} : vector<1x512xf32> to vector<1x64xf32>
    %95 = arith.maximumf %93, %94 : vector<1x64xf32>
    %c4 = arith.constant 4 : index
    %c0_54 = arith.constant 0 : index
    %96 = vector.load %arg18[%c4, %c0_54] : memref<10x256xf32, #tpu.memory_space<vmem>>, vector<1x64xf32>
    tpu.vector_store %arg18[%c4, %c0_54], %95 {strides = array<i32>} : memref<10x256xf32, #tpu.memory_space<vmem>>, vector<1x64xf32>,
    %97 = vector.extract_strided_slice %92 {offsets = [0, 128], sizes = [1, 64], strides = [1, 1]} : vector<1x512xf32> to vector<1x64xf32>
    %98 = vector.extract_strided_slice %92 {offsets = [0, 192], sizes = [1, 64], strides = [1, 1]} : vector<1x512xf32> to vector<1x64xf32>
    %99 = arith.maximumf %97, %98 : vector<1x64xf32>
    %c4_55 = arith.constant 4 : index
    %c64_56 = arith.constant 64 : index
    %100 = vector.load %arg18[%c4_55, %c64_56] : memref<10x256xf32, #tpu.memory_space<vmem>>, vector<1x64xf32>
    tpu.vector_store %arg18[%c4_55, %c64_56], %99 {strides = array<i32>} : memref<10x256xf32, #tpu.memory_space<vmem>>, vector<1x64xf32>,
    %101 = vector.extract_strided_slice %92 {offsets = [0, 256], sizes = [1, 64], strides = [1, 1]} : vector<1x512xf32> to vector<1x64xf32>
    %102 = vector.extract_strided_slice %92 {offsets = [0, 320], sizes = [1, 64], strides = [1, 1]} : vector<1x512xf32> to vector<1x64xf32>
    %103 = arith.maximumf %101, %102 : vector<1x64xf32>
    %c4_57 = arith.constant 4 : index
    %c128_58 = arith.constant 128 : index
    %104 = vector.load %arg18[%c4_57, %c128_58] : memref<10x256xf32, #tpu.memory_space<vmem>>, vector<1x64xf32>
    tpu.vector_store %arg18[%c4_57, %c128_58], %103 {strides = array<i32>} : memref<10x256xf32, #tpu.memory_space<vmem>>, vector<1x64xf32>,
    %105 = vector.extract_strided_slice %92 {offsets = [0, 384], sizes = [1, 64], strides = [1, 1]} : vector<1x512xf32> to vector<1x64xf32>
    %106 = vector.extract_strided_slice %92 {offsets = [0, 448], sizes = [1, 64], strides = [1, 1]} : vector<1x512xf32> to vector<1x64xf32>
    %107 = arith.maximumf %105, %106 : vector<1x64xf32>
    %c4_59 = arith.constant 4 : index
    %c192_60 = arith.constant 192 : index
    %108 = vector.load %arg18[%c4_59, %c192_60] : memref<10x256xf32, #tpu.memory_space<vmem>>, vector<1x64xf32>
    tpu.vector_store %arg18[%c4_59, %c192_60], %107 {strides = array<i32>} : memref<10x256xf32, #tpu.memory_space<vmem>>, vector<1x64xf32>,
    %109 = vector.extract_strided_slice %32 {offsets = [8, 0], sizes = [1, 512], strides = [1, 1]} : vector<16x512xf32> to vector<1x512xf32>
    %110 = vector.extract_strided_slice %32 {offsets = [9, 0], sizes = [1, 512], strides = [1, 1]} : vector<16x512xf32> to vector<1x512xf32>
    %111 = arith.maximumf %109, %110 : vector<1x512xf32>
    %112 = vector.extract_strided_slice %111 {offsets = [0, 0], sizes = [1, 64], strides = [1, 1]} : vector<1x512xf32> to vector<1x64xf32>
    %113 = vector.extract_strided_slice %111 {offsets = [0, 64], sizes = [1, 64], strides = [1, 1]} : vector<1x512xf32> to vector<1x64xf32>
    %114 = arith.maximumf %112, %113 : vector<1x64xf32>
    %c5 = arith.constant 5 : index
    %c0_61 = arith.constant 0 : index
    %115 = vector.load %arg18[%c5, %c0_61] : memref<10x256xf32, #tpu.memory_space<vmem>>, vector<1x64xf32>
    tpu.vector_store %arg18[%c5, %c0_61], %114 {strides = array<i32>} : memref<10x256xf32, #tpu.memory_space<vmem>>, vector<1x64xf32>,
    %116 = vector.extract_strided_slice %111 {offsets = [0, 128], sizes = [1, 64], strides = [1, 1]} : vector<1x512xf32> to vector<1x64xf32>
    %117 = vector.extract_strided_slice %111 {offsets = [0, 192], sizes = [1, 64], strides = [1, 1]} : vector<1x512xf32> to vector<1x64xf32>
    %118 = arith.maximumf %116, %117 : vector<1x64xf32>
    %c5_62 = arith.constant 5 : index
    %c64_63 = arith.constant 64 : index
    %119 = vector.load %arg18[%c5_62, %c64_63] : memref<10x256xf32, #tpu.memory_space<vmem>>, vector<1x64xf32>
    tpu.vector_store %arg18[%c5_62, %c64_63], %118 {strides = array<i32>} : memref<10x256xf32, #tpu.memory_space<vmem>>, vector<1x64xf32>,
    %120 = vector.extract_strided_slice %111 {offsets = [0, 256], sizes = [1, 64], strides = [1, 1]} : vector<1x512xf32> to vector<1x64xf32>
    %121 = vector.extract_strided_slice %111 {offsets = [0, 320], sizes = [1, 64], strides = [1, 1]} : vector<1x512xf32> to vector<1x64xf32>
    %122 = arith.maximumf %120, %121 : vector<1x64xf32>
    %c5_64 = arith.constant 5 : index
    %c128_65 = arith.constant 128 : index
    %123 = vector.load %arg18[%c5_64, %c128_65] : memref<10x256xf32, #tpu.memory_space<vmem>>, vector<1x64xf32>
    tpu.vector_store %arg18[%c5_64, %c128_65], %122 {strides = array<i32>} : memref<10x256xf32, #tpu.memory_space<vmem>>, vector<1x64xf32>,
    %124 = vector.extract_strided_slice %111 {offsets = [0, 384], sizes = [1, 64], strides = [1, 1]} : vector<1x512xf32> to vector<1x64xf32>
    %125 = vector.extract_strided_slice %111 {offsets = [0, 448], sizes = [1, 64], strides = [1, 1]} : vector<1x512xf32> to vector<1x64xf32>
    %126 = arith.maximumf %124, %125 : vector<1x64xf32>
    %c5_66 = arith.constant 5 : index
    %c192_67 = arith.constant 192 : index
    %127 = vector.load %arg18[%c5_66, %c192_67] : memref<10x256xf32, #tpu.memory_space<vmem>>, vector<1x64xf32>
    tpu.vector_store %arg18[%c5_66, %c192_67], %126 {strides = array<i32>} : memref<10x256xf32, #tpu.memory_space<vmem>>, vector<1x64xf32>,
    %128 = vector.extract_strided_slice %32 {offsets = [10, 0], sizes = [1, 512], strides = [1, 1]} : vector<16x512xf32> to vector<1x512xf32>
    %129 = vector.extract_strided_slice %32 {offsets = [11, 0], sizes = [1, 512], strides = [1, 1]} : vector<16x512xf32> to vector<1x512xf32>
    %130 = arith.maximumf %128, %129 : vector<1x512xf32>
    %131 = vector.extract_strided_slice %130 {offsets = [0, 0], sizes = [1, 64], strides = [1, 1]} : vector<1x512xf32> to vector<1x64xf32>
    %132 = vector.extract_strided_slice %130 {offsets = [0, 64], sizes = [1, 64], strides = [1, 1]} : vector<1x512xf32> to vector<1x64xf32>
    %133 = arith.maximumf %131, %132 : vector<1x64xf32>
    %c6 = arith.constant 6 : index
    %c0_68 = arith.constant 0 : index
    %134 = vector.load %arg18[%c6, %c0_68] : memref<10x256xf32, #tpu.memory_space<vmem>>, vector<1x64xf32>
    tpu.vector_store %arg18[%c6, %c0_68], %133 {strides = array<i32>} : memref<10x256xf32, #tpu.memory_space<vmem>>, vector<1x64xf32>,
    %135 = vector.extract_strided_slice %130 {offsets = [0, 128], sizes = [1, 64], strides = [1, 1]} : vector<1x512xf32> to vector<1x64xf32>
    %136 = vector.extract_strided_slice %130 {offsets = [0, 192], sizes = [1, 64], strides = [1, 1]} : vector<1x512xf32> to vector<1x64xf32>
    %137 = arith.maximumf %135, %136 : vector<1x64xf32>
    %c6_69 = arith.constant 6 : index
    %c64_70 = arith.constant 64 : index
    %138 = vector.load %arg18[%c6_69, %c64_70] : memref<10x256xf32, #tpu.memory_space<vmem>>, vector<1x64xf32>
    tpu.vector_store %arg18[%c6_69, %c64_70], %137 {strides = array<i32>} : memref<10x256xf32, #tpu.memory_space<vmem>>, vector<1x64xf32>,
    %139 = vector.extract_strided_slice %130 {offsets = [0, 256], sizes = [1, 64], strides = [1, 1]} : vector<1x512xf32> to vector<1x64xf32>
    %140 = vector.extract_strided_slice %130 {offsets = [0, 320], sizes = [1, 64], strides = [1, 1]} : vector<1x512xf32> to vector<1x64xf32>
    %141 = arith.maximumf %139, %140 : vector<1x64xf32>
    %c6_71 = arith.constant 6 : index
    %c128_72 = arith.constant 128 : index
    %142 = vector.load %arg18[%c6_71, %c128_72] : memref<10x256xf32, #tpu.memory_space<vmem>>, vector<1x64xf32>
    tpu.vector_store %arg18[%c6_71, %c128_72], %141 {strides = array<i32>} : memref<10x256xf32, #tpu.memory_space<vmem>>, vector<1x64xf32>,
    %143 = vector.extract_strided_slice %130 {offsets = [0, 384], sizes = [1, 64], strides = [1, 1]} : vector<1x512xf32> to vector<1x64xf32>
    %144 = vector.extract_strided_slice %130 {offsets = [0, 448], sizes = [1, 64], strides = [1, 1]} : vector<1x512xf32> to vector<1x64xf32>
    %145 = arith.maximumf %143, %144 : vector<1x64xf32>
    %c6_73 = arith.constant 6 : index
    %c192_74 = arith.constant 192 : index
    %146 = vector.load %arg18[%c6_73, %c192_74] : memref<10x256xf32, #tpu.memory_space<vmem>>, vector<1x64xf32>
    tpu.vector_store %arg18[%c6_73, %c192_74], %145 {strides = array<i32>} : memref<10x256xf32, #tpu.memory_space<vmem>>, vector<1x64xf32>,
    %147 = vector.extract_strided_slice %32 {offsets = [12, 0], sizes = [1, 512], strides = [1, 1]} : vector<16x512xf32> to vector<1x512xf32>
    %148 = vector.extract_strided_slice %32 {offsets = [13, 0], sizes = [1, 512], strides = [1, 1]} : vector<16x512xf32> to vector<1x512xf32>
    %149 = arith.maximumf %147, %148 : vector<1x512xf32>
    %150 = vector.extract_strided_slice %149 {offsets = [0, 0], sizes = [1, 64], strides = [1, 1]} : vector<1x512xf32> to vector<1x64xf32>
    %151 = vector.extract_strided_slice %149 {offsets = [0, 64], sizes = [1, 64], strides = [1, 1]} : vector<1x512xf32> to vector<1x64xf32>
    %152 = arith.maximumf %150, %151 : vector<1x64xf32>
    %c7 = arith.constant 7 : index
    %c0_75 = arith.constant 0 : index
    %153 = vector.load %arg18[%c7, %c0_75] : memref<10x256xf32, #tpu.memory_space<vmem>>, vector<1x64xf32>
    tpu.vector_store %arg18[%c7, %c0_75], %152 {strides = array<i32>} : memref<10x256xf32, #tpu.memory_space<vmem>>, vector<1x64xf32>,
    %154 = vector.extract_strided_slice %149 {offsets = [0, 128], sizes = [1, 64], strides = [1, 1]} : vector<1x512xf32> to vector<1x64xf32>
    %155 = vector.extract_strided_slice %149 {offsets = [0, 192], sizes = [1, 64], strides = [1, 1]} : vector<1x512xf32> to vector<1x64xf32>
    %156 = arith.maximumf %154, %155 : vector<1x64xf32>
    %c7_76 = arith.constant 7 : index
    %c64_77 = arith.constant 64 : index
    %157 = vector.load %arg18[%c7_76, %c64_77] : memref<10x256xf32, #tpu.memory_space<vmem>>, vector<1x64xf32>
    tpu.vector_store %arg18[%c7_76, %c64_77], %156 {strides = array<i32>} : memref<10x256xf32, #tpu.memory_space<vmem>>, vector<1x64xf32>,
    %158 = vector.extract_strided_slice %149 {offsets = [0, 256], sizes = [1, 64], strides = [1, 1]} : vector<1x512xf32> to vector<1x64xf32>
    %159 = vector.extract_strided_slice %149 {offsets = [0, 320], sizes = [1, 64], strides = [1, 1]} : vector<1x512xf32> to vector<1x64xf32>
    %160 = arith.maximumf %158, %159 : vector<1x64xf32>
    %c7_78 = arith.constant 7 : index
    %c128_79 = arith.constant 128 : index
    %161 = vector.load %arg18[%c7_78, %c128_79] : memref<10x256xf32, #tpu.memory_space<vmem>>, vector<1x64xf32>
    tpu.vector_store %arg18[%c7_78, %c128_79], %160 {strides = array<i32>} : memref<10x256xf32, #tpu.memory_space<vmem>>, vector<1x64xf32>,
    %162 = vector.extract_strided_slice %149 {offsets = [0, 384], sizes = [1, 64], strides = [1, 1]} : vector<1x512xf32> to vector<1x64xf32>
    %163 = vector.extract_strided_slice %149 {offsets = [0, 448], sizes = [1, 64], strides = [1, 1]} : vector<1x512xf32> to vector<1x64xf32>
    %164 = arith.maximumf %162, %163 : vector<1x64xf32>
    %c7_80 = arith.constant 7 : index
    %c192_81 = arith.constant 192 : index
    %165 = vector.load %arg18[%c7_80, %c192_81] : memref<10x256xf32, #tpu.memory_space<vmem>>, vector<1x64xf32>
    tpu.vector_store %arg18[%c7_80, %c192_81], %164 {strides = array<i32>} : memref<10x256xf32, #tpu.memory_space<vmem>>, vector<1x64xf32>,
    %166 = vector.extract_strided_slice %32 {offsets = [14, 0], sizes = [1, 512], strides = [1, 1]} : vector<16x512xf32> to vector<1x512xf32>
    %167 = vector.extract_strided_slice %32 {offsets = [15, 0], sizes = [1, 512], strides = [1, 1]} : vector<16x512xf32> to vector<1x512xf32>
    %168 = arith.maximumf %166, %167 : vector<1x512xf32>
    %169 = vector.extract_strided_slice %168 {offsets = [0, 0], sizes = [1, 64], strides = [1, 1]} : vector<1x512xf32> to vector<1x64xf32>
    %170 = vector.extract_strided_slice %168 {offsets = [0, 64], sizes = [1, 64], strides = [1, 1]} : vector<1x512xf32> to vector<1x64xf32>
    %171 = arith.maximumf %169, %170 : vector<1x64xf32>
    %c8 = arith.constant 8 : index
    %c0_82 = arith.constant 0 : index
    %172 = vector.load %arg18[%c8, %c0_82] : memref<10x256xf32, #tpu.memory_space<vmem>>, vector<1x64xf32>
    tpu.vector_store %arg18[%c8, %c0_82], %171 {strides = array<i32>} : memref<10x256xf32, #tpu.memory_space<vmem>>, vector<1x64xf32>,
    %173 = vector.extract_strided_slice %168 {offsets = [0, 128], sizes = [1, 64], strides = [1, 1]} : vector<1x512xf32> to vector<1x64xf32>
    %174 = vector.extract_strided_slice %168 {offsets = [0, 192], sizes = [1, 64], strides = [1, 1]} : vector<1x512xf32> to vector<1x64xf32>
    %175 = arith.maximumf %173, %174 : vector<1x64xf32>
    %c8_83 = arith.constant 8 : index
    %c64_84 = arith.constant 64 : index
    %176 = vector.load %arg18[%c8_83, %c64_84] : memref<10x256xf32, #tpu.memory_space<vmem>>, vector<1x64xf32>
    tpu.vector_store %arg18[%c8_83, %c64_84], %175 {strides = array<i32>} : memref<10x256xf32, #tpu.memory_space<vmem>>, vector<1x64xf32>,
    %177 = vector.extract_strided_slice %168 {offsets = [0, 256], sizes = [1, 64], strides = [1, 1]} : vector<1x512xf32> to vector<1x64xf32>
    %178 = vector.extract_strided_slice %168 {offsets = [0, 320], sizes = [1, 64], strides = [1, 1]} : vector<1x512xf32> to vector<1x64xf32>
    %179 = arith.maximumf %177, %178 : vector<1x64xf32>
    %c8_85 = arith.constant 8 : index
    %c128_86 = arith.constant 128 : index
    %180 = vector.load %arg18[%c8_85, %c128_86] : memref<10x256xf32, #tpu.memory_space<vmem>>, vector<1x64xf32>
    tpu.vector_store %arg18[%c8_85, %c128_86], %179 {strides = array<i32>} : memref<10x256xf32, #tpu.memory_space<vmem>>, vector<1x64xf32>,
    %181 = vector.extract_strided_slice %168 {offsets = [0, 384], sizes = [1, 64], strides = [1, 1]} : vector<1x512xf32> to vector<1x64xf32>
    %182 = vector.extract_strided_slice %168 {offsets = [0, 448], sizes = [1, 64], strides = [1, 1]} : vector<1x512xf32> to vector<1x64xf32>
    %183 = arith.maximumf %181, %182 : vector<1x64xf32>
    %c8_87 = arith.constant 8 : index
    %c192_88 = arith.constant 192 : index
    %184 = vector.load %arg18[%c8_87, %c192_88] : memref<10x256xf32, #tpu.memory_space<vmem>>, vector<1x64xf32>
    tpu.vector_store %arg18[%c8_87, %c192_88], %183 {strides = array<i32>} : memref<10x256xf32, #tpu.memory_space<vmem>>, vector<1x64xf32>,
    %c0_89 = arith.constant 0 : index
    %c0_90 = arith.constant 0 : index
    %185 = vector.load %arg18[%c0_89, %c0_90] : memref<10x256xf32, #tpu.memory_space<vmem>>, vector<8x256xf32>
    %186 = arith.truncf %185 : vector<8x256xf32> to vector<8x256xbf16>
    %c0_91 = arith.constant 0 : index
    %c0_92 = arith.constant 0 : index
    %c0_93 = arith.constant 0 : index
    %187 = vector.load %arg4[%c0_91, %c0_92, %c0_93] : memref<3x256x256xbf16, #tpu.memory_space<vmem>>, vector<1x256x256xbf16>
    %188 = vector.shape_cast %187 : vector<1x256x256xbf16> to vector<256x256xbf16>
    %cst_94 = arith.constant dense<0.000000e+00> : vector<8x256xf32>
    %189 = tpu.matmul %186, %188, %cst_94 {dimension_numbers = #tpu.dot_dimension_numbers<[1], [0], [0], [1], [0, 0, 1, 1], [], []>} : vector<8x256xbf16>, vector<256x256xbf16>, vector<8x256xf32> -> vector<8x256xf32>
    %c1_95 = arith.constant 1 : index
    %c0_96 = arith.constant 0 : index
    %190 = vector.load %arg18[%c1_95, %c0_96] : memref<10x256xf32, #tpu.memory_space<vmem>>, vector<8x256xf32>
    %191 = arith.truncf %190 : vector<8x256xf32> to vector<8x256xbf16>
    %c1_97 = arith.constant 1 : index
    %c0_98 = arith.constant 0 : index
    %c0_99 = arith.constant 0 : index
    %192 = vector.load %arg4[%c1_97, %c0_98, %c0_99] : memref<3x256x256xbf16, #tpu.memory_space<vmem>>, vector<1x256x256xbf16>
    %193 = vector.shape_cast %192 : vector<1x256x256xbf16> to vector<256x256xbf16>
    %cst_100 = arith.constant dense<0.000000e+00> : vector<8x256xf32>
    %194 = tpu.matmul %191, %193, %cst_100 {dimension_numbers = #tpu.dot_dimension_numbers<[1], [0], [0], [1], [0, 0, 1, 1], [], []>} : vector<8x256xbf16>, vector<256x256xbf16>, vector<8x256xf32> -> vector<8x256xf32>
    %195 = arith.addf %189, %194 : vector<8x256xf32>
    %c2_101 = arith.constant 2 : index
    %c0_102 = arith.constant 0 : index
    %196 = vector.load %arg18[%c2_101, %c0_102] : memref<10x256xf32, #tpu.memory_space<vmem>>, vector<8x256xf32>
    %197 = arith.truncf %196 : vector<8x256xf32> to vector<8x256xbf16>
    %c2_103 = arith.constant 2 : index
    %c0_104 = arith.constant 0 : index
    %c0_105 = arith.constant 0 : index
    %198 = vector.load %arg4[%c2_103, %c0_104, %c0_105] : memref<3x256x256xbf16, #tpu.memory_space<vmem>>, vector<1x256x256xbf16>
    %199 = vector.shape_cast %198 : vector<1x256x256xbf16> to vector<256x256xbf16>
    %cst_106 = arith.constant dense<0.000000e+00> : vector<8x256xf32>
    %200 = tpu.matmul %197, %199, %cst_106 {dimension_numbers = #tpu.dot_dimension_numbers<[1], [0], [0], [1], [0, 0, 1, 1], [], []>} : vector<8x256xbf16>, vector<256x256xbf16>, vector<8x256xf32> -> vector<8x256xf32>
    %201 = arith.addf %195, %200 : vector<8x256xf32>
    %c0_107 = arith.constant 0 : index
    %c0_108 = arith.constant 0 : index
    %202 = vector.load %arg5[%c0_107, %c0_108] : memref<1x256xf32, #tpu.memory_space<vmem>>, vector<1x256xf32>
    %203 = vector.broadcast %202 : vector<1x256xf32> to vector<8x256xf32>
    %204 = arith.addf %201, %203 : vector<8x256xf32>
    %cst_109 = arith.constant 0.000000e+00 : f32
    %205 = vector.broadcast %cst_109 : f32 to vector<8x256xf32>
    %206 = arith.maximumf %204, %205 : vector<8x256xf32>
    %207 = vector.extract_strided_slice %206 {offsets = [0, 0], sizes = [1, 256], strides = [1, 1]} : vector<8x256xf32> to vector<1x256xf32>
    %208 = vector.extract_strided_slice %206 {offsets = [1, 0], sizes = [1, 256], strides = [1, 1]} : vector<8x256xf32> to vector<1x256xf32>
    %209 = arith.maximumf %207, %208 : vector<1x256xf32>
    %210 = vector.extract_strided_slice %209 {offsets = [0, 0], sizes = [1, 64], strides = [1, 1]} : vector<1x256xf32> to vector<1x64xf32>
    %211 = vector.extract_strided_slice %209 {offsets = [0, 64], sizes = [1, 64], strides = [1, 1]} : vector<1x256xf32> to vector<1x64xf32>
    %212 = arith.maximumf %210, %211 : vector<1x64xf32>
    %c1_110 = arith.constant 1 : index
    %c0_111 = arith.constant 0 : index
    %213 = vector.load %arg19[%c1_110, %c0_111] : memref<6x128xf32, #tpu.memory_space<vmem>>, vector<1x64xf32>
    tpu.vector_store %arg19[%c1_110, %c0_111], %212 {strides = array<i32>} : memref<6x128xf32, #tpu.memory_space<vmem>>, vector<1x64xf32>,
    %214 = vector.extract_strided_slice %209 {offsets = [0, 128], sizes = [1, 64], strides = [1, 1]} : vector<1x256xf32> to vector<1x64xf32>
    %215 = vector.extract_strided_slice %209 {offsets = [0, 192], sizes = [1, 64], strides = [1, 1]} : vector<1x256xf32> to vector<1x64xf32>
    %216 = arith.maximumf %214, %215 : vector<1x64xf32>
    %c1_112 = arith.constant 1 : index
    %c64_113 = arith.constant 64 : index
    %217 = vector.load %arg19[%c1_112, %c64_113] : memref<6x128xf32, #tpu.memory_space<vmem>>, vector<1x64xf32>
    tpu.vector_store %arg19[%c1_112, %c64_113], %216 {strides = array<i32>} : memref<6x128xf32, #tpu.memory_space<vmem>>, vector<1x64xf32>,
    %218 = vector.extract_strided_slice %206 {offsets = [2, 0], sizes = [1, 256], strides = [1, 1]} : vector<8x256xf32> to vector<1x256xf32>
    %219 = vector.extract_strided_slice %206 {offsets = [3, 0], sizes = [1, 256], strides = [1, 1]} : vector<8x256xf32> to vector<1x256xf32>
    %220 = arith.maximumf %218, %219 : vector<1x256xf32>
    %221 = vector.extract_strided_slice %220 {offsets = [0, 0], sizes = [1, 64], strides = [1, 1]} : vector<1x256xf32> to vector<1x64xf32>
    %222 = vector.extract_strided_slice %220 {offsets = [0, 64], sizes = [1, 64], strides = [1, 1]} : vector<1x256xf32> to vector<1x64xf32>
    %223 = arith.maximumf %221, %222 : vector<1x64xf32>
    %c2_114 = arith.constant 2 : index
    %c0_115 = arith.constant 0 : index
    %224 = vector.load %arg19[%c2_114, %c0_115] : memref<6x128xf32, #tpu.memory_space<vmem>>, vector<1x64xf32>
    tpu.vector_store %arg19[%c2_114, %c0_115], %223 {strides = array<i32>} : memref<6x128xf32, #tpu.memory_space<vmem>>, vector<1x64xf32>,
    %225 = vector.extract_strided_slice %220 {offsets = [0, 128], sizes = [1, 64], strides = [1, 1]} : vector<1x256xf32> to vector<1x64xf32>
    %226 = vector.extract_strided_slice %220 {offsets = [0, 192], sizes = [1, 64], strides = [1, 1]} : vector<1x256xf32> to vector<1x64xf32>
    %227 = arith.maximumf %225, %226 : vector<1x64xf32>
    %c2_116 = arith.constant 2 : index
    %c64_117 = arith.constant 64 : index
    %228 = vector.load %arg19[%c2_116, %c64_117] : memref<6x128xf32, #tpu.memory_space<vmem>>, vector<1x64xf32>
    tpu.vector_store %arg19[%c2_116, %c64_117], %227 {strides = array<i32>} : memref<6x128xf32, #tpu.memory_space<vmem>>, vector<1x64xf32>,
    %229 = vector.extract_strided_slice %206 {offsets = [4, 0], sizes = [1, 256], strides = [1, 1]} : vector<8x256xf32> to vector<1x256xf32>
    %230 = vector.extract_strided_slice %206 {offsets = [5, 0], sizes = [1, 256], strides = [1, 1]} : vector<8x256xf32> to vector<1x256xf32>
    %231 = arith.maximumf %229, %230 : vector<1x256xf32>
    %232 = vector.extract_strided_slice %231 {offsets = [0, 0], sizes = [1, 64], strides = [1, 1]} : vector<1x256xf32> to vector<1x64xf32>
    %233 = vector.extract_strided_slice %231 {offsets = [0, 64], sizes = [1, 64], strides = [1, 1]} : vector<1x256xf32> to vector<1x64xf32>
    %234 = arith.maximumf %232, %233 : vector<1x64xf32>
    %c3_118 = arith.constant 3 : index
    %c0_119 = arith.constant 0 : index
    %235 = vector.load %arg19[%c3_118, %c0_119] : memref<6x128xf32, #tpu.memory_space<vmem>>, vector<1x64xf32>
    tpu.vector_store %arg19[%c3_118, %c0_119], %234 {strides = array<i32>} : memref<6x128xf32, #tpu.memory_space<vmem>>, vector<1x64xf32>,
    %236 = vector.extract_strided_slice %231 {offsets = [0, 128], sizes = [1, 64], strides = [1, 1]} : vector<1x256xf32> to vector<1x64xf32>
    %237 = vector.extract_strided_slice %231 {offsets = [0, 192], sizes = [1, 64], strides = [1, 1]} : vector<1x256xf32> to vector<1x64xf32>
    %238 = arith.maximumf %236, %237 : vector<1x64xf32>
    %c3_120 = arith.constant 3 : index
    %c64_121 = arith.constant 64 : index
    %239 = vector.load %arg19[%c3_120, %c64_121] : memref<6x128xf32, #tpu.memory_space<vmem>>, vector<1x64xf32>
    tpu.vector_store %arg19[%c3_120, %c64_121], %238 {strides = array<i32>} : memref<6x128xf32, #tpu.memory_space<vmem>>, vector<1x64xf32>,
    %240 = vector.extract_strided_slice %206 {offsets = [6, 0], sizes = [1, 256], strides = [1, 1]} : vector<8x256xf32> to vector<1x256xf32>
    %241 = vector.extract_strided_slice %206 {offsets = [7, 0], sizes = [1, 256], strides = [1, 1]} : vector<8x256xf32> to vector<1x256xf32>
    %242 = arith.maximumf %240, %241 : vector<1x256xf32>
    %243 = vector.extract_strided_slice %242 {offsets = [0, 0], sizes = [1, 64], strides = [1, 1]} : vector<1x256xf32> to vector<1x64xf32>
    %244 = vector.extract_strided_slice %242 {offsets = [0, 64], sizes = [1, 64], strides = [1, 1]} : vector<1x256xf32> to vector<1x64xf32>
    %245 = arith.maximumf %243, %244 : vector<1x64xf32>
    %c4_122 = arith.constant 4 : index
    %c0_123 = arith.constant 0 : index
    %246 = vector.load %arg19[%c4_122, %c0_123] : memref<6x128xf32, #tpu.memory_space<vmem>>, vector<1x64xf32>
    tpu.vector_store %arg19[%c4_122, %c0_123], %245 {strides = array<i32>} : memref<6x128xf32, #tpu.memory_space<vmem>>, vector<1x64xf32>,
    %247 = vector.extract_strided_slice %242 {offsets = [0, 128], sizes = [1, 64], strides = [1, 1]} : vector<1x256xf32> to vector<1x64xf32>
    %248 = vector.extract_strided_slice %242 {offsets = [0, 192], sizes = [1, 64], strides = [1, 1]} : vector<1x256xf32> to vector<1x64xf32>
    %249 = arith.maximumf %247, %248 : vector<1x64xf32>
    %c4_124 = arith.constant 4 : index
    %c64_125 = arith.constant 64 : index
    %250 = vector.load %arg19[%c4_124, %c64_125] : memref<6x128xf32, #tpu.memory_space<vmem>>, vector<1x64xf32>
    tpu.vector_store %arg19[%c4_124, %c64_125], %249 {strides = array<i32>} : memref<6x128xf32, #tpu.memory_space<vmem>>, vector<1x64xf32>,
    %c0_126 = arith.constant 0 : index
    %c0_127 = arith.constant 0 : index
    %251 = vector.load %arg19[%c0_126, %c0_127] : memref<6x128xf32, #tpu.memory_space<vmem>>, vector<4x128xf32>
    %252 = arith.truncf %251 : vector<4x128xf32> to vector<4x128xbf16>
    %c0_128 = arith.constant 0 : index
    %c0_129 = arith.constant 0 : index
    %c0_130 = arith.constant 0 : index
    %253 = vector.load %arg6[%c0_128, %c0_129, %c0_130] : memref<3x128x128xbf16, #tpu.memory_space<vmem>>, vector<1x128x128xbf16>
    %254 = vector.shape_cast %253 : vector<1x128x128xbf16> to vector<128x128xbf16>
    %cst_131 = arith.constant dense<0.000000e+00> : vector<4x128xf32>
    %255 = tpu.matmul %252, %254, %cst_131 {dimension_numbers = #tpu.dot_dimension_numbers<[1], [0], [0], [1], [0, 0, 1, 1], [], []>} : vector<4x128xbf16>, vector<128x128xbf16>, vector<4x128xf32> -> vector<4x128xf32>
    %c1_132 = arith.constant 1 : index
    %c0_133 = arith.constant 0 : index
    %256 = vector.load %arg19[%c1_132, %c0_133] : memref<6x128xf32, #tpu.memory_space<vmem>>, vector<4x128xf32>
    %257 = arith.truncf %256 : vector<4x128xf32> to vector<4x128xbf16>
    %c1_134 = arith.constant 1 : index
    %c0_135 = arith.constant 0 : index
    %c0_136 = arith.constant 0 : index
    %258 = vector.load %arg6[%c1_134, %c0_135, %c0_136] : memref<3x128x128xbf16, #tpu.memory_space<vmem>>, vector<1x128x128xbf16>
    %259 = vector.shape_cast %258 : vector<1x128x128xbf16> to vector<128x128xbf16>
    %cst_137 = arith.constant dense<0.000000e+00> : vector<4x128xf32>
    %260 = tpu.matmul %257, %259, %cst_137 {dimension_numbers = #tpu.dot_dimension_numbers<[1], [0], [0], [1], [0, 0, 1, 1], [], []>} : vector<4x128xbf16>, vector<128x128xbf16>, vector<4x128xf32> -> vector<4x128xf32>
    %261 = arith.addf %255, %260 : vector<4x128xf32>
    %c2_138 = arith.constant 2 : index
    %c0_139 = arith.constant 0 : index
    %262 = vector.load %arg19[%c2_138, %c0_139] : memref<6x128xf32, #tpu.memory_space<vmem>>, vector<4x128xf32>
    %263 = arith.truncf %262 : vector<4x128xf32> to vector<4x128xbf16>
    %c2_140 = arith.constant 2 : index
    %c0_141 = arith.constant 0 : index
    %c0_142 = arith.constant 0 : index
    %264 = vector.load %arg6[%c2_140, %c0_141, %c0_142] : memref<3x128x128xbf16, #tpu.memory_space<vmem>>, vector<1x128x128xbf16>
    %265 = vector.shape_cast %264 : vector<1x128x128xbf16> to vector<128x128xbf16>
    %cst_143 = arith.constant dense<0.000000e+00> : vector<4x128xf32>
    %266 = tpu.matmul %263, %265, %cst_143 {dimension_numbers = #tpu.dot_dimension_numbers<[1], [0], [0], [1], [0, 0, 1, 1], [], []>} : vector<4x128xbf16>, vector<128x128xbf16>, vector<4x128xf32> -> vector<4x128xf32>
    %267 = arith.addf %261, %266 : vector<4x128xf32>
    %c0_144 = arith.constant 0 : index
    %c0_145 = arith.constant 0 : index
    %268 = vector.load %arg7[%c0_144, %c0_145] : memref<1x128xf32, #tpu.memory_space<vmem>>, vector<1x128xf32>
    %269 = vector.broadcast %268 : vector<1x128xf32> to vector<4x128xf32>
    %270 = arith.addf %267, %269 : vector<4x128xf32>
    %cst_146 = arith.constant 0.000000e+00 : f32
    %271 = vector.broadcast %cst_146 : f32 to vector<4x128xf32>
    %272 = arith.maximumf %270, %271 : vector<4x128xf32>
    %c1_147 = arith.constant 1 : index
    %c0_148 = arith.constant 0 : index
    %273 = vector.load %arg20[%c1_147, %c0_148] : memref<6x128xf32, #tpu.memory_space<vmem>>, vector<4x128xf32>
    tpu.vector_store %arg20[%c1_147, %c0_148], %272 {strides = array<i32>} : memref<6x128xf32, #tpu.memory_space<vmem>>, vector<4x128xf32>,
    %c0_149 = arith.constant 0 : index
    %c0_150 = arith.constant 0 : index
    %274 = vector.load %arg20[%c0_149, %c0_150] : memref<6x128xf32, #tpu.memory_space<vmem>>, vector<4x128xf32>
    %275 = arith.truncf %274 : vector<4x128xf32> to vector<4x128xbf16>
    %c0_151 = arith.constant 0 : index
    %c0_152 = arith.constant 0 : index
    %c0_153 = arith.constant 0 : index
    %276 = vector.load %arg8[%c0_151, %c0_152, %c0_153] : memref<3x128x128xbf16, #tpu.memory_space<vmem>>, vector<1x128x128xbf16>
    %277 = vector.shape_cast %276 : vector<1x128x128xbf16> to vector<128x128xbf16>
    %cst_154 = arith.constant dense<0.000000e+00> : vector<4x128xf32>
    %278 = tpu.matmul %275, %277, %cst_154 {dimension_numbers = #tpu.dot_dimension_numbers<[1], [0], [0], [1], [0, 0, 1, 1], [], []>} : vector<4x128xbf16>, vector<128x128xbf16>, vector<4x128xf32> -> vector<4x128xf32>
    %c1_155 = arith.constant 1 : index
    %c0_156 = arith.constant 0 : index
    %279 = vector.load %arg20[%c1_155, %c0_156] : memref<6x128xf32, #tpu.memory_space<vmem>>, vector<4x128xf32>
    %280 = arith.truncf %279 : vector<4x128xf32> to vector<4x128xbf16>
    %c1_157 = arith.constant 1 : index
    %c0_158 = arith.constant 0 : index
    %c0_159 = arith.constant 0 : index
    %281 = vector.load %arg8[%c1_157, %c0_158, %c0_159] : memref<3x128x128xbf16, #tpu.memory_space<vmem>>, vector<1x128x128xbf16>
    %282 = vector.shape_cast %281 : vector<1x128x128xbf16> to vector<128x128xbf16>
    %cst_160 = arith.constant dense<0.000000e+00> : vector<4x128xf32>
    %283 = tpu.matmul %280, %282, %cst_160 {dimension_numbers = #tpu.dot_dimension_numbers<[1], [0], [0], [1], [0, 0, 1, 1], [], []>} : vector<4x128xbf16>, vector<128x128xbf16>, vector<4x128xf32> -> vector<4x128xf32>
    %284 = arith.addf %278, %283 : vector<4x128xf32>
    %c2_161 = arith.constant 2 : index
    %c0_162 = arith.constant 0 : index
    %285 = vector.load %arg20[%c2_161, %c0_162] : memref<6x128xf32, #tpu.memory_space<vmem>>, vector<4x128xf32>
    %286 = arith.truncf %285 : vector<4x128xf32> to vector<4x128xbf16>
    %c2_163 = arith.constant 2 : index
    %c0_164 = arith.constant 0 : index
    %c0_165 = arith.constant 0 : index
    %287 = vector.load %arg8[%c2_163, %c0_164, %c0_165] : memref<3x128x128xbf16, #tpu.memory_space<vmem>>, vector<1x128x128xbf16>
    %288 = vector.shape_cast %287 : vector<1x128x128xbf16> to vector<128x128xbf16>
    %cst_166 = arith.constant dense<0.000000e+00> : vector<4x128xf32>
    %289 = tpu.matmul %286, %288, %cst_166 {dimension_numbers = #tpu.dot_dimension_numbers<[1], [0], [0], [1], [0, 0, 1, 1], [], []>} : vector<4x128xbf16>, vector<128x128xbf16>, vector<4x128xf32> -> vector<4x128xf32>
    %290 = arith.addf %284, %289 : vector<4x128xf32>
    %c0_167 = arith.constant 0 : index
    %c0_168 = arith.constant 0 : index
    %291 = vector.load %arg9[%c0_167, %c0_168] : memref<1x128xf32, #tpu.memory_space<vmem>>, vector<1x128xf32>
    %292 = vector.broadcast %291 : vector<1x128xf32> to vector<4x128xf32>
    %293 = arith.addf %290, %292 : vector<4x128xf32>
    %cst_169 = arith.constant 0.000000e+00 : f32
    %294 = vector.broadcast %cst_169 : f32 to vector<4x128xf32>
    %295 = arith.maximumf %293, %294 : vector<4x128xf32>
    %c0_170 = arith.constant 0 : index
    %c0_171 = arith.constant 0 : index
    %296 = vector.load %arg11[%c0_170, %c0_171] : memref<1x128xf32, #tpu.memory_space<vmem>>, vector<1x128xf32>
    %297 = vector.extract_strided_slice %295 {offsets = [0, 0], sizes = [1, 128], strides = [1, 1]} : vector<4x128xf32> to vector<1x128xf32>
    %298 = arith.truncf %297 : vector<1x128xf32> to vector<1x128xbf16>
    %c0_172 = arith.constant 0 : index
    %c0_173 = arith.constant 0 : index
    %299 = vector.load %arg10[%c0_172, %c0_173] : memref<512x128xbf16, #tpu.memory_space<vmem>>, vector<128x128xbf16>
    %cst_174 = arith.constant dense<0.000000e+00> : vector<1x128xf32>
    %300 = tpu.matmul %298, %299, %cst_174 {dimension_numbers = #tpu.dot_dimension_numbers<[1], [0], [0], [1], [0, 0, 1, 1], [], []>} : vector<1x128xbf16>, vector<128x128xbf16>, vector<1x128xf32> -> vector<1x128xf32>
    %301 = arith.addf %296, %300 : vector<1x128xf32>
    %302 = vector.extract_strided_slice %295 {offsets = [1, 0], sizes = [1, 128], strides = [1, 1]} : vector<4x128xf32> to vector<1x128xf32>
    %303 = arith.truncf %302 : vector<1x128xf32> to vector<1x128xbf16>
    %c128_175 = arith.constant 128 : index
    %c0_176 = arith.constant 0 : index
    %304 = vector.load %arg10[%c128_175, %c0_176] : memref<512x128xbf16, #tpu.memory_space<vmem>>, vector<128x128xbf16>
    %cst_177 = arith.constant dense<0.000000e+00> : vector<1x128xf32>
    %305 = tpu.matmul %303, %304, %cst_177 {dimension_numbers = #tpu.dot_dimension_numbers<[1], [0], [0], [1], [0, 0, 1, 1], [], []>} : vector<1x128xbf16>, vector<128x128xbf16>, vector<1x128xf32> -> vector<1x128xf32>
    %306 = arith.addf %301, %305 : vector<1x128xf32>
    %307 = vector.extract_strided_slice %295 {offsets = [2, 0], sizes = [1, 128], strides = [1, 1]} : vector<4x128xf32> to vector<1x128xf32>
    %308 = arith.truncf %307 : vector<1x128xf32> to vector<1x128xbf16>
    %c256 = arith.constant 256 : index
    %c0_178 = arith.constant 0 : index
    %309 = vector.load %arg10[%c256, %c0_178] : memref<512x128xbf16, #tpu.memory_space<vmem>>, vector<128x128xbf16>
    %cst_179 = arith.constant dense<0.000000e+00> : vector<1x128xf32>
    %310 = tpu.matmul %308, %309, %cst_179 {dimension_numbers = #tpu.dot_dimension_numbers<[1], [0], [0], [1], [0, 0, 1, 1], [], []>} : vector<1x128xbf16>, vector<128x128xbf16>, vector<1x128xf32> -> vector<1x128xf32>
    %311 = arith.addf %306, %310 : vector<1x128xf32>
    %312 = vector.extract_strided_slice %295 {offsets = [3, 0], sizes = [1, 128], strides = [1, 1]} : vector<4x128xf32> to vector<1x128xf32>
    %313 = arith.truncf %312 : vector<1x128xf32> to vector<1x128xbf16>
    %c384 = arith.constant 384 : index
    %c0_180 = arith.constant 0 : index
    %314 = vector.load %arg10[%c384, %c0_180] : memref<512x128xbf16, #tpu.memory_space<vmem>>, vector<128x128xbf16>
    %cst_181 = arith.constant dense<0.000000e+00> : vector<1x128xf32>
    %315 = tpu.matmul %313, %314, %cst_181 {dimension_numbers = #tpu.dot_dimension_numbers<[1], [0], [0], [1], [0, 0, 1, 1], [], []>} : vector<1x128xbf16>, vector<128x128xbf16>, vector<1x128xf32> -> vector<1x128xf32>
    %316 = arith.addf %311, %315 : vector<1x128xf32>
    %cst_182 = arith.constant 0.000000e+00 : f32
    %317 = vector.broadcast %cst_182 : f32 to vector<1x128xf32>
    %318 = arith.maximumf %316, %317 : vector<1x128xf32>
    %c0_183 = arith.constant 0 : index
    %c0_184 = arith.constant 0 : index
    %319 = vector.load %arg12[%c0_183, %c0_184] : memref<1x128xf32, #tpu.memory_space<vmem>>, vector<1x128xf32>
    %320 = arith.mulf %318, %319 : vector<1x128xf32>
    %c0_185 = arith.constant 0 : index
    %c0_186 = arith.constant 0 : index
    %321 = vector.load %arg13[%c0_185, %c0_186] : memref<1x128xf32, #tpu.memory_space<vmem>>, vector<1x128xf32>
    %322 = arith.addf %320, %321 : vector<1x128xf32>
    %323 = arith.truncf %322 : vector<1x128xf32> to vector<1x128xbf16>
    %c0_187 = arith.constant 0 : index
    %c0_188 = arith.constant 0 : index
    %324 = vector.load %arg14[%c0_187, %c0_188] : memref<128x64xbf16, #tpu.memory_space<vmem>>, vector<128x64xbf16>
    %cst_189 = arith.constant dense<0.000000e+00> : vector<1x64xf32>
    %325 = tpu.matmul %323, %324, %cst_189 {dimension_numbers = #tpu.dot_dimension_numbers<[1], [0], [0], [1], [0, 0, 1, 1], [], []>} : vector<1x128xbf16>, vector<128x64xbf16>, vector<1x64xf32> -> vector<1x64xf32>
    %c0_190 = arith.constant 0 : index
    %c0_191 = arith.constant 0 : index
    %326 = vector.load %arg15[%c0_190, %c0_191] : memref<1x64xf32, #tpu.memory_space<vmem>>, vector<1x64xf32>
    %327 = arith.addf %325, %326 : vector<1x64xf32>
    %328 = arith.mulf %327, %327 : vector<1x64xf32>
    %cst_192 = arith.constant dense<0.000000e+00> : vector<1xf32>
    %329 = vector.multi_reduction <add>, %328, %cst_192 [1] : vector<1x64xf32> to vector<1xf32>
    %330 = vector.shape_cast %329 : vector<1xf32> to vector<1x1xf32>
    %331 = math.sqrt %330 : vector<1x1xf32>
    %cst_193 = arith.constant 9.99999996E-13 : f32
    %332 = vector.broadcast %cst_193 : f32 to vector<1x1xf32>
    %333 = arith.maximumf %331, %332 : vector<1x1xf32>
    %334 = vector.broadcast %333 : vector<1x1xf32> to vector<1x64xf32>
    %335 = arith.divf %327, %334 : vector<1x64xf32>
    %c0_194 = arith.constant 0 : index
    %c0_195 = arith.constant 0 : index
    %c0_196 = arith.constant 0 : index
    %336 = vector.load %arg16[%c0_194, %c0_195, %c0_196] : memref<1x1x64xf32, #tpu.memory_space<vmem>>, vector<1x1x64xf32>
    %337 = vector.shape_cast %336 : vector<1x1x64xf32> to vector<1x64xf32>
    %338 = vector.shape_cast %335 : vector<1x64xf32> to vector<1x1x64xf32>
    tpu.vector_store %arg16[%c0_194, %c0_195, %c0_196], %338 {strides = array<i32>} : memref<1x1x64xf32, #tpu.memory_space<vmem>>, vector<1x1x64xf32>,
    return
  }
  func.func @transform_0(%arg0: i32) -> (i32, i32, i32) {
    %c0_i32 = arith.constant 0 : i32
    %c0_i32_0 = arith.constant 0 : i32
    %c0_i32_1 = arith.constant 0 : i32
    return %arg0, %c0_i32, %c0_i32_0 : i32, i32, i32
  }
  func.func @transform_1(%arg0: i32) -> (i32, i32, i32) {
    %c0_i32 = arith.constant 0 : i32
    %c0_i32_0 = arith.constant 0 : i32
    %c0_i32_1 = arith.constant 0 : i32
    %c0_i32_2 = arith.constant 0 : i32
    return %c0_i32, %c0_i32_0, %c0_i32_1 : i32, i32, i32
  }
  func.func @transform_2(%arg0: i32) -> (i32, i32) {
    %c0_i32 = arith.constant 0 : i32
    %c0_i32_0 = arith.constant 0 : i32
    %c0_i32_1 = arith.constant 0 : i32
    return %c0_i32, %c0_i32_0 : i32, i32
  }
  func.func @transform_3(%arg0: i32) -> (i32, i32, i32) {
    %c0_i32 = arith.constant 0 : i32
    %c0_i32_0 = arith.constant 0 : i32
    %c0_i32_1 = arith.constant 0 : i32
    %c0_i32_2 = arith.constant 0 : i32
    return %c0_i32, %c0_i32_0, %c0_i32_1 : i32, i32, i32
  }
  func.func @transform_4(%arg0: i32) -> (i32, i32) {
    %c0_i32 = arith.constant 0 : i32
    %c0_i32_0 = arith.constant 0 : i32
    %c0_i32_1 = arith.constant 0 : i32
    return %c0_i32, %c0_i32_0 : i32, i32
  }
  func.func @transform_5(%arg0: i32) -> (i32, i32, i32) {
    %c0_i32 = arith.constant 0 : i32
    %c0_i32_0 = arith.constant 0 : i32
    %c0_i32_1 = arith.constant 0 : i32
    %c0_i32_2 = arith.constant 0 : i32
    return %c0_i32, %c0_i32_0, %c0_i32_1 : i32, i32, i32
  }
  func.func @transform_6(%arg0: i32) -> (i32, i32) {
    %c0_i32 = arith.constant 0 : i32
    %c0_i32_0 = arith.constant 0 : i32
    %c0_i32_1 = arith.constant 0 : i32
    return %c0_i32, %c0_i32_0 : i32, i32
  }
  func.func @transform_7(%arg0: i32) -> (i32, i32, i32) {
    %c0_i32 = arith.constant 0 : i32
    %c0_i32_0 = arith.constant 0 : i32
    %c0_i32_1 = arith.constant 0 : i32
    %c0_i32_2 = arith.constant 0 : i32
    return %c0_i32, %c0_i32_0, %c0_i32_1 : i32, i32, i32
  }
  func.func @transform_8(%arg0: i32) -> (i32, i32) {
    %c0_i32 = arith.constant 0 : i32
    %c0_i32_0 = arith.constant 0 : i32
    %c0_i32_1 = arith.constant 0 : i32
    return %c0_i32, %c0_i32_0 : i32, i32
  }
  func.func @transform_9(%arg0: i32) -> (i32, i32) {
    %c0_i32 = arith.constant 0 : i32
    %c0_i32_0 = arith.constant 0 : i32
    %c0_i32_1 = arith.constant 0 : i32
    return %c0_i32, %c0_i32_0 : i32, i32
  }
  func.func @transform_10(%arg0: i32) -> (i32, i32) {
    %c0_i32 = arith.constant 0 : i32
    %c0_i32_0 = arith.constant 0 : i32
    %c0_i32_1 = arith.constant 0 : i32
    return %c0_i32, %c0_i32_0 : i32, i32
  }
  func.func @transform_11(%arg0: i32) -> (i32, i32) {
    %c0_i32 = arith.constant 0 : i32
    %c0_i32_0 = arith.constant 0 : i32
    %c0_i32_1 = arith.constant 0 : i32
    return %c0_i32, %c0_i32_0 : i32, i32
  }
  func.func @transform_12(%arg0: i32) -> (i32, i32) {
    %c0_i32 = arith.constant 0 : i32
    %c0_i32_0 = arith.constant 0 : i32
    %c0_i32_1 = arith.constant 0 : i32
    return %c0_i32, %c0_i32_0 : i32, i32
  }
  func.func @transform_13(%arg0: i32) -> (i32, i32) {
    %c0_i32 = arith.constant 0 : i32
    %c0_i32_0 = arith.constant 0 : i32
    %c0_i32_1 = arith.constant 0 : i32
    return %c0_i32, %c0_i32_0 : i32, i32
  }
  func.func @transform_14(%arg0: i32) -> (i32, i32) {
    %c0_i32 = arith.constant 0 : i32
    %c0_i32_0 = arith.constant 0 : i32
    %c0_i32_1 = arith.constant 0 : i32
    return %c0_i32, %c0_i32_0 : i32, i32
  }
  func.func @transform_15(%arg0: i32) -> (i32, i32, i32) {
    %c0_i32 = arith.constant 0 : i32
    %c0_i32_0 = arith.constant 0 : i32
    %c0_i32_1 = arith.constant 0 : i32
    return %arg0, %c0_i32, %c0_i32_0 : i32, i32, i32
  }
}

</mosaic_0001>

<llo_original>
// kernel: convnet_forward.1
$region0: #{convnet_forward.1}
  #allocation0 [shape = 'u32[]', space=smem, size = 0x4, offset = 0x4, fixed_abs, tag = 'smem constant byte address 0x4 - core index']
  #allocation1 [shape = 'u32[72,128]{1,0:T(1,128)}', space=vmem, size = 0x9000, scoped, tag = 'internal scratch']
  #allocation2 [shape = 'f32[18,16]{1,0:T(8,128)}', space=vmem, size = 0x3000, scoped, tag = 'scratch operand']
  #allocation3 [shape = 'f32[10,256]{1,0:T(8,128)}', space=vmem, size = 0x4000, scoped, tag = 'scratch operand']
  #allocation4 [shape = 'f32[6,128]{1,0:T(8,128)}', space=vmem, size = 0x1000, scoped, tag = 'scratch operand']
  #allocation5 [shape = 'f32[6,128]{1,0:T(8,128)}', space=vmem, size = 0x1000, scoped, tag = 'scratch operand']
  %s0 = inlined_call_operand.vmem [shape: f32[2,16,8], index: 0, kind: input, shape index: {}]
  %s1 = inlined_call_operand.vmem [shape: bf16[3,16,512], index: 1, kind: input, shape index: {}]
  %s2 = inlined_call_operand.vmem [shape: f32[1,512], index: 2, kind: input, shape index: {}]
  %s3 = inlined_call_operand.hbm [shape: bf16[3,256,256], index: 3, kind: input, shape index: {}]
  %s4 = inlined_call_operand.vmem [shape: f32[1,256], index: 4, kind: input, shape index: {}]
  %s5 = inlined_call_operand.hbm [shape: bf16[3,128,128], index: 5, kind: input, shape index: {}]
  %s6 = inlined_call_operand.vmem [shape: f32[1,128], index: 6, kind: input, shape index: {}]
  %s7 = inlined_call_operand.hbm [shape: bf16[3,128,128], index: 7, kind: input, shape index: {}]
  %s8 = inlined_call_operand.vmem [shape: f32[1,128], index: 8, kind: input, shape index: {}]
  %s9 = inlined_call_operand.hbm [shape: bf16[512,128], index: 9, kind: input, shape index: {}]
  %s10 = inlined_call_operand.vmem [shape: f32[1,128], index: 10, kind: input, shape index: {}]
  %s11 = inlined_call_operand.vmem [shape: f32[1,128], index: 11, kind: input, shape index: {}]
  %s12 = inlined_call_operand.vmem [shape: f32[1,128], index: 12, kind: input, shape index: {}]
  %s13 = inlined_call_operand.vmem [shape: bf16[128,64], index: 13, kind: input, shape index: {}]
  %s14 = inlined_call_operand.vmem [shape: f32[1,64], index: 14, kind: input, shape index: {}]
  %s15 = inlined_call_operand.hbm [shape: f32[2,1,64], index: 15, kind: output, shape index: {}]
  %s16 = sld [smem:[#allocation0]]
  $region109: #{convnet_forward.1} parent=0
    _
  %s18 = ssub.s32 1, %s16
  %s19 = scalar_select 0, %s18, %s16
  $region1: #{convnet_forward.1} parent=0
    #allocation6 [shape = 'u8[393216]{0}', space=vmem, size = 0x60000, scoped, tag = 'input window, operand 3, single buffered']
    #allocation7 [shape = 's32[2]{0}', space=sflag, size = 0x8, scoped, tag = 'scoped memory for convnet_forward.1']
    #allocation8 [shape = 's32[2]{0}', space=sflag, size = 0x8, scoped, tag = 'scoped memory for convnet_forward.1']
    #allocation9 [shape = 'u8[98304]{0}', space=vmem, size = 0x18000, scoped, tag = 'input window, operand 5, single buffered']
    #allocation10 [shape = 's32[1]{0}', space=sflag, size = 0x4, scoped, tag = 'scoped memory for convnet_forward.1']
    #allocation11 [shape = 'u8[98304]{0}', space=vmem, size = 0x18000, scoped, tag = 'input window, operand 7, single buffered']
    #allocation12 [shape = 'u8[131072]{0}', space=vmem, size = 0x20000, scoped, tag = 'input window, operand 9, single buffered']
    #allocation13 [shape = 's32[1]{0}', space=sflag, size = 0x4, scoped, tag = 'scoped memory for convnet_forward.1']
    #allocation14 [shape = 'u8[1024]{0}', space=vmem, size = 0x400, scoped, tag = 'output window, operand 0']
    %20 = vsyncpa [#allocation7], 0
    %21 = vsyncpa [#allocation10], 0
    %22 = vsyncpa [#allocation13], 0
    %23 = vsyncpa [#allocation8], 0
    %s24 = scalar_lea.sflag [#allocation8], 1
    %25 = vsyncpa %s24, 0
    loop: start=0, step=1, limit=4
    $region2: #{convnet_forward.1} parent=1 // loop_pre_header
      _
    $region3: #{convnet_forward.1} parent=1 // loop_header
      %s27 = sphi 0, %s31
      %p28 = scmp.ge.s32.totalorder %s27, 4
      %s37 = sphi 0, %s39
      %s40 = sphi 0, %s37
      %s41 = sphi 0, %s40
      %s57 = sphi 0, %s41
      %s61 = sphi 0, %s61
      %s63 = sphi 0, %s61
      %s64 = sphi 0, %s63
      %s78 = sphi 0, %s64
      %s82 = sphi 0, %s82
      %s84 = sphi 0, %s82
      %s85 = sphi 0, %s84
      %s99 = sphi 0, %s85
      %s103 = sphi 0, %s103
      %s105 = sphi 0, %s103
      %s106 = sphi 0, %s105
      %s120 = sphi 0, %s106
      %s124 = sphi 0, %s124
      %s126 = sphi 0, %s124
      %s127 = sphi 0, %s126
      %s141 = sphi 0, %s127
      %s145 = sphi 0, %s145
      %s147 = sphi 0, %s145
      %s148 = sphi 0, %s147
      %s162 = sphi 0, %s148
      %s166 = sphi 0, %s166
      %s168 = sphi 0, %s166
      %s169 = sphi 0, %s168
      %s183 = sphi 0, %s169
      %s187 = sphi 0, %s187
      %s189 = sphi 0, %s187
      %s190 = sphi 0, %s189
      %s204 = sphi 0, %s190
      %s208 = sphi 0, %s208
      %s210 = sphi 0, %s208
      %s211 = sphi 0, %s210
      %s225 = sphi 0, %s211
      %s229 = sphi 0, %s229
      %s231 = sphi 0, %s229
      %s232 = sphi 0, %s231
      %s246 = sphi 0, %s232
      %s250 = sphi 0, %s250
      %s252 = sphi 0, %s250
      %s253 = sphi 0, %s252
      %s267 = sphi 0, %s253
      %s271 = sphi 0, %s271
      %s273 = sphi 0, %s271
      %s274 = sphi 0, %s273
      %s288 = sphi 0, %s274
      %s292 = sphi 0, %s292
      %s294 = sphi 0, %s292
      %s295 = sphi 0, %s294
      %s309 = sphi 0, %s295
      %s313 = sphi 0, %s313
      %s315 = sphi 0, %s313
      %s316 = sphi 0, %s315
      %s330 = sphi 0, %s316
      %s334 = sphi 0, %s334
      %s336 = sphi 0, %s334
      %s337 = sphi 0, %s336
      %s351 = sphi 0, %s337
      %s357 = sphi 0, %s359
      %s360 = sphi 0, %s357
      %s361 = sphi 0, %s360
      %s377 = sphi 0, %s361
    $region4: #{convnet_forward.1} parent=1 // loop_header_branch
      %30 = sbr.rel (%p28) target = $region8
    $region5: #{convnet_forward.1} parent=1 // loop_body
      %s32 = ssub.s32 %s27, 1
      %s33 = ssub.s32 %s27, 2
      %s34 = sadd.s32 %s27, 1
      %s35 = ssub.s32 %s27, %s34
      %p36 = scmp.eq.s32.totalorder %s35, 0
      %s38 = sadd.s32 %s37, 1
      %s39 = scalar_select %p36, %s37, %s38
      %p42 = pneg %p36
      %p43 = scmp.eq.s32.totalorder %s27, 1
      %p44 = por %p42, %p43
      %p45 = scmp.ne.s32.totalorder %s37, %s40
      %p46 = scmp.eq.s32.totalorder %s27, 0
      %p47 = por %p45, %p46
      %p48 = scmp.ne.s32.totalorder %s37, %s40
      %p49 = scmp.eq.s32.totalorder %s32, 1
      %p50 = por %p48, %p49
      %p51 = scmp.ne.s32.totalorder %s40, %s41
      %p52 = scmp.eq.s32.totalorder %s32, 0
      %p53 = por %p51, %p52
      %p54 = scmp.ne.s32.totalorder %s40, %s41
      %p55 = scmp.eq.s32.totalorder %s33, 1
      %p56 = por %p54, %p55
      %p58 = scmp.ne.s32.totalorder %s41, %s57
      %p59 = scmp.eq.s32.totalorder %s33, 0
      %p60 = por %p58, %p59
      %s62 = sadd.s32 %s61, 1
      %p65 = scmp.eq.s32.totalorder %s27, 1
      %p66 = scmp.ne.s32.totalorder %s61, %s63
      %p67 = scmp.eq.s32.totalorder %s27, 0
      %p68 = por %p66, %p67
      %p69 = scmp.ne.s32.totalorder %s61, %s63
      %p70 = scmp.eq.s32.totalorder %s32, 1
      %p71 = por %p69, %p70
      %p72 = scmp.ne.s32.totalorder %s63, %s64
      %p73 = scmp.eq.s32.totalorder %s32, 0
      %p74 = por %p72, %p73
      %p75 = scmp.ne.s32.totalorder %s63, %s64
      %p76 = scmp.eq.s32.totalorder %s33, 1
      %p77 = por %p75, %p76
      %p79 = scmp.ne.s32.totalorder %s64, %s78
      %p80 = scmp.eq.s32.totalorder %s33, 0
      %p81 = por %p79, %p80
      %s83 = sadd.s32 %s82, 1
      %p86 = scmp.eq.s32.totalorder %s27, 1
      %p87 = scmp.ne.s32.totalorder %s82, %s84
      %p88 = scmp.eq.s32.totalorder %s27, 0
      %p89 = por %p87, %p88
      %p90 = scmp.ne.s32.totalorder %s82, %s84
      %p91 = scmp.eq.s32.totalorder %s32, 1
      %p92 = por %p90, %p91
      %p93 = scmp.ne.s32.totalorder %s84, %s85
      %p94 = scmp.eq.s32.totalorder %s32, 0
      %p95 = por %p93, %p94
      %p96 = scmp.ne.s32.totalorder %s84, %s85
      %p97 = scmp.eq.s32.totalorder %s33, 1
      %p98 = por %p96, %p97
      %p100 = scmp.ne.s32.totalorder %s85, %s99
      %p101 = scmp.eq.s32.totalorder %s33, 0
      %p102 = por %p100, %p101
      %s104 = sadd.s32 %s103, 1
      %p107 = scmp.eq.s32.totalorder %s27, 1
      %p108 = scmp.ne.s32.totalorder %s103, %s105
      %p109 = scmp.eq.s32.totalorder %s27, 0
      %p110 = por %p108, %p109
      %p111 = scmp.ne.s32.totalorder %s103, %s105
      %p112 = scmp.eq.s32.totalorder %s32, 1
      %p113 = por %p111, %p112
      %p114 = scmp.ne.s32.totalorder %s105, %s106
      %p115 = scmp.eq.s32.totalorder %s32, 0
      %p116 = por %p114, %p115
      %p117 = scmp.ne.s32.totalorder %s105, %s106
      %p118 = scmp.eq.s32.totalorder %s33, 1
      %p119 = por %p117, %p118
      %p121 = scmp.ne.s32.totalorder %s106, %s120
      %p122 = scmp.eq.s32.totalorder %s33, 0
      %p123 = por %p121, %p122
      %s125 = sadd.s32 %s124, 1
      %p128 = scmp.eq.s32.totalorder %s27, 1
      %p129 = scmp.ne.s32.totalorder %s124, %s126
      %p130 = scmp.eq.s32.totalorder %s27, 0
      %p131 = por %p129, %p130
      %p132 = scmp.ne.s32.totalorder %s124, %s126
      %p133 = scmp.eq.s32.totalorder %s32, 1
      %p134 = por %p132, %p133
      %p135 = scmp.ne.s32.totalorder %s126, %s127
      %p136 = scmp.eq.s32.totalorder %s32, 0
      %p137 = por %p135, %p136
      %p138 = scmp.ne.s32.totalorder %s126, %s127
      %p139 = scmp.eq.s32.totalorder %s33, 1
      %p140 = por %p138, %p139
      %p142 = scmp.ne.s32.totalorder %s127, %s141
      %p143 = scmp.eq.s32.totalorder %s33, 0
      %p144 = por %p142, %p143
      %s146 = sadd.s32 %s145, 1
      %p149 = scmp.eq.s32.totalorder %s27, 1
      %p150 = scmp.ne.s32.totalorder %s145, %s147
      %p151 = scmp.eq.s32.totalorder %s27, 0
      %p152 = por %p150, %p151
      %p153 = scmp.ne.s32.totalorder %s145, %s147
      %p154 = scmp.eq.s32.totalorder %s32, 1
      %p155 = por %p153, %p154
      %p156 = scmp.ne.s32.totalorder %s147, %s148
      %p157 = scmp.eq.s32.totalorder %s32, 0
      %p158 = por %p156, %p157
      %p159 = scmp.ne.s32.totalorder %s147, %s148
      %p160 = scmp.eq.s32.totalorder %s33, 1
      %p161 = por %p159, %p160
      %p163 = scmp.ne.s32.totalorder %s148, %s162
      %p164 = scmp.eq.s32.totalorder %s33, 0
      %p165 = por %p163, %p164
      %s167 = sadd.s32 %s166, 1
      %p170 = scmp.eq.s32.totalorder %s27, 1
      %p171 = scmp.ne.s32.totalorder %s166, %s168
      %p172 = scmp.eq.s32.totalorder %s27, 0
      %p173 = por %p171, %p172
      %p174 = scmp.ne.s32.totalorder %s166, %s168
      %p175 = scmp.eq.s32.totalorder %s32, 1
      %p176 = por %p174, %p175
      %p177 = scmp.ne.s32.totalorder %s168, %s169
      %p178 = scmp.eq.s32.totalorder %s32, 0
      %p179 = por %p177, %p178
      %p180 = scmp.ne.s32.totalorder %s168, %s169
      %p181 = scmp.eq.s32.totalorder %s33, 1
      %p182 = por %p180, %p181
      %p184 = scmp.ne.s32.totalorder %s169, %s183
      %p185 = scmp.eq.s32.totalorder %s33, 0
      %p186 = por %p184, %p185
      %s188 = sadd.s32 %s187, 1
      %p191 = scmp.eq.s32.totalorder %s27, 1
      %p192 = scmp.ne.s32.totalorder %s187, %s189
      %p193 = scmp.eq.s32.totalorder %s27, 0
      %p194 = por %p192, %p193
      %p195 = scmp.ne.s32.totalorder %s187, %s189
      %p196 = scmp.eq.s32.totalorder %s32, 1
      %p197 = por %p195, %p196
      %p198 = scmp.ne.s32.totalorder %s189, %s190
      %p199 = scmp.eq.s32.totalorder %s32, 0
      %p200 = por %p198, %p199
      %p201 = scmp.ne.s32.totalorder %s189, %s190
      %p202 = scmp.eq.s32.totalorder %s33, 1
      %p203 = por %p201, %p202
      %p205 = scmp.ne.s32.totalorder %s190, %s204
      %p206 = scmp.eq.s32.totalorder %s33, 0
      %p207 = por %p205, %p206
      %s209 = sadd.s32 %s208, 1
      %p212 = scmp.eq.s32.totalorder %s27, 1
      %p213 = scmp.ne.s32.totalorder %s208, %s210
      %p214 = scmp.eq.s32.totalorder %s27, 0
      %p215 = por %p213, %p214
      %p216 = scmp.ne.s32.totalorder %s208, %s210
      %p217 = scmp.eq.s32.totalorder %s32, 1
      %p218 = por %p216, %p217
      %p219 = scmp.ne.s32.totalorder %s210, %s211
      %p220 = scmp.eq.s32.totalorder %s32, 0
      %p221 = por %p219, %p220
      %p222 = scmp.ne.s32.totalorder %s210, %s211
      %p223 = scmp.eq.s32.totalorder %s33, 1
      %p224 = por %p222, %p223
      %p226 = scmp.ne.s32.totalorder %s211, %s225
      %p227 = scmp.eq.s32.totalorder %s33, 0
      %p228 = por %p226, %p227
      %s230 = sadd.s32 %s229, 1
      %p233 = scmp.eq.s32.totalorder %s27, 1
      %p234 = scmp.ne.s32.totalorder %s229, %s231
      %p235 = scmp.eq.s32.totalorder %s27, 0
      %p236 = por %p234, %p235
      %p237 = scmp.ne.s32.totalorder %s229, %s231
      %p238 = scmp.eq.s32.totalorder %s32, 1
      %p239 = por %p237, %p238
      %p240 = scmp.ne.s32.totalorder %s231, %s232
      %p241 = scmp.eq.s32.totalorder %s32, 0
      %p242 = por %p240, %p241
      %p243 = scmp.ne.s32.totalorder %s231, %s232
      %p244 = scmp.eq.s32.totalorder %s33, 1
      %p245 = por %p243, %p244
      %p247 = scmp.ne.s32.totalorder %s232, %s246
      %p248 = scmp.eq.s32.totalorder %s33, 0
      %p249 = por %p247, %p248
      %s251 = sadd.s32 %s250, 1
      %p254 = scmp.eq.s32.totalorder %s27, 1
      %p255 = scmp.ne.s32.totalorder %s250, %s252
      %p256 = scmp.eq.s32.totalorder %s27, 0
      %p257 = por %p255, %p256
      %p258 = scmp.ne.s32.totalorder %s250, %s252
      %p259 = scmp.eq.s32.totalorder %s32, 1
      %p260 = por %p258, %p259
      %p261 = scmp.ne.s32.totalorder %s252, %s253
      %p262 = scmp.eq.s32.totalorder %s32, 0
      %p263 = por %p261, %p262
      %p264 = scmp.ne.s32.totalorder %s252, %s253
      %p265 = scmp.eq.s32.totalorder %s33, 1
      %p266 = por %p264, %p265
      %p268 = scmp.ne.s32.totalorder %s253, %s267
      %p269 = scmp.eq.s32.totalorder %s33, 0
      %p270 = por %p268, %p269
      %s272 = sadd.s32 %s271, 1
      %p275 = scmp.eq.s32.totalorder %s27, 1
      %p276 = scmp.ne.s32.totalorder %s271, %s273
      %p277 = scmp.eq.s32.totalorder %s27, 0
      %p278 = por %p276, %p277
      %p279 = scmp.ne.s32.totalorder %s271, %s273
      %p280 = scmp.eq.s32.totalorder %s32, 1
      %p281 = por %p279, %p280
      %p282 = scmp.ne.s32.totalorder %s273, %s274
      %p283 = scmp.eq.s32.totalorder %s32, 0
      %p284 = por %p282, %p283
      %p285 = scmp.ne.s32.totalorder %s273, %s274
      %p286 = scmp.eq.s32.totalorder %s33, 1
      %p287 = por %p285, %p286
      %p289 = scmp.ne.s32.totalorder %s274, %s288
      %p290 = scmp.eq.s32.totalorder %s33, 0
      %p291 = por %p289, %p290
      %s293 = sadd.s32 %s292, 1
      %p296 = scmp.eq.s32.totalorder %s27, 1
      %p297 = scmp.ne.s32.totalorder %s292, %s294
      %p298 = scmp.eq.s32.totalorder %s27, 0
      %p299 = por %p297, %p298
      %p300 = scmp.ne.s32.totalorder %s292, %s294
      %p301 = scmp.eq.s32.totalorder %s32, 1
      %p302 = por %p300, %p301
      %p303 = scmp.ne.s32.totalorder %s294, %s295
      %p304 = scmp.eq.s32.totalorder %s32, 0
      %p305 = por %p303, %p304
      %p306 = scmp.ne.s32.totalorder %s294, %s295
      %p307 = scmp.eq.s32.totalorder %s33, 1
      %p308 = por %p306, %p307
      %p310 = scmp.ne.s32.totalorder %s295, %s309
      %p311 = scmp.eq.s32.totalorder %s33, 0
      %p312 = por %p310, %p311
      %s314 = sadd.s32 %s313, 1
      %p317 = scmp.eq.s32.totalorder %s27, 1
      %p318 = scmp.ne.s32.totalorder %s313, %s315
      %p319 = scmp.eq.s32.totalorder %s27, 0
      %p320 = por %p318, %p319
      %p321 = scmp.ne.s32.totalorder %s313, %s315
      %p322 = scmp.eq.s32.totalorder %s32, 1
      %p323 = por %p321, %p322
      %p324 = scmp.ne.s32.totalorder %s315, %s316
      %p325 = scmp.eq.s32.totalorder %s32, 0
      %p326 = por %p324, %p325
      %p327 = scmp.ne.s32.totalorder %s315, %s316
      %p328 = scmp.eq.s32.totalorder %s33, 1
      %p329 = por %p327, %p328
      %p331 = scmp.ne.s32.totalorder %s316, %s330
      %p332 = scmp.eq.s32.totalorder %s33, 0
      %p333 = por %p331, %p332
      %s335 = sadd.s32 %s334, 1
      %p338 = scmp.eq.s32.totalorder %s27, 1
      %p339 = scmp.ne.s32.totalorder %s334, %s336
      %p340 = scmp.eq.s32.totalorder %s27, 0
      %p341 = por %p339, %p340
      %p342 = scmp.ne.s32.totalorder %s334, %s336
      %p343 = scmp.eq.s32.totalorder %s32, 1
      %p344 = por %p342, %p343
      %p345 = scmp.ne.s32.totalorder %s336, %s337
      %p346 = scmp.eq.s32.totalorder %s32, 0
      %p347 = por %p345, %p346
      %p348 = scmp.ne.s32.totalorder %s336, %s337
      %p349 = scmp.eq.s32.totalorder %s33, 1
      %p350 = por %p348, %p349
      %p352 = scmp.ne.s32.totalorder %s337, %s351
      %p353 = scmp.eq.s32.totalorder %s33, 0
      %p354 = por %p352, %p353
      %s355 = ssub.s32 %s27, %s34
      %p356 = scmp.eq.s32.totalorder %s355, 0
      %s358 = sadd.s32 %s357, 1
      %s359 = scalar_select %p356, %s357, %s358
      %p362 = pneg %p356
      %p363 = scmp.eq.s32.totalorder %s27, 1
      %p364 = por %p362, %p363
      %p365 = scmp.ne.s32.totalorder %s357, %s360
      %p366 = scmp.eq.s32.totalorder %s27, 0
      %p367 = por %p365, %p366
      %p368 = scmp.ne.s32.totalorder %s357, %s360
      %p369 = scmp.eq.s32.totalorder %s32, 1
      %p370 = por %p368, %p369
      %p371 = scmp.ne.s32.totalorder %s360, %s361
      %p372 = scmp.eq.s32.totalorder %s32, 0
      %p373 = por %p371, %p372
      %p374 = scmp.ne.s32.totalorder %s360, %s361
      %p375 = scmp.eq.s32.totalorder %s33, 1
      %p376 = por %p374, %p375
      %p378 = scmp.ne.s32.totalorder %s361, %s377
      %p379 = scmp.eq.s32.totalorder %s33, 0
      %p380 = por %p378, %p379
      %p381 = scmp.le.s32.totalorder 1, %s27
      %p382 = scmp.lt.s32.totalorder %s27, 3
      %p383 = pnand %p381, %p382
      %p384 = pneg %p383
      // Predicated region
      $region9: #{convnet_forward.1} parent=5 // pred_check
        _
      $region10: #{convnet_forward.1} parent=5 // pred_check_branch
        %386 = sbr.rel (%p383) target = $region12
      $region11: #{convnet_forward.1} parent=5 // pred_region
        %s387 = ssub.s32 %s27, 1
        // Predicated region
        $region13: #{convnet_forward.1} parent=11 // pred_check
          %p388 = pneg %p74
        $region14: #{convnet_forward.1} parent=11 // pred_check_branch
          %390 = sbr.rel (%p388) target = $region16
        $region15: #{convnet_forward.1} parent=11 // pred_region
          _
        $region16: #{convnet_forward.1} parent=11 // pred_fallthru
          _
        // Predicated region
        $region17: #{convnet_forward.1} parent=11 // pred_check
          %p391 = pneg %p95
        $region18: #{convnet_forward.1} parent=11 // pred_check_branch
          %393 = sbr.rel (%p391) target = $region20
        $region19: #{convnet_forward.1} parent=11 // pred_region
          _
        $region20: #{convnet_forward.1} parent=11 // pred_fallthru
          _
        // Predicated region
        $region21: #{convnet_forward.1} parent=11 // pred_check
          %p394 = pneg %p116
        $region22: #{convnet_forward.1} parent=11 // pred_check_branch
          %396 = sbr.rel (%p394) target = $region24
        $region23: #{convnet_forward.1} parent=11 // pred_region
          %398 = vsyncadd [#allocation7], 0
          %s399 = sshll.u32 %s3, 4
          %s400 = int_to_ptr.hbm [resolvable:$true] %s399
          %s401 = sshll.u32 [#allocation6], 4
          %s402 = int_to_ptr.vmem [resolvable:$true] %s401
          %407 = dma.hbm_to_vmem [thread:$0]  %s400, 12288, %s402, [#allocation7], 128, 128, 8
        $region24: #{convnet_forward.1} parent=11 // pred_fallthru
          _
        // Predicated region
        $region25: #{convnet_forward.1} parent=11 // pred_check
          %p408 = pneg %p137
        $region26: #{convnet_forward.1} parent=11 // pred_check_branch
          %410 = sbr.rel (%p408) target = $region28
        $region27: #{convnet_forward.1} parent=11 // pred_region
          _
        $region28: #{convnet_forward.1} parent=11 // pred_fallthru
          _
        // Predicated region
        $region29: #{convnet_forward.1} parent=11 // pred_check
          %p411 = pneg %p158
        $region30: #{convnet_forward.1} parent=11 // pred_check_branch
          %413 = sbr.rel (%p411) target = $region32
        $region31: #{convnet_forward.1} parent=11 // pred_region
          %415 = vsyncadd [#allocation10], 0
          %s416 = sshll.u32 %s5, 4
          %s417 = int_to_ptr.hbm [resolvable:$true] %s416
          %s418 = sshll.u32 [#allocation9], 4
          %s419 = int_to_ptr.vmem [resolvable:$true] %s418
          %424 = dma.hbm_to_vmem [thread:$0]  %s417, 3072, %s419, [#allocation10], 64, 64, 4
        $region32: #{convnet_forward.1} parent=11 // pred_fallthru
          _
        // Predicated region
        $region33: #{convnet_forward.1} parent=11 // pred_check
          %p425 = pneg %p179
        $region34: #{convnet_forward.1} parent=11 // pred_check_branch
          %427 = sbr.rel (%p425) target = $region36
        $region35: #{convnet_forward.1} parent=11 // pred_region
          _
        $region36: #{convnet_forward.1} parent=11 // pred_fallthru
          _
        // Predicated region
        $region37: #{convnet_forward.1} parent=11 // pred_check
          %p428 = pneg %p200
        $region38: #{convnet_forward.1} parent=11 // pred_check_branch
          %430 = sbr.rel (%p428) target = $region40
        $region39: #{convnet_forward.1} parent=11 // pred_region
          %432 = vsyncadd [#allocation10], 0
          %s433 = sshll.u32 %s7, 4
          %s434 = int_to_ptr.hbm [resolvable:$true] %s433
          %s435 = sshll.u32 [#allocation11], 4
          %s436 = int_to_ptr.vmem [resolvable:$true] %s435
          %441 = dma.hbm_to_vmem [thread:$0]  %s434, 3072, %s436, [#allocation10], 64, 64, 4
        $region40: #{convnet_forward.1} parent=11 // pred_fallthru
          _
        // Predicated region
        $region41: #{convnet_forward.1} parent=11 // pred_check
          %p442 = pneg %p221
        $region42: #{convnet_forward.1} parent=11 // pred_check_branch
          %444 = sbr.rel (%p442) target = $region44
        $region43: #{convnet_forward.1} parent=11 // pred_region
          _
        $region44: #{convnet_forward.1} parent=11 // pred_fallthru
          _
        // Predicated region
        $region45: #{convnet_forward.1} parent=11 // pred_check
          %p445 = pneg %p242
        $region46: #{convnet_forward.1} parent=11 // pred_check_branch
          %447 = sbr.rel (%p445) target = $region48
        $region47: #{convnet_forward.1} parent=11 // pred_region
          %449 = vsyncadd [#allocation13], 0
          %s450 = sshll.u32 %s9, 4
          %s451 = int_to_ptr.hbm [resolvable:$true] %s450
          %s452 = sshll.u32 [#allocation12], 4
          %s453 = int_to_ptr.vmem [resolvable:$true] %s452
          %458 = dma.hbm_to_vmem [thread:$0]  %s451, 4096, %s453, [#allocation13], 64, 64, 4
        $region48: #{convnet_forward.1} parent=11 // pred_fallthru
          _
        // Predicated region
        $region49: #{convnet_forward.1} parent=11 // pred_check
          %p459 = pneg %p263
        $region50: #{convnet_forward.1} parent=11 // pred_check_branch
          %461 = sbr.rel (%p459) target = $region52
        $region51: #{convnet_forward.1} parent=11 // pred_region
          _
        $region52: #{convnet_forward.1} parent=11 // pred_fallthru
          _
        // Predicated region
        $region53: #{convnet_forward.1} parent=11 // pred_check
          %p462 = pneg %p284
        $region54: #{convnet_forward.1} parent=11 // pred_check_branch
          %464 = sbr.rel (%p462) target = $region56
        $region55: #{convnet_forward.1} parent=11 // pred_region
          _
        $region56: #{convnet_forward.1} parent=11 // pred_fallthru
          _
        // Predicated region
        $region57: #{convnet_forward.1} parent=11 // pred_check
          %p465 = pneg %p305
        $region58: #{convnet_forward.1} parent=11 // pred_check_branch
          %467 = sbr.rel (%p465) target = $region60
        $region59: #{convnet_forward.1} parent=11 // pred_region
          _
        $region60: #{convnet_forward.1} parent=11 // pred_fallthru
          _
        // Predicated region
        $region61: #{convnet_forward.1} parent=11 // pred_check
          %p468 = pneg %p326
        $region62: #{convnet_forward.1} parent=11 // pred_check_branch
          %470 = sbr.rel (%p468) target = $region64
        $region63: #{convnet_forward.1} parent=11 // pred_region
          _
        $region64: #{convnet_forward.1} parent=11 // pred_fallthru
          _
        // Predicated region
        $region65: #{convnet_forward.1} parent=11 // pred_check
          %p471 = pneg %p347
        $region66: #{convnet_forward.1} parent=11 // pred_check_branch
          %473 = sbr.rel (%p471) target = $region68
        $region67: #{convnet_forward.1} parent=11 // pred_region
          _
        $region68: #{convnet_forward.1} parent=11 // pred_fallthru
          _
      $region12: #{convnet_forward.1} parent=5 // pred_fallthru
        _
      %p474 = scmp.lt.s32.totalorder %s27, 2
      // Predicated region
      $region69: #{convnet_forward.1} parent=5 // pred_check
        %p475 = pneg %p474
      $region70: #{convnet_forward.1} parent=5 // pred_check_branch
        %477 = sbr.rel (%p475) target = $region72
      $region71: #{convnet_forward.1} parent=5 // pred_region
        // Predicated region
        $region73: #{convnet_forward.1} parent=71 // pred_check
          %p478 = pneg %p47
        $region74: #{convnet_forward.1} parent=71 // pred_check_branch
          %480 = sbr.rel (%p478) target = $region76
        $region75: #{convnet_forward.1} parent=71 // pred_region
          %p481 = scmp.lt.s32.totalorder %s27, 1
          %s482 = scalar_select %p481, %s27, 1
          %s483 = smul.addr %s482, 2
          %s484 = smul.addr %s483, 8
          %s485 = scalar_lea.vmem %s0, %s484
        $region76: #{convnet_forward.1} parent=71 // pred_fallthru
          _
      $region72: #{convnet_forward.1} parent=5 // pred_fallthru
        _
      %p486 = scmp.le.s32.totalorder 1, %s27
      %p487 = scmp.lt.s32.totalorder %s27, 3
      %p488 = pnand %p486, %p487
      %p489 = pneg %p488
      // Predicated region
      $region77: #{convnet_forward.1} parent=5 // pred_check
        _
      $region78: #{convnet_forward.1} parent=5 // pred_check_branch
        %491 = sbr.rel (%p488) target = $region80
      $region79: #{convnet_forward.1} parent=5 // pred_region
        %s492 = ssub.s32 %s27, 1
        // Predicated region
        $region81: #{convnet_forward.1} parent=79 // pred_check
          %p493 = pneg %p116
        $region82: #{convnet_forward.1} parent=79 // pred_check_branch
          %495 = sbr.rel (%p493) target = $region84
        $region83: #{convnet_forward.1} parent=79 // pred_region
          %497 = dma.done [#allocation7], 12288
        $region84: #{convnet_forward.1} parent=79 // pred_fallthru
          _
        // Predicated region
        $region85: #{convnet_forward.1} parent=79 // pred_check
          %p498 = pneg %p158
        $region86: #{convnet_forward.1} parent=79 // pred_check_branch
          %500 = sbr.rel (%p498) target = $region88
        $region87: #{convnet_forward.1} parent=79 // pred_region
          %502 = dma.done [#allocation10], 3072
        $region88: #{convnet_forward.1} parent=79 // pred_fallthru
          _
        // Predicated region
        $region89: #{convnet_forward.1} parent=79 // pred_check
          %p503 = pneg %p200
        $region90: #{convnet_forward.1} parent=79 // pred_check_branch
          %505 = sbr.rel (%p503) target = $region92
        $region91: #{convnet_forward.1} parent=79 // pred_region
          %507 = dma.done [#allocation10], 3072
        $region92: #{convnet_forward.1} parent=79 // pred_fallthru
          _
        // Predicated region
        $region93: #{convnet_forward.1} parent=79 // pred_check
          %p508 = pneg %p242
        $region94: #{convnet_forward.1} parent=79 // pred_check_branch
          %510 = sbr.rel (%p508) target = $region96
        $region95: #{convnet_forward.1} parent=79 // pred_region
          %512 = dma.done [#allocation13], 4096
        $region96: #{convnet_forward.1} parent=79 // pred_fallthru
          _
        %p513 = scmp.lt.s32.totalorder %s32, 1
        %s514 = scalar_select %p513, %s32, 1
        %s515 = smul.addr %s514, 2
        %s516 = smul.addr %s515, 8
        %s517 = scalar_lea.vmem %s0, %s516
        %p518 = pneg %p53
        %p519 = pneg %p50
        %p520 = pneg %p74
        %p521 = pneg %p71
        %p522 = pneg %p95
        %p523 = pneg %p92
        %p524 = pneg %p116
        %p525 = pneg %p113
        %p526 = pneg %p137
        %p527 = pneg %p134
        %p528 = pneg %p158
        %p529 = pneg %p155
        %p530 = pneg %p179
        %p531 = pneg %p176
        %p532 = pneg %p200
        %p533 = pneg %p197
        %p534 = pneg %p221
        %p535 = pneg %p218
        %p536 = pneg %p242
        %p537 = pneg %p239
        %p538 = pneg %p263
        %p539 = pneg %p260
        %p540 = pneg %p284
        %p541 = pneg %p281
        %p542 = pneg %p305
        %p543 = pneg %p302
        %p544 = pneg %p326
        %p545 = pneg %p323
        %p546 = pneg %p347
        %p547 = pneg %p344
        %p548 = pneg %p373
        %p549 = pneg %p370
        %s550 = sand.u32 %s360, 1
        %s551 = scalar_lea.sflag [#allocation8], %s550
        %s552 = sand.u32 %s360, 1
        %s553 = scalar_lea.vmem [#allocation14], %s552
        %p554 = scmp.lt.s32.totalorder %s32, 1
        %s555 = scalar_select %p554, %s32, 1
        %s556 = smul.addr %s555, 2
        %s557 = smul.addr %s556, 8
        %s558 = scalar_lea.vmem %s0, %s557
        %vm560 = vcmask 130048
        %561 = vst.msk [vmem:[#allocation2] sm:$0xff] %vm560, 0.0
        %562 = vst.msk [vmem:[#allocation2 + $0x8] sm:$0xff] %vm560, 0.0
        %vm563 = vcmask 123904
        %564 = vst.msk [vmem:[#allocation2 + $0x10] sm:$0x3] %vm563, 0.0
        %565 = vst [vmem:[#allocation3] sm:$0xff] 0.0
        %566 = vst [vmem:[#allocation3 + $0x8] sm:$0xff] 0.0
        %567 = vst [vmem:[#allocation3 + $0x10] sm:$0x3] 0.0
        %568 = vst [vmem:[#allocation3 + $0x18] sm:$0x3] 0.0
        %569 = vst [vmem:[#allocation4] sm:$0x3f] 0.0
        %570 = vst [vmem:[#allocation5] sm:$0x3f] 0.0
        %v571 = vld [vmem:[%s558] sm:$0xff]
        %v572 = vld [vmem:[%s558 + $0x8] sm:$0xff]
        %vm573 = vcmask 64512
        %574 = vst.msk [vmem:[#allocation2 + $0x1] sm:$0xff] %vm573, %v571
        %575 = vst.msk [vmem:[#allocation2 + $0x9] sm:$0xff] %vm573, %v572
        %v576 = vld [vmem:[#allocation2] sm:$0xff]
        %v577 = vld [vmem:[#allocation2 + $0x8] sm:$0xff]
        %v578 = vpack.c.bf16 %v577, %v576
        %v579 = vld [vmem:[%s1] sm:$0xff]
        %v580 = vld [vmem:[%s1 + $0x8] sm:$0xff]
        %v581 = vld [vmem:[%s1 + $0x10] sm:$0xff]
        %v582 = vld [vmem:[%s1 + $0x18] sm:$0xff]
        %v583 = vld [vmem:[#allocation2 + $0x1] sm:$0xff]
        %v584 = vld [vmem:[#allocation2 + $0x9] sm:$0xff]
        %v585 = vpack.c.bf16 %v584, %v583
        %s586 = scalar_lea.vmem %s1, 32
        %v587 = vld [vmem:[%s586] sm:$0xff]
        %v588 = vld [vmem:[%s586 + $0x8] sm:$0xff]
        %v589 = vld [vmem:[%s586 + $0x10] sm:$0xff]
        %v590 = vld [vmem:[%s586 + $0x18] sm:$0xff]
        %v595 = vunpack.c.l.b16 %v587
        %v596 = vunpack.c.h.b16 %v587
        %v597 = vunpack.c.l.b16 %v588
        %v598 = vunpack.c.h.b16 %v588
        %v599 = vunpack.c.l.b16 %v589
        %v600 = vunpack.c.h.b16 %v589
        %v601 = vunpack.c.l.b16 %v590
        %v602 = vunpack.c.h.b16 %v590
        %v603 = vpack.c.b16 %v599, %v595
        %v604 = vpack.c.b16 %v600, %v596
        %v605 = vpack.c.b16 %v601, %v597
        %v606 = vpack.c.b16 %v602, %v598
        %v612 = vsel %vm560, %v585, 0
        %614 = vmatpush.bf16.msra.mxu0 0
        %615 = vmatpush.bf16.msra.mxu0 0
        %616 = vmatpush.bf16.msra.mxu0 0
        %617 = vmatpush.bf16.msra.mxu0 0
        %618 = vmatpush.bf16.msra.mxu0 0
        %619 = vmatpush.bf16.msra.mxu0 0
        %620 = vmatpush.bf16.msra.mxu0 0
        %621 = vmatpush.bf16.msra.mxu0 %v603
        %622 = vmatmul.bf16.gmra.mxu0 %v612
        %v623 = vpop.f32.mrf.mxu0
        %v624 = vadd.f32 0.0, %v623
        %v625 = vpop.f32.mrf.mxu0
        %v626 = vadd.f32 0.0, %v625
        %627 = vdwg.mxu0
        %628 = vmatpush.bf16.msra.mxu0 0
        %629 = vmatpush.bf16.msra.mxu0 0
        %630 = vmatpush.bf16.msra.mxu0 0
        %631 = vmatpush.bf16.msra.mxu0 0
        %632 = vmatpush.bf16.msra.mxu0 0
        %633 = vmatpush.bf16.msra.mxu0 0
        %634 = vmatpush.bf16.msra.mxu0 0
        %635 = vmatpush.bf16.msra.mxu0 %v604
        %636 = vmatmul.bf16.gmra.mxu0 %v612
        %v637 = vpop.f32.mrf.mxu0
        %v638 = vadd.f32 0.0, %v637
        %v639 = vpop.f32.mrf.mxu0
        %v640 = vadd.f32 0.0, %v639
        %641 = vdwg.mxu0
        %642 = vmatpush.bf16.msra.mxu0 0
        %643 = vmatpush.bf16.msra.mxu0 0
        %644 = vmatpush.bf16.msra.mxu0 0
        %645 = vmatpush.bf16.msra.mxu0 0
        %646 = vmatpush.bf16.msra.mxu0 0
        %647 = vmatpush.bf16.msra.mxu0 0
        %648 = vmatpush.bf16.msra.mxu0 0
        %649 = vmatpush.bf16.msra.mxu0 %v605
        %650 = vmatmul.bf16.gmra.mxu0 %v612
        %v651 = vpop.f32.mrf.mxu0
        %v652 = vadd.f32 0.0, %v651
        %v653 = vpop.f32.mrf.mxu0
        %v654 = vadd.f32 0.0, %v653
        %655 = vdwg.mxu0
        %656 = vmatpush.bf16.msra.mxu0 0
        %657 = vmatpush.bf16.msra.mxu0 0
        %658 = vmatpush.bf16.msra.mxu0 0
        %659 = vmatpush.bf16.msra.mxu0 0
        %660 = vmatpush.bf16.msra.mxu0 0
        %661 = vmatpush.bf16.msra.mxu0 0
        %662 = vmatpush.bf16.msra.mxu0 0
        %663 = vmatpush.bf16.msra.mxu0 %v606
        %664 = vmatmul.bf16.gmra.mxu0 %v612
        %v665 = vpop.f32.mrf.mxu0
        %v666 = vadd.f32 0.0, %v665
        %v667 = vpop.f32.mrf.mxu0
        %v668 = vadd.f32 0.0, %v667
        %669 = vdwg.mxu0
        %v674 = vunpack.c.l.b16 %v579
        %v675 = vunpack.c.h.b16 %v579
        %v676 = vunpack.c.l.b16 %v580
        %v677 = vunpack.c.h.b16 %v580
        %v678 = vunpack.c.l.b16 %v581
        %v679 = vunpack.c.h.b16 %v581
        %v680 = vunpack.c.l.b16 %v582
        %v681 = vunpack.c.h.b16 %v582
        %v682 = vpack.c.b16 %v678, %v674
        %v683 = vpack.c.b16 %v679, %v675
        %v684 = vpack.c.b16 %v680, %v676
        %v685 = vpack.c.b16 %v681, %v677
        %v691 = vsel %vm560, %v578, 0
        %693 = vmatpush.bf16.msra.mxu0 0
        %694 = vmatpush.bf16.msra.mxu0 0
        %695 = vmatpush.bf16.msra.mxu0 0
        %696 = vmatpush.bf16.msra.mxu0 0
        %697 = vmatpush.bf16.msra.mxu0 0
        %698 = vmatpush.bf16.msra.mxu0 0
        %699 = vmatpush.bf16.msra.mxu0 0
        %700 = vmatpush.bf16.msra.mxu0 %v682
        %701 = vmatmul.bf16.gmra.mxu0 %v691
        %v702 = vpop.f32.mrf.mxu0
        %v703 = vadd.f32 %v624, %v702
        %v704 = vpop.f32.mrf.mxu0
        %v705 = vadd.f32 %v626, %v704
        %706 = vdwg.mxu0
        %707 = vmatpush.bf16.msra.mxu0 0
        %708 = vmatpush.bf16.msra.mxu0 0
        %709 = vmatpush.bf16.msra.mxu0 0
        %710 = vmatpush.bf16.msra.mxu0 0
        %711 = vmatpush.bf16.msra.mxu0 0
        %712 = vmatpush.bf16.msra.mxu0 0
        %713 = vmatpush.bf16.msra.mxu0 0
        %714 = vmatpush.bf16.msra.mxu0 %v683
        %715 = vmatmul.bf16.gmra.mxu0 %v691
        %v716 = vpop.f32.mrf.mxu0
        %v717 = vadd.f32 %v638, %v716
        %v718 = vpop.f32.mrf.mxu0
        %v719 = vadd.f32 %v640, %v718
        %720 = vdwg.mxu0
        %721 = vmatpush.bf16.msra.mxu0 0
        %722 = vmatpush.bf16.msra.mxu0 0
        %723 = vmatpush.bf16.msra.mxu0 0
        %724 = vmatpush.bf16.msra.mxu0 0
        %725 = vmatpush.bf16.msra.mxu0 0
        %726 = vmatpush.bf16.msra.mxu0 0
        %727 = vmatpush.bf16.msra.mxu0 0
        %728 = vmatpush.bf16.msra.mxu0 %v684
        %729 = vmatmul.bf16.gmra.mxu0 %v691
        %v730 = vpop.f32.mrf.mxu0
        %v731 = vadd.f32 %v652, %v730
        %v732 = vpop.f32.mrf.mxu0
        %v733 = vadd.f32 %v654, %v732
        %734 = vdwg.mxu0
        %735 = vmatpush.bf16.msra.mxu0 0
        %736 = vmatpush.bf16.msra.mxu0 0
        %737 = vmatpush.bf16.msra.mxu0 0
        %738 = vmatpush.bf16.msra.mxu0 0
        %739 = vmatpush.bf16.msra.mxu0 0
        %740 = vmatpush.bf16.msra.mxu0 0
        %741 = vmatpush.bf16.msra.mxu0 0
        %742 = vmatpush.bf16.msra.mxu0 %v685
        %743 = vmatmul.bf16.gmra.mxu0 %v691
        %v744 = vpop.f32.mrf.mxu0
        %v745 = vadd.f32 %v666, %v744
        %v746 = vpop.f32.mrf.mxu0
        %v747 = vadd.f32 %v668, %v746
        %748 = vdwg.mxu0
        %v749 = vld [vmem:[#allocation2 + $0x2] sm:$0xff]
        %v750 = vld [vmem:[#allocation2 + $0xa] sm:$0xff]
        %v751 = vpack.c.bf16 %v750, %v749
        %s752 = scalar_lea.vmem %s1, 64
        %v753 = vld [vmem:[%s752] sm:$0xff]
        %v754 = vld [vmem:[%s752 + $0x8] sm:$0xff]
        %v755 = vld [vmem:[%s752 + $0x10] sm:$0xff]
        %v756 = vld [vmem:[%s752 + $0x18] sm:$0xff]
        %v761 = vunpack.c.l.b16 %v753
        %v762 = vunpack.c.h.b16 %v753
        %v763 = vunpack.c.l.b16 %v754
        %v764 = vunpack.c.h.b16 %v754
        %v765 = vunpack.c.l.b16 %v755
        %v766 = vunpack.c.h.b16 %v755
        %v767 = vunpack.c.l.b16 %v756
        %v768 = vunpack.c.h.b16 %v756
        %v769 = vpack.c.b16 %v765, %v761
        %v770 = vpack.c.b16 %v766, %v762
        %v771 = vpack.c.b16 %v767, %v763
        %v772 = vpack.c.b16 %v768, %v764
        %v778 = vsel %vm560, %v751, 0
        %780 = vmatpush.bf16.msra.mxu0 0
        %781 = vmatpush.bf16.msra.mxu0 0
        %782 = vmatpush.bf16.msra.mxu0 0
        %783 = vmatpush.bf16.msra.mxu0 0
        %784 = vmatpush.bf16.msra.mxu0 0
        %785 = vmatpush.bf16.msra.mxu0 0
        %786 = vmatpush.bf16.msra.mxu0 0
        %787 = vmatpush.bf16.msra.mxu0 %v769
        %788 = vmatmul.bf16.gmra.mxu0 %v778
        %v789 = vpop.f32.mrf.mxu0
        %v790 = vadd.f32 0.0, %v789
        %v791 = vpop.f32.mrf.mxu0
        %v792 = vadd.f32 0.0, %v791
        %793 = vdwg.mxu0
        %794 = vmatpush.bf16.msra.mxu0 0
        %795 = vmatpush.bf16.msra.mxu0 0
        %796 = vmatpush.bf16.msra.mxu0 0
        %797 = vmatpush.bf16.msra.mxu0 0
        %798 = vmatpush.bf16.msra.mxu0 0
        %799 = vmatpush.bf16.msra.mxu0 0
        %800 = vmatpush.bf16.msra.mxu0 0
        %801 = vmatpush.bf16.msra.mxu0 %v770
        %802 = vmatmul.bf16.gmra.mxu0 %v778
        %v803 = vpop.f32.mrf.mxu0
        %v804 = vadd.f32 0.0, %v803
        %v805 = vpop.f32.mrf.mxu0
        %v806 = vadd.f32 0.0, %v805
        %807 = vdwg.mxu0
        %808 = vmatpush.bf16.msra.mxu0 0
        %809 = vmatpush.bf16.msra.mxu0 0
        %810 = vmatpush.bf16.msra.mxu0 0
        %811 = vmatpush.bf16.msra.mxu0 0
        %812 = vmatpush.bf16.msra.mxu0 0
        %813 = vmatpush.bf16.msra.mxu0 0
        %814 = vmatpush.bf16.msra.mxu0 0
        %815 = vmatpush.bf16.msra.mxu0 %v771
        %816 = vmatmul.bf16.gmra.mxu0 %v778
        %v817 = vpop.f32.mrf.mxu0
        %v818 = vadd.f32 0.0, %v817
        %v819 = vpop.f32.mrf.mxu0
        %v820 = vadd.f32 0.0, %v819
        %821 = vdwg.mxu0
        %822 = vmatpush.bf16.msra.mxu0 0
        %823 = vmatpush.bf16.msra.mxu0 0
        %824 = vmatpush.bf16.msra.mxu0 0
        %825 = vmatpush.bf16.msra.mxu0 0
        %826 = vmatpush.bf16.msra.mxu0 0
        %827 = vmatpush.bf16.msra.mxu0 0
        %828 = vmatpush.bf16.msra.mxu0 0
        %829 = vmatpush.bf16.msra.mxu0 %v772
        %830 = vmatmul.bf16.gmra.mxu0 %v778
        %v831 = vpop.f32.mrf.mxu0
        %v832 = vadd.f32 0.0, %v831
        %v833 = vpop.f32.mrf.mxu0
        %v834 = vadd.f32 0.0, %v833
        %835 = vdwg.mxu0
        %v836 = vadd.f32 %v703, %v790
        %v837 = vadd.f32 %v717, %v804
        %v838 = vadd.f32 %v731, %v818
        %v839 = vadd.f32 %v745, %v832
        %v840 = vadd.f32 %v705, %v792
        %v841 = vadd.f32 %v719, %v806
        %v842 = vadd.f32 %v733, %v820
        %v843 = vadd.f32 %v747, %v834
        %v844 = vld [vmem:[%s2] sm:$0xf]
        %v846 = vperm.slane %v844, 0
        %v847 = vperm.slane %v844, 1
        %v848 = vperm.slane %v844, 2
        %v849 = vperm.slane %v844, 3
        %v854 = vadd.f32 %v836, %v846
        %v855 = vadd.f32 %v837, %v847
        %v856 = vadd.f32 %v838, %v848
        %v857 = vadd.f32 %v839, %v849
        %v858 = vadd.f32 %v840, %v846
        %v859 = vadd.f32 %v841, %v847
        %v860 = vadd.f32 %v842, %v848
        %v861 = vadd.f32 %v843, %v849
        %v862 = vmax.f32 %v854, 0.0
        %v863 = vmax.f32 %v855, 0.0
        %v864 = vmax.f32 %v856, 0.0
        %v865 = vmax.f32 %v857, 0.0
        %v866 = vmax.f32 %v858, 0.0
        %v867 = vmax.f32 %v859, 0.0
        %v868 = vmax.f32 %v860, 0.0
        %v869 = vmax.f32 %v861, 0.0
        %v874 = vrot.slane %v862, 1
        %v875 = vrot.slane %v863, 1
        %v876 = vrot.slane %v864, 1
        %v877 = vrot.slane %v865, 1
        %v882 = vmax.f32 %v862, %v874
        %v883 = vmax.f32 %v863, %v875
        %v884 = vmax.f32 %v864, %v876
        %v885 = vmax.f32 %v865, %v877
        %887 = vrot.lane.b32.xlu0 %v882, 64
        %v888 = vpop.permute.xlu0 %887
        %v890 = vmax.f32 %v882, %v888
        %vm891 = vcmask 516096
        %892 = vst.msk [vmem:[#allocation3 + $0x1] sm:$0x1] %vm891, %v890
        %894 = vrot.lane.b32.xlu0 %v883, 64
        %v895 = vpop.permute.xlu0 %894
        %v897 = vmax.f32 %v883, %v895
        %899 = vrot.lane.b32.xlu0 %v897, 64
        %v900 = vpop.permute.xlu0 %899
        %vm902 = vcmask 1040896
        %903 = vst.msk [vmem:[#allocation3 + $0x1] sm:$0x1] %vm902, %v900
        %905 = vrot.lane.b32.xlu0 %v884, 64
        %v906 = vpop.permute.xlu0 %905
        %v908 = vmax.f32 %v884, %v906
        %909 = vst.msk [vmem:[#allocation3 + $0x9] sm:$0x1] %vm891, %v908
        %911 = vrot.lane.b32.xlu0 %v885, 64
        %v912 = vpop.permute.xlu0 %911
        %v914 = vmax.f32 %v885, %v912
        %916 = vrot.lane.b32.xlu0 %v914, 64
        %v917 = vpop.permute.xlu0 %916
        %919 = vst.msk [vmem:[#allocation3 + $0x9] sm:$0x1] %vm902, %v917
        %v921 = vrot.slane %v890, 2
        %923 = vst.msk [vmem:[#allocation3 + $0x2] sm:$0x1] %vm891, %v921
        %v924 = vrot.slane %v897, 2
        %925 = vrot.lane.b32.xlu0 %v924, 64
        %v926 = vpop.permute.xlu0 %925
        %928 = vst.msk [vmem:[#allocation3 + $0x2] sm:$0x1] %vm902, %v926
        %v930 = vrot.slane %v908, 2
        %932 = vst.msk [vmem:[#allocation3 + $0xa] sm:$0x1] %vm891, %v930
        %v933 = vrot.slane %v914, 2
        %934 = vrot.lane.b32.xlu0 %v933, 64
        %v935 = vpop.permute.xlu0 %934
        %937 = vst.msk [vmem:[#allocation3 + $0xa] sm:$0x1] %vm902, %v935
        %v938 = vrot.slane %v890, 4
        %940 = vst.msk [vmem:[#allocation3 + $0x3] sm:$0x1] %vm891, %v938
        %v941 = vrot.slane %v897, 4
        %942 = vrot.lane.b32.xlu0 %v941, 64
        %v943 = vpop.permute.xlu0 %942
        %945 = vst.msk [vmem:[#allocation3 + $0x3] sm:$0x1] %vm902, %v943
        %v946 = vrot.slane %v908, 4
        %948 = vst.msk [vmem:[#allocation3 + $0xb] sm:$0x1] %vm891, %v946
        %v949 = vrot.slane %v914, 4
        %950 = vrot.lane.b32.xlu0 %v949, 64
        %v951 = vpop.permute.xlu0 %950
        %953 = vst.msk [vmem:[#allocation3 + $0xb] sm:$0x1] %vm902, %v951
        %v954 = vrot.slane %v890, 6
        %956 = vst.msk [vmem:[#allocation3 + $0x4] sm:$0x1] %vm891, %v954
        %v957 = vrot.slane %v897, 6
        %958 = vrot.lane.b32.xlu0 %v957, 64
        %v959 = vpop.permute.xlu0 %958
        %961 = vst.msk [vmem:[#allocation3 + $0x4] sm:$0x1] %vm902, %v959
        %v962 = vrot.slane %v908, 6
        %964 = vst.msk [vmem:[#allocation3 + $0xc] sm:$0x1] %vm891, %v962
        %v965 = vrot.slane %v914, 6
        %966 = vrot.lane.b32.xlu0 %v965, 64
        %v967 = vpop.permute.xlu0 %966
        %969 = vst.msk [vmem:[#allocation3 + $0xc] sm:$0x1] %vm902, %v967
        %v974 = vrot.slane %v866, 1
        %v975 = vrot.slane %v867, 1
        %v976 = vrot.slane %v868, 1
        %v977 = vrot.slane %v869, 1
        %v982 = vmax.f32 %v866, %v974
        %v983 = vmax.f32 %v867, %v975
        %v984 = vmax.f32 %v868, %v976
        %v985 = vmax.f32 %v869, %v977
        %987 = vrot.lane.b32.xlu0 %v982, 64
        %v988 = vpop.permute.xlu0 %987
        %v990 = vmax.f32 %v982, %v988
        %991 = vst.msk [vmem:[#allocation3 + $0x5] sm:$0x1] %vm891, %v990
        %993 = vrot.lane.b32.xlu0 %v983, 64
        %v994 = vpop.permute.xlu0 %993
        %v996 = vmax.f32 %v983, %v994
        %998 = vrot.lane.b32.xlu0 %v996, 64
        %v999 = vpop.permute.xlu0 %998
        %1001 = vst.msk [vmem:[#allocation3 + $0x5] sm:$0x1] %vm902, %v999
        %1003 = vrot.lane.b32.xlu0 %v984, 64
        %v1004 = vpop.permute.xlu0 %1003
        %v1006 = vmax.f32 %v984, %v1004
        %1007 = vst.msk [vmem:[#allocation3 + $0xd] sm:$0x1] %vm891, %v1006
        %1009 = vrot.lane.b32.xlu0 %v985, 64
        %v1010 = vpop.permute.xlu0 %1009
        %v1012 = vmax.f32 %v985, %v1010
        %1014 = vrot.lane.b32.xlu0 %v1012, 64
        %v1015 = vpop.permute.xlu0 %1014
        %1017 = vst.msk [vmem:[#allocation3 + $0xd] sm:$0x1] %vm902, %v1015
        %v1019 = vrot.slane %v990, 2
        %1021 = vst.msk [vmem:[#allocation3 + $0x6] sm:$0x1] %vm891, %v1019
        %v1022 = vrot.slane %v996, 2
        %1023 = vrot.lane.b32.xlu0 %v1022, 64
        %v1024 = vpop.permute.xlu0 %1023
        %1026 = vst.msk [vmem:[#allocation3 + $0x6] sm:$0x1] %vm902, %v1024
        %v1028 = vrot.slane %v1006, 2
        %1030 = vst.msk [vmem:[#allocation3 + $0xe] sm:$0x1] %vm891, %v1028
        %v1031 = vrot.slane %v1012, 2
        %1032 = vrot.lane.b32.xlu0 %v1031, 64
        %v1033 = vpop.permute.xlu0 %1032
        %1035 = vst.msk [vmem:[#allocation3 + $0xe] sm:$0x1] %vm902, %v1033
        %v1036 = vrot.slane %v990, 4
        %1038 = vst.msk [vmem:[#allocation3 + $0x7] sm:$0x1] %vm891, %v1036
        %v1039 = vrot.slane %v996, 4
        %1040 = vrot.lane.b32.xlu0 %v1039, 64
        %v1041 = vpop.permute.xlu0 %1040
        %1043 = vst.msk [vmem:[#allocation3 + $0x7] sm:$0x1] %vm902, %v1041
        %v1044 = vrot.slane %v1006, 4
        %1046 = vst.msk [vmem:[#allocation3 + $0xf] sm:$0x1] %vm891, %v1044
        %v1047 = vrot.slane %v1012, 4
        %1048 = vrot.lane.b32.xlu0 %v1047, 64
        %v1049 = vpop.permute.xlu0 %1048
        %1051 = vst.msk [vmem:[#allocation3 + $0xf] sm:$0x1] %vm902, %v1049
        %v1052 = vrot.slane %v990, 6
        %1054 = vst.msk [vmem:[#allocation3 + $0x10] sm:$0x1] %vm891, %v1052
        %v1055 = vrot.slane %v996, 6
        %1056 = vrot.lane.b32.xlu0 %v1055, 64
        %v1057 = vpop.permute.xlu0 %1056
        %1059 = vst.msk [vmem:[#allocation3 + $0x10] sm:$0x1] %vm902, %v1057
        %v1060 = vrot.slane %v1006, 6
        %1062 = vst.msk [vmem:[#allocation3 + $0x18] sm:$0x1] %vm891, %v1060
        %v1063 = vrot.slane %v1012, 6
        %1064 = vrot.lane.b32.xlu0 %v1063, 64
        %v1065 = vpop.permute.xlu0 %1064
        %1067 = vst.msk [vmem:[#allocation3 + $0x18] sm:$0x1] %vm902, %v1065
        %v1068 = vld [vmem:[#allocation3] sm:$0xff]
        %v1069 = vld [vmem:[#allocation3 + $0x8] sm:$0xff]
        %v1070 = vpack.c.bf16 %v1068, %v1068
        %v1071 = vpack.c.bf16 %v1069, %v1069
        %v1072 = vld [vmem:[#allocation6] sm:$0xff]
        %v1073 = vld [vmem:[#allocation6 + $0x8] sm:$0xff]
        %v1074 = vld [vmem:[#allocation6 + $0x10] sm:$0xff]
        %v1075 = vld [vmem:[#allocation6 + $0x18] sm:$0xff]
        %v1076 = vld [vmem:[#allocation6 + $0x20] sm:$0xff]
        %v1077 = vld [vmem:[#allocation6 + $0x28] sm:$0xff]
        %v1078 = vld [vmem:[#allocation6 + $0x30] sm:$0xff]
        %v1079 = vld [vmem:[#allocation6 + $0x38] sm:$0xff]
        %v1080 = vld [vmem:[#allocation6 + $0x40] sm:$0xff]
        %v1081 = vld [vmem:[#allocation6 + $0x48] sm:$0xff]
        %v1082 = vld [vmem:[#allocation6 + $0x50] sm:$0xff]
        %v1083 = vld [vmem:[#allocation6 + $0x58] sm:$0xff]
        %v1084 = vld [vmem:[#allocation6 + $0x60] sm:$0xff]
        %v1085 = vld [vmem:[#allocation6 + $0x68] sm:$0xff]
        %v1086 = vld [vmem:[#allocation6 + $0x70] sm:$0xff]
        %v1087 = vld [vmem:[#allocation6 + $0x78] sm:$0xff]
        %v1088 = vld [vmem:[#allocation6 + $0x80] sm:$0xff]
        %v1089 = vld [vmem:[#allocation6 + $0x88] sm:$0xff]
        %v1090 = vld [vmem:[#allocation6 + $0x90] sm:$0xff]
        %v1091 = vld [vmem:[#allocation6 + $0x98] sm:$0xff]
        %v1092 = vld [vmem:[#allocation6 + $0xa0] sm:$0xff]
        %v1093 = vld [vmem:[#allocation6 + $0xa8] sm:$0xff]
        %v1094 = vld [vmem:[#allocation6 + $0xb0] sm:$0xff]
        %v1095 = vld [vmem:[#allocation6 + $0xb8] sm:$0xff]
        %v1096 = vld [vmem:[#allocation6 + $0xc0] sm:$0xff]
        %v1097 = vld [vmem:[#allocation6 + $0xc8] sm:$0xff]
        %v1098 = vld [vmem:[#allocation6 + $0xd0] sm:$0xff]
        %v1099 = vld [vmem:[#allocation6 + $0xd8] sm:$0xff]
        %v1100 = vld [vmem:[#allocation6 + $0xe0] sm:$0xff]
        %v1101 = vld [vmem:[#allocation6 + $0xe8] sm:$0xff]
        %v1102 = vld [vmem:[#allocation6 + $0xf0] sm:$0xff]
        %v1103 = vld [vmem:[#allocation6 + $0xf8] sm:$0xff]
        %v1104 = vld [vmem:[#allocation3] sm:$0xfe]
        %v1105 = vld [vmem:[#allocation3 + $0x8] sm:$0xfe]
        %v1106 = vld [vmem:[#allocation3 + $0x10] sm:$0x1]
        %v1107 = vld [vmem:[#allocation3 + $0x18] sm:$0x1]
        %v1108 = vpack.c.bf16 %v1106, %v1104
        %v1109 = vpack.c.bf16 %v1107, %v1105
        %s1110 = scalar_lea.vmem [#allocation6], 256
        %v1111 = vld [vmem:[%s1110] sm:$0xff]
        %v1112 = vld [vmem:[%s1110 + $0x8] sm:$0xff]
        %v1113 = vld [vmem:[%s1110 + $0x10] sm:$0xff]
        %v1114 = vld [vmem:[%s1110 + $0x18] sm:$0xff]
        %v1115 = vld [vmem:[%s1110 + $0x20] sm:$0xff]
        %v1116 = vld [vmem:[%s1110 + $0x28] sm:$0xff]
        %v1117 = vld [vmem:[%s1110 + $0x30] sm:$0xff]
        %v1118 = vld [vmem:[%s1110 + $0x38] sm:$0xff]
        %v1119 = vld [vmem:[%s1110 + $0x40] sm:$0xff]
        %v1120 = vld [vmem:[%s1110 + $0x48] sm:$0xff]
        %v1121 = vld [vmem:[%s1110 + $0x50] sm:$0xff]
        %v1122 = vld [vmem:[%s1110 + $0x58] sm:$0xff]
        %v1123 = vld [vmem:[%s1110 + $0x60] sm:$0xff]
        %v1124 = vld [vmem:[%s1110 + $0x68] sm:$0xff]
        %v1125 = vld [vmem:[%s1110 + $0x70] sm:$0xff]
        %v1126 = vld [vmem:[%s1110 + $0x78] sm:$0xff]
        %v1127 = vld [vmem:[%s1110 + $0x80] sm:$0xff]
        %v1128 = vld [vmem:[%s1110 + $0x88] sm:$0xff]
        %v1129 = vld [vmem:[%s1110 + $0x90] sm:$0xff]
        %v1130 = vld [vmem:[%s1110 + $0x98] sm:$0xff]
        %v1131 = vld [vmem:[%s1110 + $0xa0] sm:$0xff]
        %v1132 = vld [vmem:[%s1110 + $0xa8] sm:$0xff]
        %v1133 = vld [vmem:[%s1110 + $0xb0] sm:$0xff]
        %v1134 = vld [vmem:[%s1110 + $0xb8] sm:$0xff]
        %v1135 = vld [vmem:[%s1110 + $0xc0] sm:$0xff]
        %v1136 = vld [vmem:[%s1110 + $0xc8] sm:$0xff]
        %v1137 = vld [vmem:[%s1110 + $0xd0] sm:$0xff]
        %v1138 = vld [vmem:[%s1110 + $0xd8] sm:$0xff]
        %v1139 = vld [vmem:[%s1110 + $0xe0] sm:$0xff]
        %v1140 = vld [vmem:[%s1110 + $0xe8] sm:$0xff]
        %v1141 = vld [vmem:[%s1110 + $0xf0] sm:$0xff]
        %v1142 = vld [vmem:[%s1110 + $0xf8] sm:$0xff]
        %v1144 = vshrl.u32 %v1108, 16
        %v1146 = vshll.u32 %v1108, 16
        %v1148 = vrot.slane %v1146, 1
        %v1149 = vor.u32 %v1144, %v1148
        %v1151 = vshrl.u32 %v1109, 16
        %v1153 = vshll.u32 %v1109, 16
        %v1155 = vrot.slane %v1153, 1
        %v1156 = vor.u32 %v1151, %v1155
        %v1191 = vunpack.c.l.b16 %v1111
        %v1192 = vunpack.c.h.b16 %v1111
        %v1193 = vunpack.c.l.b16 %v1112
        %v1194 = vunpack.c.h.b16 %v1112
        %v1195 = vunpack.c.l.b16 %v1113
        %v1196 = vunpack.c.h.b16 %v1113
        %v1197 = vunpack.c.l.b16 %v1114
        %v1198 = vunpack.c.h.b16 %v1114
        %v1199 = vunpack.c.l.b16 %v1115
        %v1200 = vunpack.c.h.b16 %v1115
        %v1201 = vunpack.c.l.b16 %v1116
        %v1202 = vunpack.c.h.b16 %v1116
        %v1203 = vunpack.c.l.b16 %v1117
        %v1204 = vunpack.c.h.b16 %v1117
        %v1205 = vunpack.c.l.b16 %v1118
        %v1206 = vunpack.c.h.b16 %v1118
        %v1207 = vunpack.c.l.b16 %v1119
        %v1208 = vunpack.c.h.b16 %v1119
        %v1209 = vunpack.c.l.b16 %v1120
        %v1210 = vunpack.c.h.b16 %v1120
        %v1211 = vunpack.c.l.b16 %v1121
        %v1212 = vunpack.c.h.b16 %v1121
        %v1213 = vunpack.c.l.b16 %v1122
        %v1214 = vunpack.c.h.b16 %v1122
        %v1215 = vunpack.c.l.b16 %v1123
        %v1216 = vunpack.c.h.b16 %v1123
        %v1217 = vunpack.c.l.b16 %v1124
        %v1218 = vunpack.c.h.b16 %v1124
        %v1219 = vunpack.c.l.b16 %v1125
        %v1220 = vunpack.c.h.b16 %v1125
        %v1221 = vunpack.c.l.b16 %v1126
        %v1222 = vunpack.c.h.b16 %v1126
        %v1223 = vunpack.c.l.b16 %v1127
        %v1224 = vunpack.c.h.b16 %v1127
        %v1225 = vunpack.c.l.b16 %v1128
        %v1226 = vunpack.c.h.b16 %v1128
        %v1227 = vunpack.c.l.b16 %v1129
        %v1228 = vunpack.c.h.b16 %v1129
        %v1229 = vunpack.c.l.b16 %v1130
        %v1230 = vunpack.c.h.b16 %v1130
        %v1231 = vunpack.c.l.b16 %v1131
        %v1232 = vunpack.c.h.b16 %v1131
        %v1233 = vunpack.c.l.b16 %v1132
        %v1234 = vunpack.c.h.b16 %v1132
        %v1235 = vunpack.c.l.b16 %v1133
        %v1236 = vunpack.c.h.b16 %v1133
        %v1237 = vunpack.c.l.b16 %v1134
        %v1238 = vunpack.c.h.b16 %v1134
        %v1239 = vunpack.c.l.b16 %v1135
        %v1240 = vunpack.c.h.b16 %v1135
        %v1241 = vunpack.c.l.b16 %v1136
        %v1242 = vunpack.c.h.b16 %v1136
        %v1243 = vunpack.c.l.b16 %v1137
        %v1244 = vunpack.c.h.b16 %v1137
        %v1245 = vunpack.c.l.b16 %v1138
        %v1246 = vunpack.c.h.b16 %v1138
        %v1247 = vunpack.c.l.b16 %v1139
        %v1248 = vunpack.c.h.b16 %v1139
        %v1249 = vunpack.c.l.b16 %v1140
        %v1250 = vunpack.c.h.b16 %v1140
        %v1251 = vunpack.c.l.b16 %v1141
        %v1252 = vunpack.c.h.b16 %v1141
        %v1253 = vunpack.c.l.b16 %v1142
        %v1254 = vunpack.c.h.b16 %v1142
        %v1255 = vpack.c.b16 %v1193, %v1191
        %v1256 = vpack.c.b16 %v1194, %v1192
        %v1257 = vpack.c.b16 %v1197, %v1195
        %v1258 = vpack.c.b16 %v1198, %v1196
        %v1259 = vpack.c.b16 %v1201, %v1199
        %v1260 = vpack.c.b16 %v1202, %v1200
        %v1261 = vpack.c.b16 %v1205, %v1203
        %v1262 = vpack.c.b16 %v1206, %v1204
        %v1263 = vpack.c.b16 %v1209, %v1207
        %v1264 = vpack.c.b16 %v1210, %v1208
        %v1265 = vpack.c.b16 %v1213, %v1211
        %v1266 = vpack.c.b16 %v1214, %v1212
        %v1267 = vpack.c.b16 %v1217, %v1215
        %v1268 = vpack.c.b16 %v1218, %v1216
        %v1269 = vpack.c.b16 %v1221, %v1219
        %v1270 = vpack.c.b16 %v1222, %v1220
        %v1271 = vpack.c.b16 %v1225, %v1223
        %v1272 = vpack.c.b16 %v1226, %v1224
        %v1273 = vpack.c.b16 %v1229, %v1227
        %v1274 = vpack.c.b16 %v1230, %v1228
        %v1275 = vpack.c.b16 %v1233, %v1231
        %v1276 = vpack.c.b16 %v1234, %v1232
        %v1277 = vpack.c.b16 %v1237, %v1235
        %v1278 = vpack.c.b16 %v1238, %v1236
        %v1279 = vpack.c.b16 %v1241, %v1239
        %v1280 = vpack.c.b16 %v1242, %v1240
        %v1281 = vpack.c.b16 %v1245, %v1243
        %v1282 = vpack.c.b16 %v1246, %v1244
        %v1283 = vpack.c.b16 %v1249, %v1247
        %v1284 = vpack.c.b16 %v1250, %v1248
        %v1285 = vpack.c.b16 %v1253, %v1251
        %v1286 = vpack.c.b16 %v1254, %v1252
        %1319 = vmatpush.bf16.msra.mxu0 %v1269
        %1320 = vmatpush.bf16.msra.mxu0 %v1267
        %1321 = vmatpush.bf16.msra.mxu0 %v1265
        %1322 = vmatpush.bf16.msra.mxu0 %v1263
        %1323 = vmatpush.bf16.msra.mxu0 %v1261
        %1324 = vmatpush.bf16.msra.mxu0 %v1259
        %1325 = vmatpush.bf16.msra.mxu0 %v1257
        %1326 = vmatpush.bf16.msra.mxu0 %v1255
        %1327 = vmatmul.bf16.gmra.mxu0 %v1149
        %v1328 = vpop.f32.mrf.mxu0
        %v1329 = vadd.f32 0.0, %v1328
        %v1330 = vpop.f32.mrf.mxu0
        %1331 = vdwg.mxu0
        %1332 = vmatpush.bf16.msra.mxu0 %v1285
        %1333 = vmatpush.bf16.msra.mxu0 %v1283
        %1334 = vmatpush.bf16.msra.mxu0 %v1281
        %1335 = vmatpush.bf16.msra.mxu0 %v1279
        %1336 = vmatpush.bf16.msra.mxu0 %v1277
        %1337 = vmatpush.bf16.msra.mxu0 %v1275
        %1338 = vmatpush.bf16.msra.mxu0 %v1273
        %1339 = vmatpush.bf16.msra.mxu0 %v1271
        %1340 = vmatmul.bf16.gmra.mxu0 %v1156
        %v1341 = vpop.f32.mrf.mxu0
        %v1342 = vadd.f32 %v1329, %v1341
        %v1343 = vpop.f32.mrf.mxu0
        %1344 = vdwg.mxu0
        %1345 = vmatpush.bf16.msra.mxu0 %v1270
        %1346 = vmatpush.bf16.msra.mxu0 %v1268
        %1347 = vmatpush.bf16.msra.mxu0 %v1266
        %1348 = vmatpush.bf16.msra.mxu0 %v1264
        %1349 = vmatpush.bf16.msra.mxu0 %v1262
        %1350 = vmatpush.bf16.msra.mxu0 %v1260
        %1351 = vmatpush.bf16.msra.mxu0 %v1258
        %1352 = vmatpush.bf16.msra.mxu0 %v1256
        %1353 = vmatmul.bf16.gmra.mxu0 %v1149
        %v1354 = vpop.f32.mrf.mxu0
        %v1355 = vadd.f32 0.0, %v1354
        %v1356 = vpop.f32.mrf.mxu0
        %1357 = vdwg.mxu0
        %1358 = vmatpush.bf16.msra.mxu0 %v1286
        %1359 = vmatpush.bf16.msra.mxu0 %v1284
        %1360 = vmatpush.bf16.msra.mxu0 %v1282
        %1361 = vmatpush.bf16.msra.mxu0 %v1280
        %1362 = vmatpush.bf16.msra.mxu0 %v1278
        %1363 = vmatpush.bf16.msra.mxu0 %v1276
        %1364 = vmatpush.bf16.msra.mxu0 %v1274
        %1365 = vmatpush.bf16.msra.mxu0 %v1272
        %1366 = vmatmul.bf16.gmra.mxu0 %v1156
        %v1367 = vpop.f32.mrf.mxu0
        %v1368 = vadd.f32 %v1355, %v1367
        %v1369 = vpop.f32.mrf.mxu0
        %1370 = vdwg.mxu0
        %v1403 = vunpack.c.l.b16 %v1072
        %v1404 = vunpack.c.h.b16 %v1072
        %v1405 = vunpack.c.l.b16 %v1073
        %v1406 = vunpack.c.h.b16 %v1073
        %v1407 = vunpack.c.l.b16 %v1074
        %v1408 = vunpack.c.h.b16 %v1074
        %v1409 = vunpack.c.l.b16 %v1075
        %v1410 = vunpack.c.h.b16 %v1075
        %v1411 = vunpack.c.l.b16 %v1076
        %v1412 = vunpack.c.h.b16 %v1076
        %v1413 = vunpack.c.l.b16 %v1077
        %v1414 = vunpack.c.h.b16 %v1077
        %v1415 = vunpack.c.l.b16 %v1078
        %v1416 = vunpack.c.h.b16 %v1078
        %v1417 = vunpack.c.l.b16 %v1079
        %v1418 = vunpack.c.h.b16 %v1079
        %v1419 = vunpack.c.l.b16 %v1080
        %v1420 = vunpack.c.h.b16 %v1080
        %v1421 = vunpack.c.l.b16 %v1081
        %v1422 = vunpack.c.h.b16 %v1081
        %v1423 = vunpack.c.l.b16 %v1082
        %v1424 = vunpack.c.h.b16 %v1082
        %v1425 = vunpack.c.l.b16 %v1083
        %v1426 = vunpack.c.h.b16 %v1083
        %v1427 = vunpack.c.l.b16 %v1084
        %v1428 = vunpack.c.h.b16 %v1084
        %v1429 = vunpack.c.l.b16 %v1085
        %v1430 = vunpack.c.h.b16 %v1085
        %v1431 = vunpack.c.l.b16 %v1086
        %v1432 = vunpack.c.h.b16 %v1086
        %v1433 = vunpack.c.l.b16 %v1087
        %v1434 = vunpack.c.h.b16 %v1087
        %v1435 = vunpack.c.l.b16 %v1088
        %v1436 = vunpack.c.h.b16 %v1088
        %v1437 = vunpack.c.l.b16 %v1089
        %v1438 = vunpack.c.h.b16 %v1089
        %v1439 = vunpack.c.l.b16 %v1090
        %v1440 = vunpack.c.h.b16 %v1090
        %v1441 = vunpack.c.l.b16 %v1091
        %v1442 = vunpack.c.h.b16 %v1091
        %v1443 = vunpack.c.l.b16 %v1092
        %v1444 = vunpack.c.h.b16 %v1092
        %v1445 = vunpack.c.l.b16 %v1093
        %v1446 = vunpack.c.h.b16 %v1093
        %v1447 = vunpack.c.l.b16 %v1094
        %v1448 = vunpack.c.h.b16 %v1094
        %v1449 = vunpack.c.l.b16 %v1095
        %v1450 = vunpack.c.h.b16 %v1095
        %v1451 = vunpack.c.l.b16 %v1096
        %v1452 = vunpack.c.h.b16 %v1096
        %v1453 = vunpack.c.l.b16 %v1097
        %v1454 = vunpack.c.h.b16 %v1097
        %v1455 = vunpack.c.l.b16 %v1098
        %v1456 = vunpack.c.h.b16 %v1098
        %v1457 = vunpack.c.l.b16 %v1099
        %v1458 = vunpack.c.h.b16 %v1099
        %v1459 = vunpack.c.l.b16 %v1100
        %v1460 = vunpack.c.h.b16 %v1100
        %v1461 = vunpack.c.l.b16 %v1101
        %v1462 = vunpack.c.h.b16 %v1101
        %v1463 = vunpack.c.l.b16 %v1102
        %v1464 = vunpack.c.h.b16 %v1102
        %v1465 = vunpack.c.l.b16 %v1103
        %v1466 = vunpack.c.h.b16 %v1103
        %v1467 = vpack.c.b16 %v1405, %v1403
        %v1468 = vpack.c.b16 %v1406, %v1404
        %v1469 = vpack.c.b16 %v1409, %v1407
        %v1470 = vpack.c.b16 %v1410, %v1408
        %v1471 = vpack.c.b16 %v1413, %v1411
        %v1472 = vpack.c.b16 %v1414, %v1412
        %v1473 = vpack.c.b16 %v1417, %v1415
        %v1474 = vpack.c.b16 %v1418, %v1416
        %v1475 = vpack.c.b16 %v1421, %v1419
        %v1476 = vpack.c.b16 %v1422, %v1420
        %v1477 = vpack.c.b16 %v1425, %v1423
        %v1478 = vpack.c.b16 %v1426, %v1424
        %v1479 = vpack.c.b16 %v1429, %v1427
        %v1480 = vpack.c.b16 %v1430, %v1428
        %v1481 = vpack.c.b16 %v1433, %v1431
        %v1482 = vpack.c.b16 %v1434, %v1432
        %v1483 = vpack.c.b16 %v1437, %v1435
        %v1484 = vpack.c.b16 %v1438, %v1436
        %v1485 = vpack.c.b16 %v1441, %v1439
        %v1486 = vpack.c.b16 %v1442, %v1440
        %v1487 = vpack.c.b16 %v1445, %v1443
        %v1488 = vpack.c.b16 %v1446, %v1444
        %v1489 = vpack.c.b16 %v1449, %v1447
        %v1490 = vpack.c.b16 %v1450, %v1448
        %v1491 = vpack.c.b16 %v1453, %v1451
        %v1492 = vpack.c.b16 %v1454, %v1452
        %v1493 = vpack.c.b16 %v1457, %v1455
        %v1494 = vpack.c.b16 %v1458, %v1456
        %v1495 = vpack.c.b16 %v1461, %v1459
        %v1496 = vpack.c.b16 %v1462, %v1460
        %v1497 = vpack.c.b16 %v1465, %v1463
        %v1498 = vpack.c.b16 %v1466, %v1464
        %1531 = vmatpush.bf16.msra.mxu0 %v1481
        %1532 = vmatpush.bf16.msra.mxu0 %v1479
        %1533 = vmatpush.bf16.msra.mxu0 %v1477
        %1534 = vmatpush.bf16.msra.mxu0 %v1475
        %1535 = vmatpush.bf16.msra.mxu0 %v1473
        %1536 = vmatpush.bf16.msra.mxu0 %v1471
        %1537 = vmatpush.bf16.msra.mxu0 %v1469
        %1538 = vmatpush.bf16.msra.mxu0 %v1467
        %1539 = vmatmul.bf16.gmra.mxu0 %v1070
        %v1540 = vpop.f32.mrf.mxu0
        %v1541 = vadd.f32 %v1342, %v1540
        %v1542 = vpop.f32.mrf.mxu0
        %1543 = vdwg.mxu0
        %1544 = vmatpush.bf16.msra.mxu0 %v1497
        %1545 = vmatpush.bf16.msra.mxu0 %v1495
        %1546 = vmatpush.bf16.msra.mxu0 %v1493
        %1547 = vmatpush.bf16.msra.mxu0 %v1491
        %1548 = vmatpush.bf16.msra.mxu0 %v1489
        %1549 = vmatpush.bf16.msra.mxu0 %v1487
        %1550 = vmatpush.bf16.msra.mxu0 %v1485
        %1551 = vmatpush.bf16.msra.mxu0 %v1483
        %1552 = vmatmul.bf16.gmra.mxu0 %v1071
        %v1553 = vpop.f32.mrf.mxu0
        %v1554 = vadd.f32 %v1541, %v1553
        %v1555 = vpop.f32.mrf.mxu0
        %1556 = vdwg.mxu0
        %1557 = vmatpush.bf16.msra.mxu0 %v1482
        %1558 = vmatpush.bf16.msra.mxu0 %v1480
        %1559 = vmatpush.bf16.msra.mxu0 %v1478
        %1560 = vmatpush.bf16.msra.mxu0 %v1476
        %1561 = vmatpush.bf16.msra.mxu0 %v1474
        %1562 = vmatpush.bf16.msra.mxu0 %v1472
        %1563 = vmatpush.bf16.msra.mxu0 %v1470
        %1564 = vmatpush.bf16.msra.mxu0 %v1468
        %1565 = vmatmul.bf16.gmra.mxu0 %v1070
        %v1566 = vpop.f32.mrf.mxu0
        %v1567 = vadd.f32 %v1368, %v1566
        %v1568 = vpop.f32.mrf.mxu0
        %1569 = vdwg.mxu0
        %1570 = vmatpush.bf16.msra.mxu0 %v1498
        %1571 = vmatpush.bf16.msra.mxu0 %v1496
        %1572 = vmatpush.bf16.msra.mxu0 %v1494
        %1573 = vmatpush.bf16.msra.mxu0 %v1492
        %1574 = vmatpush.bf16.msra.mxu0 %v1490
        %1575 = vmatpush.bf16.msra.mxu0 %v1488
        %1576 = vmatpush.bf16.msra.mxu0 %v1486
        %1577 = vmatpush.bf16.msra.mxu0 %v1484
        %1578 = vmatmul.bf16.gmra.mxu0 %v1071
        %v1579 = vpop.f32.mrf.mxu0
        %v1580 = vadd.f32 %v1567, %v1579
        %v1581 = vpop.f32.mrf.mxu0
        %1582 = vdwg.mxu0
        %v1583 = vld [vmem:[#allocation3] sm:$0xfc]
        %v1584 = vld [vmem:[#allocation3 + $0x8] sm:$0xfc]
        %v1585 = vld [vmem:[#allocation3 + $0x10] sm:$0x3]
        %v1586 = vld [vmem:[#allocation3 + $0x18] sm:$0x3]
        %v1587 = vpack.c.bf16 %v1585, %v1583
        %v1588 = vpack.c.bf16 %v1586, %v1584
        %s1589 = scalar_lea.vmem [#allocation6], 512
        %v1590 = vld [vmem:[%s1589] sm:$0xff]
        %v1591 = vld [vmem:[%s1589 + $0x8] sm:$0xff]
        %v1592 = vld [vmem:[%s1589 + $0x10] sm:$0xff]
        %v1593 = vld [vmem:[%s1589 + $0x18] sm:$0xff]
        %v1594 = vld [vmem:[%s1589 + $0x20] sm:$0xff]
        %v1595 = vld [vmem:[%s1589 + $0x28] sm:$0xff]
        %v1596 = vld [vmem:[%s1589 + $0x30] sm:$0xff]
        %v1597 = vld [vmem:[%s1589 + $0x38] sm:$0xff]
        %v1598 = vld [vmem:[%s1589 + $0x40] sm:$0xff]
        %v1599 = vld [vmem:[%s1589 + $0x48] sm:$0xff]
        %v1600 = vld [vmem:[%s1589 + $0x50] sm:$0xff]
        %v1601 = vld [vmem:[%s1589 + $0x58] sm:$0xff]
        %v1602 = vld [vmem:[%s1589 + $0x60] sm:$0xff]
        %v1603 = vld [vmem:[%s1589 + $0x68] sm:$0xff]
        %v1604 = vld [vmem:[%s1589 + $0x70] sm:$0xff]
        %v1605 = vld [vmem:[%s1589 + $0x78] sm:$0xff]
        %v1606 = vld [vmem:[%s1589 + $0x80] sm:$0xff]
        %v1607 = vld [vmem:[%s1589 + $0x88] sm:$0xff]
        %v1608 = vld [vmem:[%s1589 + $0x90] sm:$0xff]
        %v1609 = vld [vmem:[%s1589 + $0x98] sm:$0xff]
        %v1610 = vld [vmem:[%s1589 + $0xa0] sm:$0xff]
        %v1611 = vld [vmem:[%s1589 + $0xa8] sm:$0xff]
        %v1612 = vld [vmem:[%s1589 + $0xb0] sm:$0xff]
        %v1613 = vld [vmem:[%s1589 + $0xb8] sm:$0xff]
        %v1614 = vld [vmem:[%s1589 + $0xc0] sm:$0xff]
        %v1615 = vld [vmem:[%s1589 + $0xc8] sm:$0xff]
        %v1616 = vld [vmem:[%s1589 + $0xd0] sm:$0xff]
        %v1617 = vld [vmem:[%s1589 + $0xd8] sm:$0xff]
        %v1618 = vld [vmem:[%s1589 + $0xe0] sm:$0xff]
        %v1619 = vld [vmem:[%s1589 + $0xe8] sm:$0xff]
        %v1620 = vld [vmem:[%s1589 + $0xf0] sm:$0xff]
        %v1621 = vld [vmem:[%s1589 + $0xf8] sm:$0xff]
        %v1624 = vrot.slane %v1587, 1
        %v1625 = vrot.slane %v1588, 1
        %v1660 = vunpack.c.l.b16 %v1590
        %v1661 = vunpack.c.h.b16 %v1590
        %v1662 = vunpack.c.l.b16 %v1591
        %v1663 = vunpack.c.h.b16 %v1591
        %v1664 = vunpack.c.l.b16 %v1592
        %v1665 = vunpack.c.h.b16 %v1592
        %v1666 = vunpack.c.l.b16 %v1593
        %v1667 = vunpack.c.h.b16 %v1593
        %v1668 = vunpack.c.l.b16 %v1594
        %v1669 = vunpack.c.h.b16 %v1594
        %v1670 = vunpack.c.l.b16 %v1595
        %v1671 = vunpack.c.h.b16 %v1595
        %v1672 = vunpack.c.l.b16 %v1596
        %v1673 = vunpack.c.h.b16 %v1596
        %v1674 = vunpack.c.l.b16 %v1597
        %v1675 = vunpack.c.h.b16 %v1597
        %v1676 = vunpack.c.l.b16 %v1598
        %v1677 = vunpack.c.h.b16 %v1598
        %v1678 = vunpack.c.l.b16 %v1599
        %v1679 = vunpack.c.h.b16 %v1599
        %v1680 = vunpack.c.l.b16 %v1600
        %v1681 = vunpack.c.h.b16 %v1600
        %v1682 = vunpack.c.l.b16 %v1601
        %v1683 = vunpack.c.h.b16 %v1601
        %v1684 = vunpack.c.l.b16 %v1602
        %v1685 = vunpack.c.h.b16 %v1602
        %v1686 = vunpack.c.l.b16 %v1603
        %v1687 = vunpack.c.h.b16 %v1603
        %v1688 = vunpack.c.l.b16 %v1604
        %v1689 = vunpack.c.h.b16 %v1604
        %v1690 = vunpack.c.l.b16 %v1605
        %v1691 = vunpack.c.h.b16 %v1605
        %v1692 = vunpack.c.l.b16 %v1606
        %v1693 = vunpack.c.h.b16 %v1606
        %v1694 = vunpack.c.l.b16 %v1607
        %v1695 = vunpack.c.h.b16 %v1607
        %v1696 = vunpack.c.l.b16 %v1608
        %v1697 = vunpack.c.h.b16 %v1608
        %v1698 = vunpack.c.l.b16 %v1609
        %v1699 = vunpack.c.h.b16 %v1609
        %v1700 = vunpack.c.l.b16 %v1610
        %v1701 = vunpack.c.h.b16 %v1610
        %v1702 = vunpack.c.l.b16 %v1611
        %v1703 = vunpack.c.h.b16 %v1611
        %v1704 = vunpack.c.l.b16 %v1612
        %v1705 = vunpack.c.h.b16 %v1612
        %v1706 = vunpack.c.l.b16 %v1613
        %v1707 = vunpack.c.h.b16 %v1613
        %v1708 = vunpack.c.l.b16 %v1614
        %v1709 = vunpack.c.h.b16 %v1614
        %v1710 = vunpack.c.l.b16 %v1615
        %v1711 = vunpack.c.h.b16 %v1615
        %v1712 = vunpack.c.l.b16 %v1616
        %v1713 = vunpack.c.h.b16 %v1616
        %v1714 = vunpack.c.l.b16 %v1617
        %v1715 = vunpack.c.h.b16 %v1617
        %v1716 = vunpack.c.l.b16 %v1618
        %v1717 = vunpack.c.h.b16 %v1618
        %v1718 = vunpack.c.l.b16 %v1619
        %v1719 = vunpack.c.h.b16 %v1619
        %v1720 = vunpack.c.l.b16 %v1620
        %v1721 = vunpack.c.h.b16 %v1620
        %v1722 = vunpack.c.l.b16 %v1621
        %v1723 = vunpack.c.h.b16 %v1621
        %v1724 = vpack.c.b16 %v1662, %v1660
        %v1725 = vpack.c.b16 %v1663, %v1661
        %v1726 = vpack.c.b16 %v1666, %v1664
        %v1727 = vpack.c.b16 %v1667, %v1665
        %v1728 = vpack.c.b16 %v1670, %v1668
        %v1729 = vpack.c.b16 %v1671, %v1669
        %v1730 = vpack.c.b16 %v1674, %v1672
        %v1731 = vpack.c.b16 %v1675, %v1673
        %v1732 = vpack.c.b16 %v1678, %v1676
        %v1733 = vpack.c.b16 %v1679, %v1677
        %v1734 = vpack.c.b16 %v1682, %v1680
        %v1735 = vpack.c.b16 %v1683, %v1681
        %v1736 = vpack.c.b16 %v1686, %v1684
        %v1737 = vpack.c.b16 %v1687, %v1685
        %v1738 = vpack.c.b16 %v1690, %v1688
        %v1739 = vpack.c.b16 %v1691, %v1689
        %v1740 = vpack.c.b16 %v1694, %v1692
        %v1741 = vpack.c.b16 %v1695, %v1693
        %v1742 = vpack.c.b16 %v1698, %v1696
        %v1743 = vpack.c.b16 %v1699, %v1697
        %v1744 = vpack.c.b16 %v1702, %v1700
        %v1745 = vpack.c.b16 %v1703, %v1701
        %v1746 = vpack.c.b16 %v1706, %v1704
        %v1747 = vpack.c.b16 %v1707, %v1705
        %v1748 = vpack.c.b16 %v1710, %v1708
        %v1749 = vpack.c.b16 %v1711, %v1709
        %v1750 = vpack.c.b16 %v1714, %v1712
        %v1751 = vpack.c.b16 %v1715, %v1713
        %v1752 = vpack.c.b16 %v1718, %v1716
        %v1753 = vpack.c.b16 %v1719, %v1717
        %v1754 = vpack.c.b16 %v1722, %v1720
        %v1755 = vpack.c.b16 %v1723, %v1721
        %1788 = vmatpush.bf16.msra.mxu0 %v1738
        %1789 = vmatpush.bf16.msra.mxu0 %v1736
        %1790 = vmatpush.bf16.msra.mxu0 %v1734
        %1791 = vmatpush.bf16.msra.mxu0 %v1732
        %1792 = vmatpush.bf16.msra.mxu0 %v1730
        %1793 = vmatpush.bf16.msra.mxu0 %v1728
        %1794 = vmatpush.bf16.msra.mxu0 %v1726
        %1795 = vmatpush.bf16.msra.mxu0 %v1724
        %1796 = vmatmul.bf16.gmra.mxu0 %v1624
        %v1797 = vpop.f32.mrf.mxu0
        %v1798 = vadd.f32 0.0, %v1797
        %v1799 = vpop.f32.mrf.mxu0
        %1800 = vdwg.mxu0
        %1801 = vmatpush.bf16.msra.mxu0 %v1754
        %1802 = vmatpush.bf16.msra.mxu0 %v1752
        %1803 = vmatpush.bf16.msra.mxu0 %v1750
        %1804 = vmatpush.bf16.msra.mxu0 %v1748
        %1805 = vmatpush.bf16.msra.mxu0 %v1746
        %1806 = vmatpush.bf16.msra.mxu0 %v1744
        %1807 = vmatpush.bf16.msra.mxu0 %v1742
        %1808 = vmatpush.bf16.msra.mxu0 %v1740
        %1809 = vmatmul.bf16.gmra.mxu0 %v1625
        %v1810 = vpop.f32.mrf.mxu0
        %v1811 = vadd.f32 %v1798, %v1810
        %v1812 = vpop.f32.mrf.mxu0
        %1813 = vdwg.mxu0
        %1814 = vmatpush.bf16.msra.mxu0 %v1739
        %1815 = vmatpush.bf16.msra.mxu0 %v1737
        %1816 = vmatpush.bf16.msra.mxu0 %v1735
        %1817 = vmatpush.bf16.msra.mxu0 %v1733
        %1818 = vmatpush.bf16.msra.mxu0 %v1731
        %1819 = vmatpush.bf16.msra.mxu0 %v1729
        %1820 = vmatpush.bf16.msra.mxu0 %v1727
        %1821 = vmatpush.bf16.msra.mxu0 %v1725
        %1822 = vmatmul.bf16.gmra.mxu0 %v1624
        %v1823 = vpop.f32.mrf.mxu0
        %v1824 = vadd.f32 0.0, %v1823
        %v1825 = vpop.f32.mrf.mxu0
        %1826 = vdwg.mxu0
        %1827 = vmatpush.bf16.msra.mxu0 %v1755
        %1828 = vmatpush.bf16.msra.mxu0 %v1753
        %1829 = vmatpush.bf16.msra.mxu0 %v1751
        %1830 = vmatpush.bf16.msra.mxu0 %v1749
        %1831 = vmatpush.bf16.msra.mxu0 %v1747
        %1832 = vmatpush.bf16.msra.mxu0 %v1745
        %1833 = vmatpush.bf16.msra.mxu0 %v1743
        %1834 = vmatpush.bf16.msra.mxu0 %v1741
        %1835 = vmatmul.bf16.gmra.mxu0 %v1625
        %v1836 = vpop.f32.mrf.mxu0
        %v1837 = vadd.f32 %v1824, %v1836
        %v1838 = vpop.f32.mrf.mxu0
        %1839 = vdwg.mxu0
        %v1840 = vadd.f32 %v1554, %v1811
        %v1841 = vadd.f32 %v1580, %v1837
        %v1842 = vld [vmem:[%s4] sm:$0x3]
        %v1844 = vperm.slane %v1842, 0
        %v1845 = vperm.slane %v1842, 1
        %v1848 = vadd.f32 %v1840, %v1844
        %v1849 = vadd.f32 %v1841, %v1845
        %v1850 = vmax.f32 %v1848, 0.0
        %v1851 = vmax.f32 %v1849, 0.0
        %v1854 = vrot.slane %v1850, 1
        %v1855 = vrot.slane %v1851, 1
        %v1858 = vmax.f32 %v1850, %v1854
        %v1859 = vmax.f32 %v1851, %v1855
        %1861 = vrot.lane.b32.xlu0 %v1858, 64
        %v1862 = vpop.permute.xlu0 %1861
        %v1864 = vmax.f32 %v1858, %v1862
        %1865 = vst.msk [vmem:[#allocation4 + $0x1] sm:$0x1] %vm891, %v1864
        %1867 = vrot.lane.b32.xlu0 %v1859, 64
        %v1868 = vpop.permute.xlu0 %1867
        %v1870 = vmax.f32 %v1859, %v1868
        %1872 = vrot.lane.b32.xlu0 %v1870, 64
        %v1873 = vpop.permute.xlu0 %1872
        %1875 = vst.msk [vmem:[#allocation4 + $0x1] sm:$0x1] %vm902, %v1873
        %vm1876 = vcmask 518146
        %1877 = vst.msk [vmem:[#allocation4] sm:$0x4] %vm1876, %v1864
        %vm1878 = vcmask 1042946
        %1879 = vst.msk [vmem:[#allocation4] sm:$0x4] %vm1878, %v1873
        %vm1880 = vcmask 520196
        %1881 = vst.msk [vmem:[#allocation4 - $0x1] sm:$0x10] %vm1880, %v1864
        %vm1882 = vcmask 1044996
        %1883 = vst.msk [vmem:[#allocation4 - $0x1] sm:$0x10] %vm1882, %v1873
        %vm1884 = vcmask 522246
        %1885 = vst.msk [vmem:[#allocation4 - $0x2] sm:$0x40] %vm1884, %v1864
        %vm1886 = vcmask 1047046
        %1887 = vst.msk [vmem:[#allocation4 - $0x2] sm:$0x40] %vm1886, %v1873
        %v1888 = vld [vmem:[#allocation4] sm:$0xf]
        %v1889 = vpack.c.bf16 %v1888, %v1888
        %v1890 = vld [vmem:[#allocation9] sm:$0xf]
        %v1891 = vld [vmem:[#allocation9 + $0x4] sm:$0xf]
        %v1892 = vld [vmem:[#allocation9 + $0x8] sm:$0xf]
        %v1893 = vld [vmem:[#allocation9 + $0xc] sm:$0xf]
        %v1894 = vld [vmem:[#allocation9 + $0x10] sm:$0xf]
        %v1895 = vld [vmem:[#allocation9 + $0x14] sm:$0xf]
        %v1896 = vld [vmem:[#allocation9 + $0x18] sm:$0xf]
        %v1897 = vld [vmem:[#allocation9 + $0x1c] sm:$0xf]
        %v1898 = vld [vmem:[#allocation9 + $0x20] sm:$0xf]
        %v1899 = vld [vmem:[#allocation9 + $0x24] sm:$0xf]
        %v1900 = vld [vmem:[#allocation9 + $0x28] sm:$0xf]
        %v1901 = vld [vmem:[#allocation9 + $0x2c] sm:$0xf]
        %v1902 = vld [vmem:[#allocation9 + $0x30] sm:$0xf]
        %v1903 = vld [vmem:[#allocation9 + $0x34] sm:$0xf]
        %v1904 = vld [vmem:[#allocation9 + $0x38] sm:$0xf]
        %v1905 = vld [vmem:[#allocation9 + $0x3c] sm:$0xf]
        %v1906 = vld [vmem:[#allocation4 + $0x1] sm:$0xf]
        %v1907 = vpack.c.bf16 %v1906, %v1906
        %s1908 = scalar_lea.vmem [#allocation9], 64
        %v1909 = vld [vmem:[%s1908] sm:$0xf]
        %v1910 = vld [vmem:[%s1908 + $0x4] sm:$0xf]
        %v1911 = vld [vmem:[%s1908 + $0x8] sm:$0xf]
        %v1912 = vld [vmem:[%s1908 + $0xc] sm:$0xf]
        %v1913 = vld [vmem:[%s1908 + $0x10] sm:$0xf]
        %v1914 = vld [vmem:[%s1908 + $0x14] sm:$0xf]
        %v1915 = vld [vmem:[%s1908 + $0x18] sm:$0xf]
        %v1916 = vld [vmem:[%s1908 + $0x1c] sm:$0xf]
        %v1917 = vld [vmem:[%s1908 + $0x20] sm:$0xf]
        %v1918 = vld [vmem:[%s1908 + $0x24] sm:$0xf]
        %v1919 = vld [vmem:[%s1908 + $0x28] sm:$0xf]
        %v1920 = vld [vmem:[%s1908 + $0x2c] sm:$0xf]
        %v1921 = vld [vmem:[%s1908 + $0x30] sm:$0xf]
        %v1922 = vld [vmem:[%s1908 + $0x34] sm:$0xf]
        %v1923 = vld [vmem:[%s1908 + $0x38] sm:$0xf]
        %v1924 = vld [vmem:[%s1908 + $0x3c] sm:$0xf]
        %v1941 = vunpack.c.l.b16 %v1909
        %v1942 = vunpack.c.l.b16 %v1910
        %v1943 = vunpack.c.l.b16 %v1911
        %v1944 = vunpack.c.l.b16 %v1912
        %v1945 = vunpack.c.l.b16 %v1913
        %v1946 = vunpack.c.l.b16 %v1914
        %v1947 = vunpack.c.l.b16 %v1915
        %v1948 = vunpack.c.l.b16 %v1916
        %v1949 = vunpack.c.l.b16 %v1917
        %v1950 = vunpack.c.l.b16 %v1918
        %v1951 = vunpack.c.l.b16 %v1919
        %v1952 = vunpack.c.l.b16 %v1920
        %v1953 = vunpack.c.l.b16 %v1921
        %v1954 = vunpack.c.l.b16 %v1922
        %v1955 = vunpack.c.l.b16 %v1923
        %v1956 = vunpack.c.l.b16 %v1924
        %v1957 = vpack.c.b16 %v1942, %v1941
        %v1958 = vpack.c.b16 %v1944, %v1943
        %v1959 = vpack.c.b16 %v1946, %v1945
        %v1960 = vpack.c.b16 %v1948, %v1947
        %v1961 = vpack.c.b16 %v1950, %v1949
        %v1962 = vpack.c.b16 %v1952, %v1951
        %v1963 = vpack.c.b16 %v1954, %v1953
        %v1964 = vpack.c.b16 %v1956, %v1955
        %1973 = vmatpush.bf16.msra.mxu0 %v1964
        %1974 = vmatpush.bf16.msra.mxu0 %v1963
        %1975 = vmatpush.bf16.msra.mxu0 %v1962
        %1976 = vmatpush.bf16.msra.mxu0 %v1961
        %1977 = vmatpush.bf16.msra.mxu0 %v1960
        %1978 = vmatpush.bf16.msra.mxu0 %v1959
        %1979 = vmatpush.bf16.msra.mxu0 %v1958
        %1980 = vmatpush.bf16.msra.mxu0 %v1957
        %1981 = vmatmul.bf16.gmra.mxu0 %v1907
        %v1982 = vpop.f32.mrf.mxu0
        %v1983 = vadd.f32 0.0, %v1982
        %v1984 = vpop.f32.mrf.mxu0
        %1985 = vdwg.mxu0
        %v2002 = vunpack.c.l.b16 %v1890
        %v2003 = vunpack.c.l.b16 %v1891
        %v2004 = vunpack.c.l.b16 %v1892
        %v2005 = vunpack.c.l.b16 %v1893
        %v2006 = vunpack.c.l.b16 %v1894
        %v2007 = vunpack.c.l.b16 %v1895
        %v2008 = vunpack.c.l.b16 %v1896
        %v2009 = vunpack.c.l.b16 %v1897
        %v2010 = vunpack.c.l.b16 %v1898
        %v2011 = vunpack.c.l.b16 %v1899
        %v2012 = vunpack.c.l.b16 %v1900
        %v2013 = vunpack.c.l.b16 %v1901
        %v2014 = vunpack.c.l.b16 %v1902
        %v2015 = vunpack.c.l.b16 %v1903
        %v2016 = vunpack.c.l.b16 %v1904
        %v2017 = vunpack.c.l.b16 %v1905
        %v2018 = vpack.c.b16 %v2003, %v2002
        %v2019 = vpack.c.b16 %v2005, %v2004
        %v2020 = vpack.c.b16 %v2007, %v2006
        %v2021 = vpack.c.b16 %v2009, %v2008
        %v2022 = vpack.c.b16 %v2011, %v2010
        %v2023 = vpack.c.b16 %v2013, %v2012
        %v2024 = vpack.c.b16 %v2015, %v2014
        %v2025 = vpack.c.b16 %v2017, %v2016
        %2034 = vmatpush.bf16.msra.mxu0 %v2025
        %2035 = vmatpush.bf16.msra.mxu0 %v2024
        %2036 = vmatpush.bf16.msra.mxu0 %v2023
        %2037 = vmatpush.bf16.msra.mxu0 %v2022
        %2038 = vmatpush.bf16.msra.mxu0 %v2021
        %2039 = vmatpush.bf16.msra.mxu0 %v2020
        %2040 = vmatpush.bf16.msra.mxu0 %v2019
        %2041 = vmatpush.bf16.msra.mxu0 %v2018
        %2042 = vmatmul.bf16.gmra.mxu0 %v1889
        %v2043 = vpop.f32.mrf.mxu0
        %v2044 = vadd.f32 %v1983, %v2043
        %v2045 = vpop.f32.mrf.mxu0
        %2046 = vdwg.mxu0
        %v2047 = vld [vmem:[#allocation4 + $0x2] sm:$0xf]
        %v2048 = vpack.c.bf16 %v2047, %v2047
        %s2049 = scalar_lea.vmem [#allocation9], 128
        %v2050 = vld [vmem:[%s2049] sm:$0xf]
        %v2051 = vld [vmem:[%s2049 + $0x4] sm:$0xf]
        %v2052 = vld [vmem:[%s2049 + $0x8] sm:$0xf]
        %v2053 = vld [vmem:[%s2049 + $0xc] sm:$0xf]
        %v2054 = vld [vmem:[%s2049 + $0x10] sm:$0xf]
        %v2055 = vld [vmem:[%s2049 + $0x14] sm:$0xf]
        %v2056 = vld [vmem:[%s2049 + $0x18] sm:$0xf]
        %v2057 = vld [vmem:[%s2049 + $0x1c] sm:$0xf]
        %v2058 = vld [vmem:[%s2049 + $0x20] sm:$0xf]
        %v2059 = vld [vmem:[%s2049 + $0x24] sm:$0xf]
        %v2060 = vld [vmem:[%s2049 + $0x28] sm:$0xf]
        %v2061 = vld [vmem:[%s2049 + $0x2c] sm:$0xf]
        %v2062 = vld [vmem:[%s2049 + $0x30] sm:$0xf]
        %v2063 = vld [vmem:[%s2049 + $0x34] sm:$0xf]
        %v2064 = vld [vmem:[%s2049 + $0x38] sm:$0xf]
        %v2065 = vld [vmem:[%s2049 + $0x3c] sm:$0xf]
        %v2082 = vunpack.c.l.b16 %v2050
        %v2083 = vunpack.c.l.b16 %v2051
        %v2084 = vunpack.c.l.b16 %v2052
        %v2085 = vunpack.c.l.b16 %v2053
        %v2086 = vunpack.c.l.b16 %v2054
        %v2087 = vunpack.c.l.b16 %v2055
        %v2088 = vunpack.c.l.b16 %v2056
        %v2089 = vunpack.c.l.b16 %v2057
        %v2090 = vunpack.c.l.b16 %v2058
        %v2091 = vunpack.c.l.b16 %v2059
        %v2092 = vunpack.c.l.b16 %v2060
        %v2093 = vunpack.c.l.b16 %v2061
        %v2094 = vunpack.c.l.b16 %v2062
        %v2095 = vunpack.c.l.b16 %v2063
        %v2096 = vunpack.c.l.b16 %v2064
        %v2097 = vunpack.c.l.b16 %v2065
        %v2098 = vpack.c.b16 %v2083, %v2082
        %v2099 = vpack.c.b16 %v2085, %v2084
        %v2100 = vpack.c.b16 %v2087, %v2086
        %v2101 = vpack.c.b16 %v2089, %v2088
        %v2102 = vpack.c.b16 %v2091, %v2090
        %v2103 = vpack.c.b16 %v2093, %v2092
        %v2104 = vpack.c.b16 %v2095, %v2094
        %v2105 = vpack.c.b16 %v2097, %v2096
        %2114 = vmatpush.bf16.msra.mxu0 %v2105
        %2115 = vmatpush.bf16.msra.mxu0 %v2104
        %2116 = vmatpush.bf16.msra.mxu0 %v2103
        %2117 = vmatpush.bf16.msra.mxu0 %v2102
        %2118 = vmatpush.bf16.msra.mxu0 %v2101
        %2119 = vmatpush.bf16.msra.mxu0 %v2100
        %2120 = vmatpush.bf16.msra.mxu0 %v2099
        %2121 = vmatpush.bf16.msra.mxu0 %v2098
        %2122 = vmatmul.bf16.gmra.mxu0 %v2048
        %v2123 = vpop.f32.mrf.mxu0
        %v2124 = vadd.f32 0.0, %v2123
        %v2125 = vpop.f32.mrf.mxu0
        %2126 = vdwg.mxu0
        %v2127 = vadd.f32 %v2044, %v2124
        %v2128 = vld [vmem:[%s6] sm:$0x1]
        %v2130 = vperm.slane %v2128, 0
        %v2132 = vadd.f32 %v2127, %v2130
        %v2133 = vmax.f32 %v2132, 0.0
        %2134 = vst [vmem:[#allocation5 + $0x1] sm:$0xf] %v2133
        %v2135 = vld [vmem:[#allocation5] sm:$0xf]
        %v2136 = vpack.c.bf16 %v2135, %v2135
        %v2137 = vld [vmem:[#allocation11] sm:$0xf]
        %v2138 = vld [vmem:[#allocation11 + $0x4] sm:$0xf]
        %v2139 = vld [vmem:[#allocation11 + $0x8] sm:$0xf]
        %v2140 = vld [vmem:[#allocation11 + $0xc] sm:$0xf]
        %v2141 = vld [vmem:[#allocation11 + $0x10] sm:$0xf]
        %v2142 = vld [vmem:[#allocation11 + $0x14] sm:$0xf]
        %v2143 = vld [vmem:[#allocation11 + $0x18] sm:$0xf]
        %v2144 = vld [vmem:[#allocation11 + $0x1c] sm:$0xf]
        %v2145 = vld [vmem:[#allocation11 + $0x20] sm:$0xf]
        %v2146 = vld [vmem:[#allocation11 + $0x24] sm:$0xf]
        %v2147 = vld [vmem:[#allocation11 + $0x28] sm:$0xf]
        %v2148 = vld [vmem:[#allocation11 + $0x2c] sm:$0xf]
        %v2149 = vld [vmem:[#allocation11 + $0x30] sm:$0xf]
        %v2150 = vld [vmem:[#allocation11 + $0x34] sm:$0xf]
        %v2151 = vld [vmem:[#allocation11 + $0x38] sm:$0xf]
        %v2152 = vld [vmem:[#allocation11 + $0x3c] sm:$0xf]
        %v2153 = vld [vmem:[#allocation5 + $0x1] sm:$0xf]
        %v2154 = vpack.c.bf16 %v2153, %v2153
        %s2155 = scalar_lea.vmem [#allocation11], 64
        %v2156 = vld [vmem:[%s2155] sm:$0xf]
        %v2157 = vld [vmem:[%s2155 + $0x4] sm:$0xf]
        %v2158 = vld [vmem:[%s2155 + $0x8] sm:$0xf]
        %v2159 = vld [vmem:[%s2155 + $0xc] sm:$0xf]
        %v2160 = vld [vmem:[%s2155 + $0x10] sm:$0xf]
        %v2161 = vld [vmem:[%s2155 + $0x14] sm:$0xf]
        %v2162 = vld [vmem:[%s2155 + $0x18] sm:$0xf]
        %v2163 = vld [vmem:[%s2155 + $0x1c] sm:$0xf]
        %v2164 = vld [vmem:[%s2155 + $0x20] sm:$0xf]
        %v2165 = vld [vmem:[%s2155 + $0x24] sm:$0xf]
        %v2166 = vld [vmem:[%s2155 + $0x28] sm:$0xf]
        %v2167 = vld [vmem:[%s2155 + $0x2c] sm:$0xf]
        %v2168 = vld [vmem:[%s2155 + $0x30] sm:$0xf]
        %v2169 = vld [vmem:[%s2155 + $0x34] sm:$0xf]
        %v2170 = vld [vmem:[%s2155 + $0x38] sm:$0xf]
        %v2171 = vld [vmem:[%s2155 + $0x3c] sm:$0xf]
        %v2188 = vunpack.c.l.b16 %v2156
        %v2189 = vunpack.c.l.b16 %v2157
        %v2190 = vunpack.c.l.b16 %v2158
        %v2191 = vunpack.c.l.b16 %v2159
        %v2192 = vunpack.c.l.b16 %v2160
        %v2193 = vunpack.c.l.b16 %v2161
        %v2194 = vunpack.c.l.b16 %v2162
        %v2195 = vunpack.c.l.b16 %v2163
        %v2196 = vunpack.c.l.b16 %v2164
        %v2197 = vunpack.c.l.b16 %v2165
        %v2198 = vunpack.c.l.b16 %v2166
        %v2199 = vunpack.c.l.b16 %v2167
        %v2200 = vunpack.c.l.b16 %v2168
        %v2201 = vunpack.c.l.b16 %v2169
        %v2202 = vunpack.c.l.b16 %v2170
        %v2203 = vunpack.c.l.b16 %v2171
        %v2204 = vpack.c.b16 %v2189, %v2188
        %v2205 = vpack.c.b16 %v2191, %v2190
        %v2206 = vpack.c.b16 %v2193, %v2192
        %v2207 = vpack.c.b16 %v2195, %v2194
        %v2208 = vpack.c.b16 %v2197, %v2196
        %v2209 = vpack.c.b16 %v2199, %v2198
        %v2210 = vpack.c.b16 %v2201, %v2200
        %v2211 = vpack.c.b16 %v2203, %v2202
        %2220 = vmatpush.bf16.msra.mxu0 %v2211
        %2221 = vmatpush.bf16.msra.mxu0 %v2210
        %2222 = vmatpush.bf16.msra.mxu0 %v2209
        %2223 = vmatpush.bf16.msra.mxu0 %v2208
        %2224 = vmatpush.bf16.msra.mxu0 %v2207
        %2225 = vmatpush.bf16.msra.mxu0 %v2206
        %2226 = vmatpush.bf16.msra.mxu0 %v2205
        %2227 = vmatpush.bf16.msra.mxu0 %v2204
        %2228 = vmatmul.bf16.gmra.mxu0 %v2154
        %v2229 = vpop.f32.mrf.mxu0
        %v2230 = vadd.f32 0.0, %v2229
        %v2231 = vpop.f32.mrf.mxu0
        %2232 = vdwg.mxu0
        %v2249 = vunpack.c.l.b16 %v2137
        %v2250 = vunpack.c.l.b16 %v2138
        %v2251 = vunpack.c.l.b16 %v2139
        %v2252 = vunpack.c.l.b16 %v2140
        %v2253 = vunpack.c.l.b16 %v2141
        %v2254 = vunpack.c.l.b16 %v2142
        %v2255 = vunpack.c.l.b16 %v2143
        %v2256 = vunpack.c.l.b16 %v2144
        %v2257 = vunpack.c.l.b16 %v2145
        %v2258 = vunpack.c.l.b16 %v2146
        %v2259 = vunpack.c.l.b16 %v2147
        %v2260 = vunpack.c.l.b16 %v2148
        %v2261 = vunpack.c.l.b16 %v2149
        %v2262 = vunpack.c.l.b16 %v2150
        %v2263 = vunpack.c.l.b16 %v2151
        %v2264 = vunpack.c.l.b16 %v2152
        %v2265 = vpack.c.b16 %v2250, %v2249
        %v2266 = vpack.c.b16 %v2252, %v2251
        %v2267 = vpack.c.b16 %v2254, %v2253
        %v2268 = vpack.c.b16 %v2256, %v2255
        %v2269 = vpack.c.b16 %v2258, %v2257
        %v2270 = vpack.c.b16 %v2260, %v2259
        %v2271 = vpack.c.b16 %v2262, %v2261
        %v2272 = vpack.c.b16 %v2264, %v2263
        %2281 = vmatpush.bf16.msra.mxu0 %v2272
        %2282 = vmatpush.bf16.msra.mxu0 %v2271
        %2283 = vmatpush.bf16.msra.mxu0 %v2270
        %2284 = vmatpush.bf16.msra.mxu0 %v2269
        %2285 = vmatpush.bf16.msra.mxu0 %v2268
        %2286 = vmatpush.bf16.msra.mxu0 %v2267
        %2287 = vmatpush.bf16.msra.mxu0 %v2266
        %2288 = vmatpush.bf16.msra.mxu0 %v2265
        %2289 = vmatmul.bf16.gmra.mxu0 %v2136
        %v2290 = vpop.f32.mrf.mxu0
        %v2291 = vadd.f32 %v2230, %v2290
        %v2292 = vpop.f32.mrf.mxu0
        %2293 = vdwg.mxu0
        %v2294 = vld [vmem:[#allocation5 + $0x2] sm:$0xf]
        %v2295 = vpack.c.bf16 %v2294, %v2294
        %s2296 = scalar_lea.vmem [#allocation11], 128
        %v2297 = vld [vmem:[%s2296] sm:$0xf]
        %v2298 = vld [vmem:[%s2296 + $0x4] sm:$0xf]
        %v2299 = vld [vmem:[%s2296 + $0x8] sm:$0xf]
        %v2300 = vld [vmem:[%s2296 + $0xc] sm:$0xf]
        %v2301 = vld [vmem:[%s2296 + $0x10] sm:$0xf]
        %v2302 = vld [vmem:[%s2296 + $0x14] sm:$0xf]
        %v2303 = vld [vmem:[%s2296 + $0x18] sm:$0xf]
        %v2304 = vld [vmem:[%s2296 + $0x1c] sm:$0xf]
        %v2305 = vld [vmem:[%s2296 + $0x20] sm:$0xf]
        %v2306 = vld [vmem:[%s2296 + $0x24] sm:$0xf]
        %v2307 = vld [vmem:[%s2296 + $0x28] sm:$0xf]
        %v2308 = vld [vmem:[%s2296 + $0x2c] sm:$0xf]
        %v2309 = vld [vmem:[%s2296 + $0x30] sm:$0xf]
        %v2310 = vld [vmem:[%s2296 + $0x34] sm:$0xf]
        %v2311 = vld [vmem:[%s2296 + $0x38] sm:$0xf]
        %v2312 = vld [vmem:[%s2296 + $0x3c] sm:$0xf]
        %v2329 = vunpack.c.l.b16 %v2297
        %v2330 = vunpack.c.l.b16 %v2298
        %v2331 = vunpack.c.l.b16 %v2299
        %v2332 = vunpack.c.l.b16 %v2300
        %v2333 = vunpack.c.l.b16 %v2301
        %v2334 = vunpack.c.l.b16 %v2302
        %v2335 = vunpack.c.l.b16 %v2303
        %v2336 = vunpack.c.l.b16 %v2304
        %v2337 = vunpack.c.l.b16 %v2305
        %v2338 = vunpack.c.l.b16 %v2306
        %v2339 = vunpack.c.l.b16 %v2307
        %v2340 = vunpack.c.l.b16 %v2308
        %v2341 = vunpack.c.l.b16 %v2309
        %v2342 = vunpack.c.l.b16 %v2310
        %v2343 = vunpack.c.l.b16 %v2311
        %v2344 = vunpack.c.l.b16 %v2312
        %v2345 = vpack.c.b16 %v2330, %v2329
        %v2346 = vpack.c.b16 %v2332, %v2331
        %v2347 = vpack.c.b16 %v2334, %v2333
        %v2348 = vpack.c.b16 %v2336, %v2335
        %v2349 = vpack.c.b16 %v2338, %v2337
        %v2350 = vpack.c.b16 %v2340, %v2339
        %v2351 = vpack.c.b16 %v2342, %v2341
        %v2352 = vpack.c.b16 %v2344, %v2343
        %2361 = vmatpush.bf16.msra.mxu0 %v2352
        %2362 = vmatpush.bf16.msra.mxu0 %v2351
        %2363 = vmatpush.bf16.msra.mxu0 %v2350
        %2364 = vmatpush.bf16.msra.mxu0 %v2349
        %2365 = vmatpush.bf16.msra.mxu0 %v2348
        %2366 = vmatpush.bf16.msra.mxu0 %v2347
        %2367 = vmatpush.bf16.msra.mxu0 %v2346
        %2368 = vmatpush.bf16.msra.mxu0 %v2345
        %2369 = vmatmul.bf16.gmra.mxu0 %v2295
        %v2370 = vpop.f32.mrf.mxu0
        %v2371 = vadd.f32 0.0, %v2370
        %v2372 = vpop.f32.mrf.mxu0
        %2373 = vdwg.mxu0
        %v2374 = vadd.f32 %v2291, %v2371
        %v2375 = vld [vmem:[%s8] sm:$0x1]
        %v2377 = vperm.slane %v2375, 0
        %v2379 = vadd.f32 %v2374, %v2377
        %v2380 = vmax.f32 %v2379, 0.0
        %v2381 = vld [vmem:[%s10] sm:$0x1]
        %v2382 = vpack.c.bf16 %v2380, %v2380
        %v2383 = vld [vmem:[#allocation12] sm:$0xf]
        %v2384 = vld [vmem:[#allocation12 + $0x4] sm:$0xf]
        %v2385 = vld [vmem:[#allocation12 + $0x8] sm:$0xf]
        %v2386 = vld [vmem:[#allocation12 + $0xc] sm:$0xf]
        %v2387 = vld [vmem:[#allocation12 + $0x10] sm:$0xf]
        %v2388 = vld [vmem:[#allocation12 + $0x14] sm:$0xf]
        %v2389 = vld [vmem:[#allocation12 + $0x18] sm:$0xf]
        %v2390 = vld [vmem:[#allocation12 + $0x1c] sm:$0xf]
        %v2391 = vld [vmem:[#allocation12 + $0x20] sm:$0xf]
        %v2392 = vld [vmem:[#allocation12 + $0x24] sm:$0xf]
        %v2393 = vld [vmem:[#allocation12 + $0x28] sm:$0xf]
        %v2394 = vld [vmem:[#allocation12 + $0x2c] sm:$0xf]
        %v2395 = vld [vmem:[#allocation12 + $0x30] sm:$0xf]
        %v2396 = vld [vmem:[#allocation12 + $0x34] sm:$0xf]
        %v2397 = vld [vmem:[#allocation12 + $0x38] sm:$0xf]
        %v2398 = vld [vmem:[#allocation12 + $0x3c] sm:$0xf]
        %v2415 = vunpack.c.l.b16 %v2383
        %v2416 = vunpack.c.l.b16 %v2384
        %v2417 = vunpack.c.l.b16 %v2385
        %v2418 = vunpack.c.l.b16 %v2386
        %v2419 = vunpack.c.l.b16 %v2387
        %v2420 = vunpack.c.l.b16 %v2388
        %v2421 = vunpack.c.l.b16 %v2389
        %v2422 = vunpack.c.l.b16 %v2390
        %v2423 = vunpack.c.l.b16 %v2391
        %v2424 = vunpack.c.l.b16 %v2392
        %v2425 = vunpack.c.l.b16 %v2393
        %v2426 = vunpack.c.l.b16 %v2394
        %v2427 = vunpack.c.l.b16 %v2395
        %v2428 = vunpack.c.l.b16 %v2396
        %v2429 = vunpack.c.l.b16 %v2397
        %v2430 = vunpack.c.l.b16 %v2398
        %v2431 = vpack.c.b16 %v2416, %v2415
        %v2432 = vpack.c.b16 %v2418, %v2417
        %v2433 = vpack.c.b16 %v2420, %v2419
        %v2434 = vpack.c.b16 %v2422, %v2421
        %v2435 = vpack.c.b16 %v2424, %v2423
        %v2436 = vpack.c.b16 %v2426, %v2425
        %v2437 = vpack.c.b16 %v2428, %v2427
        %v2438 = vpack.c.b16 %v2430, %v2429
        %2447 = vmatpush.bf16.msra.mxu0 %v2438
        %2448 = vmatpush.bf16.msra.mxu0 %v2437
        %2449 = vmatpush.bf16.msra.mxu0 %v2436
        %2450 = vmatpush.bf16.msra.mxu0 %v2435
        %2451 = vmatpush.bf16.msra.mxu0 %v2434
        %2452 = vmatpush.bf16.msra.mxu0 %v2433
        %2453 = vmatpush.bf16.msra.mxu0 %v2432
        %2454 = vmatpush.bf16.msra.mxu0 %v2431
        %2455 = vmatmul.bf16.gmra.mxu0 %v2382
        %v2456 = vpop.f32.mrf.mxu0
        %v2457 = vadd.f32 0.0, %v2456
        %v2458 = vpop.f32.mrf.mxu0
        %2459 = vdwg.mxu0
        %v2460 = vadd.f32 %v2381, %v2457
        %v2461 = vld [vmem:[#allocation12 + $0x40] sm:$0xf]
        %v2462 = vld [vmem:[#allocation12 + $0x44] sm:$0xf]
        %v2463 = vld [vmem:[#allocation12 + $0x48] sm:$0xf]
        %v2464 = vld [vmem:[#allocation12 + $0x4c] sm:$0xf]
        %v2465 = vld [vmem:[#allocation12 + $0x50] sm:$0xf]
        %v2466 = vld [vmem:[#allocation12 + $0x54] sm:$0xf]
        %v2467 = vld [vmem:[#allocation12 + $0x58] sm:$0xf]
        %v2468 = vld [vmem:[#allocation12 + $0x5c] sm:$0xf]
        %v2469 = vld [vmem:[#allocation12 + $0x60] sm:$0xf]
        %v2470 = vld [vmem:[#allocation12 + $0x64] sm:$0xf]
        %v2471 = vld [vmem:[#allocation12 + $0x68] sm:$0xf]
        %v2472 = vld [vmem:[#allocation12 + $0x6c] sm:$0xf]
        %v2473 = vld [vmem:[#allocation12 + $0x70] sm:$0xf]
        %v2474 = vld [vmem:[#allocation12 + $0x74] sm:$0xf]
        %v2475 = vld [vmem:[#allocation12 + $0x78] sm:$0xf]
        %v2476 = vld [vmem:[#allocation12 + $0x7c] sm:$0xf]
        %v2478 = vshrl.u32 %v2382, 16
        %v2497 = vunpack.c.l.b16 %v2461
        %v2498 = vunpack.c.l.b16 %v2462
        %v2499 = vunpack.c.l.b16 %v2463
        %v2500 = vunpack.c.l.b16 %v2464
        %v2501 = vunpack.c.l.b16 %v2465
        %v2502 = vunpack.c.l.b16 %v2466
        %v2503 = vunpack.c.l.b16 %v2467
        %v2504 = vunpack.c.l.b16 %v2468
        %v2505 = vunpack.c.l.b16 %v2469
        %v2506 = vunpack.c.l.b16 %v2470
        %v2507 = vunpack.c.l.b16 %v2471
        %v2508 = vunpack.c.l.b16 %v2472
        %v2509 = vunpack.c.l.b16 %v2473
        %v2510 = vunpack.c.l.b16 %v2474
        %v2511 = vunpack.c.l.b16 %v2475
        %v2512 = vunpack.c.l.b16 %v2476
        %v2513 = vpack.c.b16 %v2498, %v2497
        %v2514 = vpack.c.b16 %v2500, %v2499
        %v2515 = vpack.c.b16 %v2502, %v2501
        %v2516 = vpack.c.b16 %v2504, %v2503
        %v2517 = vpack.c.b16 %v2506, %v2505
        %v2518 = vpack.c.b16 %v2508, %v2507
        %v2519 = vpack.c.b16 %v2510, %v2509
        %v2520 = vpack.c.b16 %v2512, %v2511
        %2529 = vmatpush.bf16.msra.mxu0 %v2520
        %2530 = vmatpush.bf16.msra.mxu0 %v2519
        %2531 = vmatpush.bf16.msra.mxu0 %v2518
        %2532 = vmatpush.bf16.msra.mxu0 %v2517
        %2533 = vmatpush.bf16.msra.mxu0 %v2516
        %2534 = vmatpush.bf16.msra.mxu0 %v2515
        %2535 = vmatpush.bf16.msra.mxu0 %v2514
        %2536 = vmatpush.bf16.msra.mxu0 %v2513
        %2537 = vmatmul.bf16.gmra.mxu0 %v2478
        %v2538 = vpop.f32.mrf.mxu0
        %v2539 = vadd.f32 0.0, %v2538
        %v2540 = vpop.f32.mrf.mxu0
        %2541 = vdwg.mxu0
        %v2542 = vadd.f32 %v2460, %v2539
        %v2543 = vld [vmem:[#allocation12 + $0x80] sm:$0xf]
        %v2544 = vld [vmem:[#allocation12 + $0x84] sm:$0xf]
        %v2545 = vld [vmem:[#allocation12 + $0x88] sm:$0xf]
        %v2546 = vld [vmem:[#allocation12 + $0x8c] sm:$0xf]
        %v2547 = vld [vmem:[#allocation12 + $0x90] sm:$0xf]
        %v2548 = vld [vmem:[#allocation12 + $0x94] sm:$0xf]
        %v2549 = vld [vmem:[#allocation12 + $0x98] sm:$0xf]
        %v2550 = vld [vmem:[#allocation12 + $0x9c] sm:$0xf]
        %v2551 = vld [vmem:[#allocation12 + $0xa0] sm:$0xf]
        %v2552 = vld [vmem:[#allocation12 + $0xa4] sm:$0xf]
        %v2553 = vld [vmem:[#allocation12 + $0xa8] sm:$0xf]
        %v2554 = vld [vmem:[#allocation12 + $0xac] sm:$0xf]
        %v2555 = vld [vmem:[#allocation12 + $0xb0] sm:$0xf]
        %v2556 = vld [vmem:[#allocation12 + $0xb4] sm:$0xf]
        %v2557 = vld [vmem:[#allocation12 + $0xb8] sm:$0xf]
        %v2558 = vld [vmem:[#allocation12 + $0xbc] sm:$0xf]
        %v2560 = vrot.slane %v2382, 1
        %v2578 = vunpack.c.l.b16 %v2543
        %v2579 = vunpack.c.l.b16 %v2544
        %v2580 = vunpack.c.l.b16 %v2545
        %v2581 = vunpack.c.l.b16 %v2546
        %v2582 = vunpack.c.l.b16 %v2547
        %v2583 = vunpack.c.l.b16 %v2548
        %v2584 = vunpack.c.l.b16 %v2549
        %v2585 = vunpack.c.l.b16 %v2550
        %v2586 = vunpack.c.l.b16 %v2551
        %v2587 = vunpack.c.l.b16 %v2552
        %v2588 = vunpack.c.l.b16 %v2553
        %v2589 = vunpack.c.l.b16 %v2554
        %v2590 = vunpack.c.l.b16 %v2555
        %v2591 = vunpack.c.l.b16 %v2556
        %v2592 = vunpack.c.l.b16 %v2557
        %v2593 = vunpack.c.l.b16 %v2558
        %v2594 = vpack.c.b16 %v2579, %v2578
        %v2595 = vpack.c.b16 %v2581, %v2580
        %v2596 = vpack.c.b16 %v2583, %v2582
        %v2597 = vpack.c.b16 %v2585, %v2584
        %v2598 = vpack.c.b16 %v2587, %v2586
        %v2599 = vpack.c.b16 %v2589, %v2588
        %v2600 = vpack.c.b16 %v2591, %v2590
        %v2601 = vpack.c.b16 %v2593, %v2592
        %2610 = vmatpush.bf16.msra.mxu0 %v2601
        %2611 = vmatpush.bf16.msra.mxu0 %v2600
        %2612 = vmatpush.bf16.msra.mxu0 %v2599
        %2613 = vmatpush.bf16.msra.mxu0 %v2598
        %2614 = vmatpush.bf16.msra.mxu0 %v2597
        %2615 = vmatpush.bf16.msra.mxu0 %v2596
        %2616 = vmatpush.bf16.msra.mxu0 %v2595
        %2617 = vmatpush.bf16.msra.mxu0 %v2594
        %2618 = vmatmul.bf16.gmra.mxu0 %v2560
        %v2619 = vpop.f32.mrf.mxu0
        %v2620 = vadd.f32 0.0, %v2619
        %v2621 = vpop.f32.mrf.mxu0
        %2622 = vdwg.mxu0
        %v2623 = vadd.f32 %v2542, %v2620
        %v2624 = vld [vmem:[#allocation12 + $0xc0] sm:$0xf]
        %v2625 = vld [vmem:[#allocation12 + $0xc4] sm:$0xf]
        %v2626 = vld [vmem:[#allocation12 + $0xc8] sm:$0xf]
        %v2627 = vld [vmem:[#allocation12 + $0xcc] sm:$0xf]
        %v2628 = vld [vmem:[#allocation12 + $0xd0] sm:$0xf]
        %v2629 = vld [vmem:[#allocation12 + $0xd4] sm:$0xf]
        %v2630 = vld [vmem:[#allocation12 + $0xd8] sm:$0xf]
        %v2631 = vld [vmem:[#allocation12 + $0xdc] sm:$0xf]
        %v2632 = vld [vmem:[#allocation12 + $0xe0] sm:$0xf]
        %v2633 = vld [vmem:[#allocation12 + $0xe4] sm:$0xf]
        %v2634 = vld [vmem:[#allocation12 + $0xe8] sm:$0xf]
        %v2635 = vld [vmem:[#allocation12 + $0xec] sm:$0xf]
        %v2636 = vld [vmem:[#allocation12 + $0xf0] sm:$0xf]
        %v2637 = vld [vmem:[#allocation12 + $0xf4] sm:$0xf]
        %v2638 = vld [vmem:[#allocation12 + $0xf8] sm:$0xf]
        %v2639 = vld [vmem:[#allocation12 + $0xfc] sm:$0xf]
        %v2640 = vrot.slane %v2478, 1
        %v2658 = vunpack.c.l.b16 %v2624
        %v2659 = vunpack.c.l.b16 %v2625
        %v2660 = vunpack.c.l.b16 %v2626
        %v2661 = vunpack.c.l.b16 %v2627
        %v2662 = vunpack.c.l.b16 %v2628
        %v2663 = vunpack.c.l.b16 %v2629
        %v2664 = vunpack.c.l.b16 %v2630
        %v2665 = vunpack.c.l.b16 %v2631
        %v2666 = vunpack.c.l.b16 %v2632
        %v2667 = vunpack.c.l.b16 %v2633
        %v2668 = vunpack.c.l.b16 %v2634
        %v2669 = vunpack.c.l.b16 %v2635
        %v2670 = vunpack.c.l.b16 %v2636
        %v2671 = vunpack.c.l.b16 %v2637
        %v2672 = vunpack.c.l.b16 %v2638
        %v2673 = vunpack.c.l.b16 %v2639
        %v2674 = vpack.c.b16 %v2659, %v2658
        %v2675 = vpack.c.b16 %v2661, %v2660
        %v2676 = vpack.c.b16 %v2663, %v2662
        %v2677 = vpack.c.b16 %v2665, %v2664
        %v2678 = vpack.c.b16 %v2667, %v2666
        %v2679 = vpack.c.b16 %v2669, %v2668
        %v2680 = vpack.c.b16 %v2671, %v2670
        %v2681 = vpack.c.b16 %v2673, %v2672
        %2690 = vmatpush.bf16.msra.mxu0 %v2681
        %2691 = vmatpush.bf16.msra.mxu0 %v2680
        %2692 = vmatpush.bf16.msra.mxu0 %v2679
        %2693 = vmatpush.bf16.msra.mxu0 %v2678
        %2694 = vmatpush.bf16.msra.mxu0 %v2677
        %2695 = vmatpush.bf16.msra.mxu0 %v2676
        %2696 = vmatpush.bf16.msra.mxu0 %v2675
        %2697 = vmatpush.bf16.msra.mxu0 %v2674
        %2698 = vmatmul.bf16.gmra.mxu0 %v2640
        %v2699 = vpop.f32.mrf.mxu0
        %v2700 = vadd.f32 0.0, %v2699
        %v2701 = vpop.f32.mrf.mxu0
        %2702 = vdwg.mxu0
        %v2703 = vadd.f32 %v2623, %v2700
        %v2704 = vmax.f32 %v2703, 0.0
        %v2705 = vld [vmem:[%s11] sm:$0x1]
        %v2706 = vmul.f32 %v2704, %v2705
        %v2707 = vld [vmem:[%s12] sm:$0x1]
        %v2708 = vadd.f32 %v2706, %v2707
        %v2709 = vpack.c.bf16 %v2708, %v2708
        %v2710 = vld [vmem:[%s13] sm:$0xf]
        %v2711 = vld [vmem:[%s13 + $0x4] sm:$0xf]
        %v2712 = vld [vmem:[%s13 + $0x8] sm:$0xf]
        %v2713 = vld [vmem:[%s13 + $0xc] sm:$0xf]
        %v2714 = vld [vmem:[%s13 + $0x10] sm:$0xf]
        %v2715 = vld [vmem:[%s13 + $0x14] sm:$0xf]
        %v2716 = vld [vmem:[%s13 + $0x18] sm:$0xf]
        %v2717 = vld [vmem:[%s13 + $0x1c] sm:$0xf]
        %v2718 = vld [vmem:[%s13 + $0x20] sm:$0xf]
        %v2719 = vld [vmem:[%s13 + $0x24] sm:$0xf]
        %v2720 = vld [vmem:[%s13 + $0x28] sm:$0xf]
        %v2721 = vld [vmem:[%s13 + $0x2c] sm:$0xf]
        %v2722 = vld [vmem:[%s13 + $0x30] sm:$0xf]
        %v2723 = vld [vmem:[%s13 + $0x34] sm:$0xf]
        %v2724 = vld [vmem:[%s13 + $0x38] sm:$0xf]
        %v2725 = vld [vmem:[%s13 + $0x3c] sm:$0xf]
        %v2726 = vld [vmem:[%s14] sm:$0x1]
        %v2743 = vunpack.c.l.b16 %v2710
        %v2744 = vunpack.c.l.b16 %v2711
        %v2745 = vunpack.c.l.b16 %v2712
        %v2746 = vunpack.c.l.b16 %v2713
        %v2747 = vunpack.c.l.b16 %v2714
        %v2748 = vunpack.c.l.b16 %v2715
        %v2749 = vunpack.c.l.b16 %v2716
        %v2750 = vunpack.c.l.b16 %v2717
        %v2751 = vunpack.c.l.b16 %v2718
        %v2752 = vunpack.c.l.b16 %v2719
        %v2753 = vunpack.c.l.b16 %v2720
        %v2754 = vunpack.c.l.b16 %v2721
        %v2755 = vunpack.c.l.b16 %v2722
        %v2756 = vunpack.c.l.b16 %v2723
        %v2757 = vunpack.c.l.b16 %v2724
        %v2758 = vunpack.c.l.b16 %v2725
        %v2759 = vpack.c.b16 %v2744, %v2743
        %v2760 = vpack.c.b16 %v2746, %v2745
        %v2761 = vpack.c.b16 %v2748, %v2747
        %v2762 = vpack.c.b16 %v2750, %v2749
        %v2763 = vpack.c.b16 %v2752, %v2751
        %v2764 = vpack.c.b16 %v2754, %v2753
        %v2765 = vpack.c.b16 %v2756, %v2755
        %v2766 = vpack.c.b16 %v2758, %v2757
        %2775 = vmatpush.bf16.msra.mxu0 %v2766
        %2776 = vmatpush.bf16.msra.mxu0 %v2765
        %2777 = vmatpush.bf16.msra.mxu0 %v2764
        %2778 = vmatpush.bf16.msra.mxu0 %v2763
        %2779 = vmatpush.bf16.msra.mxu0 %v2762
        %2780 = vmatpush.bf16.msra.mxu0 %v2761
        %2781 = vmatpush.bf16.msra.mxu0 %v2760
        %2782 = vmatpush.bf16.msra.mxu0 %v2759
        %2783 = vmatmul.bf16.gmra.mxu0 %v2709
        %v2784 = vpop.f32.mrf.mxu0
        %v2785 = vadd.f32 %v2726, %v2784
        %v2786 = vpop.f32.mrf.mxu0
        %2787 = vdwg.mxu0
        %v2788 = vmul.f32 %v2785, %v2785
        %v2789 = vsel %vm891, %v2788, 0.0
        %2790 = vadd.xlane.f32.xlu0 %v2789
        %v2791 = vpop.xlane.xlu0 %2790
        %v2792 = vrsqrt.pop %v2791
        %v2793 = vmul.f32 %v2792, %v2791
        %v2794 = vmul.f32 %v2793, %v2792
        %v2795 = vmul.f32 0.5, %v2794
        %v2796 = vsub.f32 1.5, %v2795
        %v2797 = vmul.f32 %v2792, %v2796
        %v2798 = vmul.f32 %v2791, %v2797
        %vm2799 = vcmp.eq.f32.partialorder %v2791, inf
        %v2800 = vsel %vm2799, %v2791, %v2798
        %vm2801 = vcmp.eq.f32.partialorder %v2791, 0.0
        %v2802 = vand.u32 %v2791, 2147483648
        %v2803 = vsel %vm2801, %v2802, %v2800
        %v2804 = vmax.f32 %v2803, 1e-12
        %v2805 = vrcp.pop %v2804
        %v2806 = vmul.f32 %v2804, %v2805
        %v2807 = vsub.f32 1.0, %v2806
        %v2808 = vmul.f32 %v2805, %v2807
        %v2809 = vadd.f32 %v2805, %v2808
        %vm2810 = vweird.f32 %v2804
        %vm2811 = vweird.f32 %v2805
        %vm2812 = vmor %vm2810, %vm2811
        %v2813 = vsel %vm2812, %v2805, %v2809
        %v2814 = vand.u32 2147483647, %v2804
        %vm2815 = vcmp.eq.f32.partialorder %v2814, 8.507059e+37
        %v2816 = vand.u32 %v2804, 2147483648
        %v2817 = vor.u32 1.1754944e-38, %v2816
        %v2818 = vsel %vm2815, %v2817, %v2813
        %v2819 = vmul.f32 %v2785, %v2818
        %2820 = vst.msk [vmem:[%s553] sm:$0x1] %vm891, %v2819
        %s2821 = sand.u32 %s360, 1
        %s2822 = scalar_lea.sflag [#allocation8], %s2821
        %s2823 = sand.u32 %s360, 1
        %s2824 = scalar_lea.vmem [#allocation14], %s2823
        // Predicated region
        $region97: #{convnet_forward.1} parent=79 // pred_check
          %p2825 = pneg %p370
        $region98: #{convnet_forward.1} parent=79 // pred_check_branch
          %2827 = sbr.rel (%p2825) target = $region100
        $region99: #{convnet_forward.1} parent=79 // pred_region
          %2829 = vsyncadd %s2822, 0
          %s2830 = scalar_lea.hbm %s15, %s32
          %s2832 = sshll.u32 %s2824, 4
          %s2833 = int_to_ptr.vmem [resolvable:$true] %s2832
          %s2834 = sshll.u32 %s2830, 4
          %s2835 = int_to_ptr.hbm [resolvable:$true] %s2834
          %2837 = dma.vmem_to_hbm [thread:$0]  %s2833, 16, %s2835, %s2822
        $region100: #{convnet_forward.1} parent=79 // pred_fallthru
          _
      $region80: #{convnet_forward.1} parent=5 // pred_fallthru
        _
      %p2838 = scmp.le.s32.totalorder 2, %s27
      // Predicated region
      $region101: #{convnet_forward.1} parent=5 // pred_check
        %p2839 = pneg %p2838
      $region102: #{convnet_forward.1} parent=5 // pred_check_branch
        %2841 = sbr.rel (%p2839) target = $region104
      $region103: #{convnet_forward.1} parent=5 // pred_region
        %s2842 = ssub.s32 %s27, 2
        // Predicated region
        $region105: #{convnet_forward.1} parent=103 // pred_check
          %p2843 = pneg %p376
        $region106: #{convnet_forward.1} parent=103 // pred_check_branch
          %2845 = sbr.rel (%p2843) target = $region108
        $region107: #{convnet_forward.1} parent=103 // pred_region
          %s2846 = sand.u32 %s361, 1
          %s2847 = scalar_lea.sflag [#allocation8], %s2846
          %s2848 = sand.u32 %s361, 1
          %s2849 = scalar_lea.vmem [#allocation14], %s2848
          %2851 = dma.done %s2847, 16
        $region108: #{convnet_forward.1} parent=103 // pred_fallthru
          _
      $region104: #{convnet_forward.1} parent=5 // pred_fallthru
        _
    $region6: #{convnet_forward.1} parent=1 // loop_footer
      %s31 = sadd.s32 1, %s27
    $region7: #{convnet_forward.1} parent=1 // loop_footer_branch
      %26 = sbr.rel target = $region3
    $region8: #{convnet_forward.1} parent=1 // loop_exit
      _
    %2852 = vsyncpa [#allocation7], 1
    %s2853 = scalar_lea.sflag [#allocation7], 1
    %2854 = vsyncpa %s2853, 1
    %2855 = vsyncpa [#allocation10], 1
    %2856 = vsyncpa [#allocation13], 1
    %2857 = vsyncpa [#allocation8], 1
    %s2858 = scalar_lea.sflag [#allocation8], 1
    %2859 = vsyncpa %s2858, 1

</llo_original>
